<compile_context>
chip_gen: v7x
topology: tpu7x:2x2x1
jax: 0.10.0
libtpu: 0.0.40
codegen_flags: <defaults>
</compile_context>

<pallas_src>
import functools

import jax
import jax.numpy as jnp
from jax.experimental import pallas as pl
from jax.experimental.pallas import tpu as pltpu

# ---- module constants (from the reference script) -------------------------
OPTS = "ud"
RESOLUTION = 512
LOWEST_DENSE_RES = RESOLUTION // (32 if "d" in OPTS else 16)   # = 16
USE_FP16 = False
OUT_DTYPE = jnp.bfloat16 if USE_FP16 else jnp.float32          # bf16 replaces the fp16 path on TPU
MXU_DTYPE = jnp.bfloat16                                       # MXU-native matmul input dtype

VMEM_LIMIT_BYTES = 32 * 1024 * 1024                            # safe on v5e/v6e/v7x


def _pick_tile(total, cap, min_steps=1):
    """Largest 256- (then 128-) aligned tile dividing `total`, <= cap, and (when possible)
    leaving at least `min_steps` grid steps (so v7x megacore always has >=2 steps)."""
    limit = min(cap, total)
    if min_steps > 1 and total // min_steps >= 128:
        limit = min(limit, total // min_steps)
    for align in (256, 128):
        t = (limit // align) * align
        while t >= align:
            if total % t == 0:
                return t
            t -= align
    return total  # tiny/unaligned dims: single full block (checked against VMEM below)


# ---- Pallas kernel 1: fused dense1 -> dense2, tiled over dense2 output dim ---
def _dense_kernel(x_ref, w1_ref, b1_ref, w2_ref, b2_ref, o_ref):
    # x_ref : (B, in_ch + 2)           bf16, full (constant block -> DMA'd once)
    # w1_ref: (in_ch + 2, ae_ch)       bf16, full (constant block)
    # b1_ref: (1, ae_ch)               f32,  full (constant block)
    # w2_ref: (ae_ch, TN)              bf16, N-tile  (= PyTorch dense2.weight.T, NHWC col order)
    # b2_ref: (1, TN)                  f32,  N-tile
    # o_ref : (B, TN)                  bf16, N-tile  (bf16 output -> half the HBM writeback)
    # dense1 is recomputed per tile (negligible FLOPs) so the grid axis stays dependency-free.
    h = jnp.dot(x_ref[...], w1_ref[...], preferred_element_type=jnp.float32)
    h = h + b1_ref[...]
    y = jnp.dot(h.astype(w2_ref.dtype), w2_ref[...],
                preferred_element_type=jnp.float32)
    y = y + b2_ref[...]
    o_ref[...] = y.astype(o_ref.dtype)


# ---- Pallas kernel 2: in-kernel im2col 3x3 conv + bias + LeakyReLU(0.1) ------
def _upscale_conv_kernel(xp_ref, w_ref, b_ref, o_ref):
    # xp_ref: (1, H+2, W+2, Cin) bf16   one zero-padded NHWC image (per-batch grid block)
    # w_ref : (9*Cin, TNc)       bf16   conv weight tile, rows ordered (kh, kw, cin)
    # b_ref : (1, TNc)           f32
    # o_ref : (1, H*W, TNc)             lane-dense output tile (TNc is a multiple of 128)
    H = xp_ref.shape[1] - 2
    W = xp_ref.shape[2] - 2
    cin = xp_ref.shape[3]
    tnc = o_ref.shape[2]

    xp = xp_ref[0]                                  # (H+2, W+2, Cin), VMEM-resident
    acc = jnp.zeros((H * W, tnc), jnp.float32)
    for kh in range(3):
        for kw in range(3):
            idx = kh * 3 + kw
            # shifted view -> (H*W, Cin) patch; never materialized in HBM
            patch = xp[kh:kh + H, kw:kw + W, :].reshape(H * W, cin)
            wk = w_ref[idx * cin:(idx + 1) * cin, :]
            acc = acc + jnp.dot(patch, wk, preferred_element_type=jnp.float32)
    y = acc + b_ref[...]
    y = jnp.where(y >= 0, y, 0.1 * y)               # LeakyReLU(0.1)
    o_ref[0] = y.astype(o_ref.dtype)


# ---- wrapper ----------------------------------------------------------------
def inter_forward(inp, label, params, *, in_ch, ae_ch, ae_out_ch):
    """Forward pass of Inter. inp: (B, in_ch) float, label: (B,) int32."""
    B = inp.shape[0]
    H = W = LOWEST_DENSE_RES
    cin = ae_out_ch
    d2_out = H * W * cin
    cout = 4 * cin

    # --- glue: embedding lookup (2x2 table) + concat (tiny) -------------------
    emb = params["label_emb"][label]                                  # (B, 2)
    x = jnp.concatenate([inp.astype(jnp.float32), emb], axis=-1)      # (B, in_ch + 2)
    x = x.astype(MXU_DTYPE)

    # --- Pallas: dense1 -> dense2, streaming w2 in bf16 N-tiles, bf16 output ---
    tn = _pick_tile(d2_out, cap=4096, min_steps=2)
    assert d2_out % tn == 0
    n_tn = d2_out // tn
    # double-buffered w2 tile must stay well inside the scoped-VMEM budget
    assert 2 * ae_ch * tn * 2 < VMEM_LIMIT_BYTES // 2, (ae_ch, tn)
    k1_cost = pl.CostEstimate(
        flops=2 * B * (in_ch + 2) * ae_ch * n_tn + 2 * B * ae_ch * d2_out,
        transcendentals=0,
        bytes_accessed=(B * (in_ch + 2) * 2 + (in_ch + 2) * ae_ch * 2 + ae_ch * 4
                        + ae_ch * d2_out * 2 + d2_out * 4 + B * d2_out * 2),
    )
    dense_out = pl.pallas_call(
        _dense_kernel,
        out_shape=jax.ShapeDtypeStruct((B, d2_out), MXU_DTYPE),
        grid=(n_tn,),
        in_specs=[
            pl.BlockSpec((B, in_ch + 2), lambda j: (0, 0)),
            pl.BlockSpec((in_ch + 2, ae_ch), lambda j: (0, 0)),
            pl.BlockSpec((1, ae_ch), lambda j: (0, 0)),
            pl.BlockSpec((ae_ch, tn), lambda j: (0, j)),
            pl.BlockSpec((1, tn), lambda j: (0, j)),
        ],
        out_specs=pl.BlockSpec((B, tn), lambda j: (0, j)),
        compiler_params=pltpu.CompilerParams(
            dimension_semantics=("parallel",),
            vmem_limit_bytes=VMEM_LIMIT_BYTES,
        ),
        cost_estimate=k1_cost,
    )(x, params["w1"], params["b1"], params["w2"], params["b2"])

    # --- glue: dense output is already NHWC (w2 columns stored NHWC-ordered) ---
    # Only a tiny bf16 (B, 18, 18, Cin) activation goes back to HBM; no 9x im2col slab.
    x_nhwc = dense_out.reshape(B, H, W, cin)
    x_pad = jnp.pad(x_nhwc, ((0, 0), (1, 1), (1, 1), (0, 0)))        # (B, H+2, W+2, Cin)

    # --- Pallas: Upscale conv (in-kernel im2col) + bias + LeakyReLU ------------
    K = 9 * cin
    wk = params["wc"].reshape(K, cout)   # rows ordered (kh, kw, cin)
    tnc = _pick_tile(cout, cap=512, min_steps=1)
    assert cout % tnc == 0
    n_tnc = cout // tnc
    M = B * H * W
    k2_cost = pl.CostEstimate(
        flops=2 * M * K * cout,
        transcendentals=0,
        bytes_accessed=(B * (H + 2) * (W + 2) * cin * 2 * n_tnc + K * cout * 2 + cout * 4
                        + M * cout * jnp.dtype(OUT_DTYPE).itemsize),
    )
    conv_out = pl.pallas_call(
        _upscale_conv_kernel,
        out_shape=jax.ShapeDtypeStruct((B, H * W, cout), OUT_DTYPE),
        grid=(B, n_tnc),
        in_specs=[
            pl.BlockSpec((1, H + 2, W + 2, cin), lambda b, j: (b, 0, 0, 0)),
            pl.BlockSpec((K, tnc), lambda b, j: (0, j)),
            pl.BlockSpec((1, tnc), lambda b, j: (0, j)),
        ],
        out_specs=pl.BlockSpec((1, H * W, tnc), lambda b, j: (b, 0, j)),
        compiler_params=pltpu.CompilerParams(
            dimension_semantics=("parallel", "parallel"),
            vmem_limit_bytes=VMEM_LIMIT_BYTES,
        ),
        cost_estimate=k2_cost,
    )(x_pad.astype(MXU_DTYPE), wk, params["bc"])

    # --- glue: PixelShuffle(2) and back to NCHW (tiny reshape/transpose) -------
    # conv channel index = c*4 + i*2 + j, matching torch.nn.PixelShuffle(2).
    y = conv_out.reshape(B, H, W, cin, 2, 2)           # (b, h, w, c, i, j)
    y = jnp.transpose(y, (0, 3, 1, 4, 2, 5))           # (b, c, h, i, w, j)
    y = y.reshape(B, cin, 2 * H, 2 * W)                # (B, C, 32, 32)
    return y


# ---- deterministic parameter construction -----------------------------------
def make_params(key, *, in_ch, ae_ch, ae_out_ch):
    ldr = LOWEST_DENSE_RES
    d2_out = ldr * ldr * ae_out_ch
    cout = 4 * ae_out_ch
    k = jax.random.split(key, 7)
    s1 = 1.0 / jnp.sqrt(in_ch + 2.0)
    s2 = 1.0 / jnp.sqrt(float(ae_ch))
    sc = 1.0 / jnp.sqrt(ae_out_ch * 9.0)
    # Weights are bf16 (MXU-native / halves the HBM weight stream); biases stay f32
    # (added after the f32 accumulation inside the kernels).
    # NOTE: w2/b2 columns are stored in NHWC order (h, w, c).  To import real PyTorch
    # weights: w2 = dense2.weight.T.reshape(ae_ch, C, 16, 16).transpose(0, 2, 3, 1).reshape(ae_ch, -1)
    # and wc = conv.weight.permute(2, 3, 1, 0)  [-> (3, 3, Cin, Cout)].
    return {
        "label_emb": jax.random.normal(k[0], (2, 2), jnp.float32),
        "w1": (jax.random.uniform(k[1], (in_ch + 2, ae_ch), jnp.float32, -1, 1) * s1).astype(MXU_DTYPE),
        "b1": jax.random.uniform(k[2], (1, ae_ch), jnp.float32, -1, 1) * s1,
        "w2": (jax.random.uniform(k[3], (ae_ch, d2_out), jnp.float32, -1, 1) * s2).astype(MXU_DTYPE),
        "b2": jax.random.uniform(k[4], (1, d2_out), jnp.float32, -1, 1) * s2,
        "wc": (jax.random.uniform(k[5], (3, 3, ae_out_ch, cout), jnp.float32, -1, 1) * sc).astype(MXU_DTYPE),
        "bc": jax.random.uniform(k[6], (1, cout), jnp.float32, -1, 1) * sc,
    }


if __name__ == "__main__":
    # Small but non-trivial sizes: d2_out = 16*16*32 = 8192 -> dense grid of 2 parallel N-tiles,
    # conv cout = 4*32 = 128 -> lane-dense (unmasked) conv output stores.
    B, IN_CH, AE_CH, AE_OUT_CH = 2, 32, 64, 32

    key = jax.random.PRNGKey(0)
    k_inp, k_lab, k_par = jax.random.split(key, 3)

    inp = jax.random.normal(k_inp, (B, IN_CH), jnp.float32)
    label = jax.random.randint(k_lab, (B,), 0, 2, jnp.int32)
    params = make_params(k_par, in_ch=IN_CH, ae_ch=AE_CH, ae_out_ch=AE_OUT_CH)

    fwd = jax.jit(functools.partial(
        inter_forward, in_ch=IN_CH, ae_ch=AE_CH, ae_out_ch=AE_OUT_CH))
    out = fwd(inp, label, params)
    out = jax.block_until_ready(out)

    expected = (B, AE_OUT_CH, LOWEST_DENSE_RES * 2, LOWEST_DENSE_RES * 2)
    assert out.shape == expected, (out.shape, expected)
    assert out.dtype == OUT_DTYPE, out.dtype
    print("KERNEL_OK")
</pallas_src>

<mosaic_0001>
module attributes {stable_mosaic.version = 11 : i64} {
  func.func @_dense_kernel(%arg0: i32, %arg1: memref<2x34xbf16, #tpu.memory_space<vmem>>, %arg2: memref<34x64xbf16, #tpu.memory_space<vmem>>, %arg3: memref<1x64xf32, #tpu.memory_space<vmem>>, %arg4: memref<64x4096xbf16, #tpu.memory_space<vmem>>, %arg5: memref<1x4096xf32, #tpu.memory_space<vmem>>, %arg6: memref<2x4096xbf16, #tpu.memory_space<vmem>>) attributes {dimension_semantics = [#tpu.dimension_semantics<parallel>], iteration_bounds = array<i64: 2>, scalar_prefetch = 0 : i64, scratch_operands = 0 : i64, tpu.core_type = #tpu.core_type<tc>, window_params = [{pipeline_mode = #tpu.pipeline_mode<synchronous>, transform_indices = @transform_0, window_bounds = array<i64: 2, 34>}, {pipeline_mode = #tpu.pipeline_mode<synchronous>, transform_indices = @transform_1, window_bounds = array<i64: 34, 64>}, {pipeline_mode = #tpu.pipeline_mode<synchronous>, transform_indices = @transform_2, window_bounds = array<i64: 1, 64>}, {transform_indices = @transform_3, window_bounds = array<i64: 64, 4096>}, {transform_indices = @transform_4, window_bounds = array<i64: 1, 4096>}, {transform_indices = @transform_5, window_bounds = array<i64: 2, 4096>}]} {
    %c0 = arith.constant 0 : index
    %c0_0 = arith.constant 0 : index
    %0 = vector.load %arg1[%c0, %c0_0] : memref<2x34xbf16, #tpu.memory_space<vmem>>, vector<2x34xbf16>
    %c0_1 = arith.constant 0 : index
    %c0_2 = arith.constant 0 : index
    %1 = vector.load %arg2[%c0_1, %c0_2] : memref<34x64xbf16, #tpu.memory_space<vmem>>, vector<34x64xbf16>
    %cst = arith.constant dense<0.000000e+00> : vector<2x64xf32>
    %2 = tpu.matmul %0, %1, %cst {dimension_numbers = #tpu.dot_dimension_numbers<[1], [0], [0], [1], [0, 0, 1, 1], [], []>} : vector<2x34xbf16>, vector<34x64xbf16>, vector<2x64xf32> -> vector<2x64xf32>
    %c0_3 = arith.constant 0 : index
    %c0_4 = arith.constant 0 : index
    %3 = vector.load %arg3[%c0_3, %c0_4] : memref<1x64xf32, #tpu.memory_space<vmem>>, vector<1x64xf32>
    %4 = vector.broadcast %3 : vector<1x64xf32> to vector<2x64xf32>
    %5 = arith.addf %2, %4 : vector<2x64xf32>
    %6 = arith.truncf %5 : vector<2x64xf32> to vector<2x64xbf16>
    %c0_5 = arith.constant 0 : index
    %c0_6 = arith.constant 0 : index
    %7 = vector.load %arg4[%c0_5, %c0_6] : memref<64x4096xbf16, #tpu.memory_space<vmem>>, vector<64x4096xbf16>
    %cst_7 = arith.constant dense<0.000000e+00> : vector<2x4096xf32>
    %8 = tpu.matmul %6, %7, %cst_7 {dimension_numbers = #tpu.dot_dimension_numbers<[1], [0], [0], [1], [0, 0, 1, 1], [], []>} : vector<2x64xbf16>, vector<64x4096xbf16>, vector<2x4096xf32> -> vector<2x4096xf32>
    %c0_8 = arith.constant 0 : index
    %c0_9 = arith.constant 0 : index
    %9 = vector.load %arg5[%c0_8, %c0_9] : memref<1x4096xf32, #tpu.memory_space<vmem>>, vector<1x4096xf32>
    %10 = vector.broadcast %9 : vector<1x4096xf32> to vector<2x4096xf32>
    %11 = arith.addf %8, %10 : vector<2x4096xf32>
    %12 = arith.truncf %11 : vector<2x4096xf32> to vector<2x4096xbf16>
    %c0_10 = arith.constant 0 : index
    %c0_11 = arith.constant 0 : index
    %13 = vector.load %arg6[%c0_10, %c0_11] : memref<2x4096xbf16, #tpu.memory_space<vmem>>, vector<2x4096xbf16>
    tpu.vector_store %arg6[%c0_10, %c0_11], %12 {strides = array<i32>} : memref<2x4096xbf16, #tpu.memory_space<vmem>>, vector<2x4096xbf16>,
    return
  }
  func.func @transform_0(%arg0: i32) -> (i32, i32) {
    %c0_i32 = arith.constant 0 : i32
    %c0_i32_0 = arith.constant 0 : i32
    %c0_i32_1 = arith.constant 0 : i32
    return %c0_i32, %c0_i32_0 : i32, i32
  }
  func.func @transform_1(%arg0: i32) -> (i32, i32) {
    %c0_i32 = arith.constant 0 : i32
    %c0_i32_0 = arith.constant 0 : i32
    %c0_i32_1 = arith.constant 0 : i32
    return %c0_i32, %c0_i32_0 : i32, i32
  }
  func.func @transform_2(%arg0: i32) -> (i32, i32) {
    %c0_i32 = arith.constant 0 : i32
    %c0_i32_0 = arith.constant 0 : i32
    %c0_i32_1 = arith.constant 0 : i32
    return %c0_i32, %c0_i32_0 : i32, i32
  }
  func.func @transform_3(%arg0: i32) -> (i32, i32) {
    %c0_i32 = arith.constant 0 : i32
    %c0_i32_0 = arith.constant 0 : i32
    return %c0_i32, %arg0 : i32, i32
  }
  func.func @transform_4(%arg0: i32) -> (i32, i32) {
    %c0_i32 = arith.constant 0 : i32
    %c0_i32_0 = arith.constant 0 : i32
    return %c0_i32, %arg0 : i32, i32
  }
  func.func @transform_5(%arg0: i32) -> (i32, i32) {
    %c0_i32 = arith.constant 0 : i32
    %c0_i32_0 = arith.constant 0 : i32
    return %c0_i32, %arg0 : i32, i32
  }
}

module attributes {stable_mosaic.version = 11 : i64} {
  func.func @_upscale_conv_kernel(%arg0: i32, %arg1: i32, %arg2: memref<1x18x18x32xbf16, #tpu.memory_space<vmem>>, %arg3: memref<288x128xbf16, #tpu.memory_space<vmem>>, %arg4: memref<1x128xf32, #tpu.memory_space<vmem>>, %arg5: memref<1x256x128xf32, #tpu.memory_space<vmem>>) attributes {dimension_semantics = [#tpu.dimension_semantics<parallel>, #tpu.dimension_semantics<parallel>], iteration_bounds = array<i64: 2, 1>, scalar_prefetch = 0 : i64, scratch_operands = 0 : i64, tpu.core_type = #tpu.core_type<tc>, window_params = [{transform_indices = @transform_0, window_bounds = array<i64: 1, 18, 18, 32>}, {transform_indices = @transform_1, window_bounds = array<i64: 288, 128>}, {transform_indices = @transform_2, window_bounds = array<i64: 1, 128>}, {transform_indices = @transform_3, window_bounds = array<i64: 1, 256, 128>}]} {
    %c0 = arith.constant 0 : index
    %c0_0 = arith.constant 0 : index
    %c0_1 = arith.constant 0 : index
    %c0_2 = arith.constant 0 : index
    %0 = vector.load %arg2[%c0, %c0_0, %c0_1, %c0_2] : memref<1x18x18x32xbf16, #tpu.memory_space<vmem>>, vector<1x18x18x32xbf16>
    %1 = vector.shape_cast %0 : vector<1x18x18x32xbf16> to vector<18x18x32xbf16>
    %cst = arith.constant 0.000000e+00 : f32
    %2 = vector.broadcast %cst : f32 to vector<256x128xf32>
    %3 = vector.extract_strided_slice %1 {offsets = [0, 0, 0], sizes = [16, 16, 32], strides = [1, 1, 1]} : vector<18x18x32xbf16> to vector<16x16x32xbf16>
    %4 = vector.shape_cast %3 : vector<16x16x32xbf16> to vector<256x32xbf16>
    %c0_3 = arith.constant 0 : index
    %c0_4 = arith.constant 0 : index
    %5 = vector.load %arg3[%c0_3, %c0_4] : memref<288x128xbf16, #tpu.memory_space<vmem>>, vector<32x128xbf16>
    %cst_5 = arith.constant dense<0.000000e+00> : vector<256x128xf32>
    %6 = tpu.matmul %4, %5, %cst_5 {dimension_numbers = #tpu.dot_dimension_numbers<[1], [0], [0], [1], [0, 0, 1, 1], [], []>} : vector<256x32xbf16>, vector<32x128xbf16>, vector<256x128xf32> -> vector<256x128xf32>
    %7 = arith.addf %2, %6 : vector<256x128xf32>
    %8 = vector.extract_strided_slice %1 {offsets = [0, 1, 0], sizes = [16, 16, 32], strides = [1, 1, 1]} : vector<18x18x32xbf16> to vector<16x16x32xbf16>
    %9 = vector.shape_cast %8 : vector<16x16x32xbf16> to vector<256x32xbf16>
    %c32 = arith.constant 32 : index
    %c0_6 = arith.constant 0 : index
    %10 = vector.load %arg3[%c32, %c0_6] : memref<288x128xbf16, #tpu.memory_space<vmem>>, vector<32x128xbf16>
    %cst_7 = arith.constant dense<0.000000e+00> : vector<256x128xf32>
    %11 = tpu.matmul %9, %10, %cst_7 {dimension_numbers = #tpu.dot_dimension_numbers<[1], [0], [0], [1], [0, 0, 1, 1], [], []>} : vector<256x32xbf16>, vector<32x128xbf16>, vector<256x128xf32> -> vector<256x128xf32>
    %12 = arith.addf %7, %11 : vector<256x128xf32>
    %13 = vector.extract_strided_slice %1 {offsets = [0, 2, 0], sizes = [16, 16, 32], strides = [1, 1, 1]} : vector<18x18x32xbf16> to vector<16x16x32xbf16>
    %14 = vector.shape_cast %13 : vector<16x16x32xbf16> to vector<256x32xbf16>
    %c64 = arith.constant 64 : index
    %c0_8 = arith.constant 0 : index
    %15 = vector.load %arg3[%c64, %c0_8] : memref<288x128xbf16, #tpu.memory_space<vmem>>, vector<32x128xbf16>
    %cst_9 = arith.constant dense<0.000000e+00> : vector<256x128xf32>
    %16 = tpu.matmul %14, %15, %cst_9 {dimension_numbers = #tpu.dot_dimension_numbers<[1], [0], [0], [1], [0, 0, 1, 1], [], []>} : vector<256x32xbf16>, vector<32x128xbf16>, vector<256x128xf32> -> vector<256x128xf32>
    %17 = arith.addf %12, %16 : vector<256x128xf32>
    %18 = vector.extract_strided_slice %1 {offsets = [1, 0, 0], sizes = [16, 16, 32], strides = [1, 1, 1]} : vector<18x18x32xbf16> to vector<16x16x32xbf16>
    %19 = vector.shape_cast %18 : vector<16x16x32xbf16> to vector<256x32xbf16>
    %c96 = arith.constant 96 : index
    %c0_10 = arith.constant 0 : index
    %20 = vector.load %arg3[%c96, %c0_10] : memref<288x128xbf16, #tpu.memory_space<vmem>>, vector<32x128xbf16>
    %cst_11 = arith.constant dense<0.000000e+00> : vector<256x128xf32>
    %21 = tpu.matmul %19, %20, %cst_11 {dimension_numbers = #tpu.dot_dimension_numbers<[1], [0], [0], [1], [0, 0, 1, 1], [], []>} : vector<256x32xbf16>, vector<32x128xbf16>, vector<256x128xf32> -> vector<256x128xf32>
    %22 = arith.addf %17, %21 : vector<256x128xf32>
    %23 = vector.extract_strided_slice %1 {offsets = [1, 1, 0], sizes = [16, 16, 32], strides = [1, 1, 1]} : vector<18x18x32xbf16> to vector<16x16x32xbf16>
    %24 = vector.shape_cast %23 : vector<16x16x32xbf16> to vector<256x32xbf16>
    %c128 = arith.constant 128 : index
    %c0_12 = arith.constant 0 : index
    %25 = vector.load %arg3[%c128, %c0_12] : memref<288x128xbf16, #tpu.memory_space<vmem>>, vector<32x128xbf16>
    %cst_13 = arith.constant dense<0.000000e+00> : vector<256x128xf32>
    %26 = tpu.matmul %24, %25, %cst_13 {dimension_numbers = #tpu.dot_dimension_numbers<[1], [0], [0], [1], [0, 0, 1, 1], [], []>} : vector<256x32xbf16>, vector<32x128xbf16>, vector<256x128xf32> -> vector<256x128xf32>
    %27 = arith.addf %22, %26 : vector<256x128xf32>
    %28 = vector.extract_strided_slice %1 {offsets = [1, 2, 0], sizes = [16, 16, 32], strides = [1, 1, 1]} : vector<18x18x32xbf16> to vector<16x16x32xbf16>
    %29 = vector.shape_cast %28 : vector<16x16x32xbf16> to vector<256x32xbf16>
    %c160 = arith.constant 160 : index
    %c0_14 = arith.constant 0 : index
    %30 = vector.load %arg3[%c160, %c0_14] : memref<288x128xbf16, #tpu.memory_space<vmem>>, vector<32x128xbf16>
    %cst_15 = arith.constant dense<0.000000e+00> : vector<256x128xf32>
    %31 = tpu.matmul %29, %30, %cst_15 {dimension_numbers = #tpu.dot_dimension_numbers<[1], [0], [0], [1], [0, 0, 1, 1], [], []>} : vector<256x32xbf16>, vector<32x128xbf16>, vector<256x128xf32> -> vector<256x128xf32>
    %32 = arith.addf %27, %31 : vector<256x128xf32>
    %33 = vector.extract_strided_slice %1 {offsets = [2, 0, 0], sizes = [16, 16, 32], strides = [1, 1, 1]} : vector<18x18x32xbf16> to vector<16x16x32xbf16>
    %34 = vector.shape_cast %33 : vector<16x16x32xbf16> to vector<256x32xbf16>
    %c192 = arith.constant 192 : index
    %c0_16 = arith.constant 0 : index
    %35 = vector.load %arg3[%c192, %c0_16] : memref<288x128xbf16, #tpu.memory_space<vmem>>, vector<32x128xbf16>
    %cst_17 = arith.constant dense<0.000000e+00> : vector<256x128xf32>
    %36 = tpu.matmul %34, %35, %cst_17 {dimension_numbers = #tpu.dot_dimension_numbers<[1], [0], [0], [1], [0, 0, 1, 1], [], []>} : vector<256x32xbf16>, vector<32x128xbf16>, vector<256x128xf32> -> vector<256x128xf32>
    %37 = arith.addf %32, %36 : vector<256x128xf32>
    %38 = vector.extract_strided_slice %1 {offsets = [2, 1, 0], sizes = [16, 16, 32], strides = [1, 1, 1]} : vector<18x18x32xbf16> to vector<16x16x32xbf16>
    %39 = vector.shape_cast %38 : vector<16x16x32xbf16> to vector<256x32xbf16>
    %c224 = arith.constant 224 : index
    %c0_18 = arith.constant 0 : index
    %40 = vector.load %arg3[%c224, %c0_18] : memref<288x128xbf16, #tpu.memory_space<vmem>>, vector<32x128xbf16>
    %cst_19 = arith.constant dense<0.000000e+00> : vector<256x128xf32>
    %41 = tpu.matmul %39, %40, %cst_19 {dimension_numbers = #tpu.dot_dimension_numbers<[1], [0], [0], [1], [0, 0, 1, 1], [], []>} : vector<256x32xbf16>, vector<32x128xbf16>, vector<256x128xf32> -> vector<256x128xf32>
    %42 = arith.addf %37, %41 : vector<256x128xf32>
    %43 = vector.extract_strided_slice %1 {offsets = [2, 2, 0], sizes = [16, 16, 32], strides = [1, 1, 1]} : vector<18x18x32xbf16> to vector<16x16x32xbf16>
    %44 = vector.shape_cast %43 : vector<16x16x32xbf16> to vector<256x32xbf16>
    %c256 = arith.constant 256 : index
    %c0_20 = arith.constant 0 : index
    %45 = vector.load %arg3[%c256, %c0_20] : memref<288x128xbf16, #tpu.memory_space<vmem>>, vector<32x128xbf16>
    %cst_21 = arith.constant dense<0.000000e+00> : vector<256x128xf32>
    %46 = tpu.matmul %44, %45, %cst_21 {dimension_numbers = #tpu.dot_dimension_numbers<[1], [0], [0], [1], [0, 0, 1, 1], [], []>} : vector<256x32xbf16>, vector<32x128xbf16>, vector<256x128xf32> -> vector<256x128xf32>
    %47 = arith.addf %42, %46 : vector<256x128xf32>
    %c0_22 = arith.constant 0 : index
    %c0_23 = arith.constant 0 : index
    %48 = vector.load %arg4[%c0_22, %c0_23] : memref<1x128xf32, #tpu.memory_space<vmem>>, vector<1x128xf32>
    %49 = vector.broadcast %48 : vector<1x128xf32> to vector<256x128xf32>
    %50 = arith.addf %47, %49 : vector<256x128xf32>
    %cst_24 = arith.constant 0.000000e+00 : f32
    %51 = vector.broadcast %cst_24 : f32 to vector<256x128xf32>
    %52 = arith.cmpf oge, %50, %51 : vector<256x128xf32>
    %cst_25 = arith.constant 1.000000e-01 : f32
    %53 = vector.broadcast %cst_25 : f32 to vector<256x128xf32>
    %54 = arith.mulf %53, %50 : vector<256x128xf32>
    %55 = arith.select %52, %50, %54 : vector<256x128xi1>, vector<256x128xf32>
    %c0_26 = arith.constant 0 : index
    %c0_27 = arith.constant 0 : index
    %c0_28 = arith.constant 0 : index
    %56 = vector.load %arg5[%c0_26, %c0_27, %c0_28] : memref<1x256x128xf32, #tpu.memory_space<vmem>>, vector<1x256x128xf32>
    %57 = vector.shape_cast %56 : vector<1x256x128xf32> to vector<256x128xf32>
    %58 = vector.shape_cast %55 : vector<256x128xf32> to vector<1x256x128xf32>
    tpu.vector_store %arg5[%c0_26, %c0_27, %c0_28], %58 {strides = array<i32>} : memref<1x256x128xf32, #tpu.memory_space<vmem>>, vector<1x256x128xf32>,
    return
  }
  func.func @transform_0(%arg0: i32, %arg1: i32) -> (i32, i32, i32, i32) {
    %c0_i32 = arith.constant 0 : i32
    %c0_i32_0 = arith.constant 0 : i32
    %c0_i32_1 = arith.constant 0 : i32
    %c0_i32_2 = arith.constant 0 : i32
    return %arg0, %c0_i32, %c0_i32_0, %c0_i32_1 : i32, i32, i32, i32
  }
  func.func @transform_1(%arg0: i32, %arg1: i32) -> (i32, i32) {
    %c0_i32 = arith.constant 0 : i32
    %c0_i32_0 = arith.constant 0 : i32
    return %c0_i32, %arg1 : i32, i32
  }
  func.func @transform_2(%arg0: i32, %arg1: i32) -> (i32, i32) {
    %c0_i32 = arith.constant 0 : i32
    %c0_i32_0 = arith.constant 0 : i32
    return %c0_i32, %arg1 : i32, i32
  }
  func.func @transform_3(%arg0: i32, %arg1: i32) -> (i32, i32, i32) {
    %c0_i32 = arith.constant 0 : i32
    %c0_i32_0 = arith.constant 0 : i32
    return %arg0, %c0_i32, %arg1 : i32, i32, i32
  }
}

</mosaic_0001>

<llo_original>
// kernel: inter_forward.2
$region0: #{inter_forward.2}
  #allocation0 [shape = 'u32[]', space=smem, size = 0x4, offset = 0x4, fixed_abs, tag = 'smem constant byte address 0x4 - core index']
  #allocation1 [shape = 'u32[144,128]{1,0:T(1,128)}', space=vmem, size = 0x12000, scoped, tag = 'internal scratch']
  %s0 = inlined_call_operand.vmem [shape: bf16[2,34], index: 0, kind: input, shape index: {}]
  %s1 = inlined_call_operand.hbm [shape: bf16[34,64], index: 1, kind: input, shape index: {}]
  %s2 = inlined_call_operand.hbm [shape: f32[1,64], index: 2, kind: input, shape index: {}]
  %s3 = inlined_call_operand.hbm [shape: bf16[64,8192], index: 3, kind: input, shape index: {}]
  %s4 = inlined_call_operand.hbm [shape: f32[1,8192], index: 4, kind: input, shape index: {}]
  %s5 = inlined_call_operand.vmem [shape: bf16[2,8192], index: 5, kind: output, shape index: {}]
  %s6 = sld [smem:[#allocation0]]
  $region69: #{inter_forward.2} parent=0
    _
  %s8 = ssub.s32 1, %s6
  %s9 = scalar_select 0, %s8, %s6
  $region1: #{inter_forward.2} parent=0
    #allocation2 [shape = 'u8[10240]{0}', space=vmem, size = 0x2800, scoped, tag = 'input window, operand 1, single buffered']
    #allocation3 [shape = 's32[2]{0}', space=sflag, size = 0x8, scoped, tag = 'scoped memory for inter_forward.2']
    #allocation4 [shape = 'u8[512]{0}', space=vmem, size = 0x400, scoped, tag = 'input window, operand 2, single buffered']
    #allocation5 [shape = 's32[1]{0}', space=sflag, size = 0x4, scoped, tag = 'scoped memory for inter_forward.2']
    #allocation6 [shape = 'u8[1048576]{0}', space=vmem, size = 0x100000, scoped, tag = 'input window, operand 3']
    #allocation7 [shape = 'u8[32768]{0}', space=vmem, size = 0x8000, scoped, tag = 'input window, operand 4']
    %10 = vsyncpa [#allocation3], 0
    %11 = vsyncpa [#allocation5], 0
    loop: start=0, step=1, limit=4
    $region2: #{inter_forward.2} parent=1 // loop_pre_header
      _
    $region3: #{inter_forward.2} parent=1 // loop_header
      %s13 = sphi 0, %s17
      %p14 = scmp.ge.s32.totalorder %s13, 4
      %s21 = sphi 0, %s21
      %s23 = sphi 0, %s21
      %s24 = sphi 0, %s23
      %s38 = sphi 0, %s24
      %s42 = sphi 0, %s42
      %s44 = sphi 0, %s42
      %s45 = sphi 0, %s44
      %s59 = sphi 0, %s45
      %s63 = sphi 0, %s63
      %s65 = sphi 0, %s63
      %s66 = sphi 0, %s65
      %s80 = sphi 0, %s66
      %s86 = sphi 0, %s88
      %s89 = sphi 0, %s86
      %s90 = sphi 0, %s89
      %s106 = sphi 0, %s90
      %s112 = sphi 0, %s114
      %s115 = sphi 0, %s112
      %s116 = sphi 0, %s115
      %s132 = sphi 0, %s116
      %s138 = sphi 0, %s140
      %s141 = sphi 0, %s138
      %s142 = sphi 0, %s141
      %s158 = sphi 0, %s142
    $region4: #{inter_forward.2} parent=1 // loop_header_branch
      %16 = sbr.rel (%p14) target = $region8
    $region5: #{inter_forward.2} parent=1 // loop_body
      %s18 = ssub.s32 %s13, 1
      %s19 = ssub.s32 %s13, 2
      %s20 = sadd.s32 %s13, 1
      %s22 = sadd.s32 %s21, 1
      %p25 = scmp.eq.s32.totalorder %s13, 1
      %p26 = scmp.ne.s32.totalorder %s21, %s23
      %p27 = scmp.eq.s32.totalorder %s13, 0
      %p28 = por %p26, %p27
      %p29 = scmp.ne.s32.totalorder %s21, %s23
      %p30 = scmp.eq.s32.totalorder %s18, 1
      %p31 = por %p29, %p30
      %p32 = scmp.ne.s32.totalorder %s23, %s24
      %p33 = scmp.eq.s32.totalorder %s18, 0
      %p34 = por %p32, %p33
      %p35 = scmp.ne.s32.totalorder %s23, %s24
      %p36 = scmp.eq.s32.totalorder %s19, 1
      %p37 = por %p35, %p36
      %p39 = scmp.ne.s32.totalorder %s24, %s38
      %p40 = scmp.eq.s32.totalorder %s19, 0
      %p41 = por %p39, %p40
      %s43 = sadd.s32 %s42, 1
      %p46 = scmp.eq.s32.totalorder %s13, 1
      %p47 = scmp.ne.s32.totalorder %s42, %s44
      %p48 = scmp.eq.s32.totalorder %s13, 0
      %p49 = por %p47, %p48
      %p50 = scmp.ne.s32.totalorder %s42, %s44
      %p51 = scmp.eq.s32.totalorder %s18, 1
      %p52 = por %p50, %p51
      %p53 = scmp.ne.s32.totalorder %s44, %s45
      %p54 = scmp.eq.s32.totalorder %s18, 0
      %p55 = por %p53, %p54
      %p56 = scmp.ne.s32.totalorder %s44, %s45
      %p57 = scmp.eq.s32.totalorder %s19, 1
      %p58 = por %p56, %p57
      %p60 = scmp.ne.s32.totalorder %s45, %s59
      %p61 = scmp.eq.s32.totalorder %s19, 0
      %p62 = por %p60, %p61
      %s64 = sadd.s32 %s63, 1
      %p67 = scmp.eq.s32.totalorder %s13, 1
      %p68 = scmp.ne.s32.totalorder %s63, %s65
      %p69 = scmp.eq.s32.totalorder %s13, 0
      %p70 = por %p68, %p69
      %p71 = scmp.ne.s32.totalorder %s63, %s65
      %p72 = scmp.eq.s32.totalorder %s18, 1
      %p73 = por %p71, %p72
      %p74 = scmp.ne.s32.totalorder %s65, %s66
      %p75 = scmp.eq.s32.totalorder %s18, 0
      %p76 = por %p74, %p75
      %p77 = scmp.ne.s32.totalorder %s65, %s66
      %p78 = scmp.eq.s32.totalorder %s19, 1
      %p79 = por %p77, %p78
      %p81 = scmp.ne.s32.totalorder %s66, %s80
      %p82 = scmp.eq.s32.totalorder %s19, 0
      %p83 = por %p81, %p82
      %s84 = ssub.s32 %s13, %s20
      %p85 = scmp.eq.s32.totalorder %s84, 0
      %s87 = sadd.s32 %s86, 1
      %s88 = scalar_select %p85, %s86, %s87
      %p91 = pneg %p85
      %p92 = scmp.eq.s32.totalorder %s13, 1
      %p93 = por %p91, %p92
      %p94 = scmp.ne.s32.totalorder %s86, %s89
      %p95 = scmp.eq.s32.totalorder %s13, 0
      %p96 = por %p94, %p95
      %p97 = scmp.ne.s32.totalorder %s86, %s89
      %p98 = scmp.eq.s32.totalorder %s18, 1
      %p99 = por %p97, %p98
      %p100 = scmp.ne.s32.totalorder %s89, %s90
      %p101 = scmp.eq.s32.totalorder %s18, 0
      %p102 = por %p100, %p101
      %p103 = scmp.ne.s32.totalorder %s89, %s90
      %p104 = scmp.eq.s32.totalorder %s19, 1
      %p105 = por %p103, %p104
      %p107 = scmp.ne.s32.totalorder %s90, %s106
      %p108 = scmp.eq.s32.totalorder %s19, 0
      %p109 = por %p107, %p108
      %s110 = ssub.s32 %s13, %s20
      %p111 = scmp.eq.s32.totalorder %s110, 0
      %s113 = sadd.s32 %s112, 1
      %s114 = scalar_select %p111, %s112, %s113
      %p117 = pneg %p111
      %p118 = scmp.eq.s32.totalorder %s13, 1
      %p119 = por %p117, %p118
      %p120 = scmp.ne.s32.totalorder %s112, %s115
      %p121 = scmp.eq.s32.totalorder %s13, 0
      %p122 = por %p120, %p121
      %p123 = scmp.ne.s32.totalorder %s112, %s115
      %p124 = scmp.eq.s32.totalorder %s18, 1
      %p125 = por %p123, %p124
      %p126 = scmp.ne.s32.totalorder %s115, %s116
      %p127 = scmp.eq.s32.totalorder %s18, 0
      %p128 = por %p126, %p127
      %p129 = scmp.ne.s32.totalorder %s115, %s116
      %p130 = scmp.eq.s32.totalorder %s19, 1
      %p131 = por %p129, %p130
      %p133 = scmp.ne.s32.totalorder %s116, %s132
      %p134 = scmp.eq.s32.totalorder %s19, 0
      %p135 = por %p133, %p134
      %s136 = ssub.s32 %s13, %s20
      %p137 = scmp.eq.s32.totalorder %s136, 0
      %s139 = sadd.s32 %s138, 1
      %s140 = scalar_select %p137, %s138, %s139
      %p143 = pneg %p137
      %p144 = scmp.eq.s32.totalorder %s13, 1
      %p145 = por %p143, %p144
      %p146 = scmp.ne.s32.totalorder %s138, %s141
      %p147 = scmp.eq.s32.totalorder %s13, 0
      %p148 = por %p146, %p147
      %p149 = scmp.ne.s32.totalorder %s138, %s141
      %p150 = scmp.eq.s32.totalorder %s18, 1
      %p151 = por %p149, %p150
      %p152 = scmp.ne.s32.totalorder %s141, %s142
      %p153 = scmp.eq.s32.totalorder %s18, 0
      %p154 = por %p152, %p153
      %p155 = scmp.ne.s32.totalorder %s141, %s142
      %p156 = scmp.eq.s32.totalorder %s19, 1
      %p157 = por %p155, %p156
      %p159 = scmp.ne.s32.totalorder %s142, %s158
      %p160 = scmp.eq.s32.totalorder %s19, 0
      %p161 = por %p159, %p160
      %p162 = scmp.le.s32.totalorder 1, %s13
      %p163 = scmp.lt.s32.totalorder %s13, 3
      %p164 = pnand %p162, %p163
      %p165 = pneg %p164
      // Predicated region
      $region9: #{inter_forward.2} parent=5 // pred_check
        _
      $region10: #{inter_forward.2} parent=5 // pred_check_branch
        %167 = sbr.rel (%p164) target = $region12
      $region11: #{inter_forward.2} parent=5 // pred_region
        %s168 = ssub.s32 %s13, 1
        // Predicated region
        $region13: #{inter_forward.2} parent=11 // pred_check
          %p169 = pneg %p34
        $region14: #{inter_forward.2} parent=11 // pred_check_branch
          %171 = sbr.rel (%p169) target = $region16
        $region15: #{inter_forward.2} parent=11 // pred_region
          _
        $region16: #{inter_forward.2} parent=11 // pred_fallthru
          _
        // Predicated region
        $region17: #{inter_forward.2} parent=11 // pred_check
          %p172 = pneg %p55
        $region18: #{inter_forward.2} parent=11 // pred_check_branch
          %174 = sbr.rel (%p172) target = $region20
        $region19: #{inter_forward.2} parent=11 // pred_region
          %s176 = ssub.s32 320, 320
          %177 = vsyncadd [#allocation3], %s176
          %s178 = sshll.u32 [#allocation2], 4
          %s179 = int_to_ptr.vmem [resolvable:$true] %s178
          %184 = dma.hbm_to_vmem [thread:$0]  %s1, 320, %s179, [#allocation3], 64, 64, 4
        $region20: #{inter_forward.2} parent=11 // pred_fallthru
          _
        // Predicated region
        $region21: #{inter_forward.2} parent=11 // pred_check
          %p185 = pneg %p76
        $region22: #{inter_forward.2} parent=11 // pred_check_branch
          %187 = sbr.rel (%p185) target = $region24
        $region23: #{inter_forward.2} parent=11 // pred_region
          %s189 = ssub.s32 16, 16
          %190 = vsyncadd [#allocation5], %s189
          %s192 = sshll.u32 [#allocation4], 4
          %s193 = int_to_ptr.vmem [resolvable:$true] %s192
          %195 = dma.hbm_to_vmem [thread:$0]  %s2, 16, %s193, [#allocation5]
        $region24: #{inter_forward.2} parent=11 // pred_fallthru
          _
      $region12: #{inter_forward.2} parent=5 // pred_fallthru
        _
      %p196 = scmp.lt.s32.totalorder %s13, 2
      // Predicated region
      $region25: #{inter_forward.2} parent=5 // pred_check
        %p197 = pneg %p196
      $region26: #{inter_forward.2} parent=5 // pred_check_branch
        %199 = sbr.rel (%p197) target = $region28
      $region27: #{inter_forward.2} parent=5 // pred_region
        // Predicated region
        $region29: #{inter_forward.2} parent=27 // pred_check
          %p200 = pneg %p96
        $region30: #{inter_forward.2} parent=27 // pred_check_branch
          %202 = sbr.rel (%p200) target = $region32
        $region31: #{inter_forward.2} parent=27 // pred_region
          %s203 = sand.u32 %s13, 1
          %s204 = scalar_lea.sflag [#allocation3], %s203
          %s205 = sand.u32 %s86, 1
          %s206 = smul.addr %s205, 1024
          %s207 = scalar_lea.vmem [#allocation6], %s206
          %s208 = smul.u32 32, %s13
          %s210 = ssub.s32 16384, 16384
          %211 = vsyncadd %s204, %s210
          %s212 = smul.addr %s208, 64
          %s213 = scalar_lea.hbm %s3, %s212
          %s214 = sshll.u32 %s207, 4
          %s215 = int_to_ptr.vmem [resolvable:$true] %s214
          %220 = dma.hbm_to_vmem [thread:$0]  %s213, 16384, %s215, %s204, 4096, 2048, 128
        $region32: #{inter_forward.2} parent=27 // pred_fallthru
          _
        // Predicated region
        $region33: #{inter_forward.2} parent=27 // pred_check
          %p221 = pneg %p122
        $region34: #{inter_forward.2} parent=27 // pred_check_branch
          %223 = sbr.rel (%p221) target = $region36
        $region35: #{inter_forward.2} parent=27 // pred_region
          %s224 = sand.u32 %s13, 1
          %s225 = scalar_lea.sflag [#allocation3], %s224
          %s226 = sand.u32 %s112, 1
          %s227 = smul.addr %s226, 32
          %s228 = scalar_lea.vmem [#allocation7], %s227
          %s229 = smul.u32 32, %s13
          %s231 = ssub.s32 512, 512
          %232 = vsyncadd %s225, %s231
          %s233 = smul.addr %s229, 16
          %s234 = scalar_lea.hbm %s4, %s233
          %s236 = sshll.u32 %s228, 4
          %s237 = int_to_ptr.vmem [resolvable:$true] %s236
          %239 = dma.hbm_to_vmem [thread:$0]  %s234, 512, %s237, %s225
        $region36: #{inter_forward.2} parent=27 // pred_fallthru
          _
      $region28: #{inter_forward.2} parent=5 // pred_fallthru
        _
      %p240 = scmp.le.s32.totalorder 1, %s13
      %p241 = scmp.lt.s32.totalorder %s13, 3
      %p242 = pnand %p240, %p241
      %p243 = pneg %p242
      // Predicated region
      $region37: #{inter_forward.2} parent=5 // pred_check
        _
      $region38: #{inter_forward.2} parent=5 // pred_check_branch
        %245 = sbr.rel (%p242) target = $region40
      $region39: #{inter_forward.2} parent=5 // pred_region
        %s246 = ssub.s32 %s13, 1
        // Predicated region
        $region41: #{inter_forward.2} parent=39 // pred_check
          %p247 = pneg %p55
        $region42: #{inter_forward.2} parent=39 // pred_check_branch
          %249 = sbr.rel (%p247) target = $region44
        $region43: #{inter_forward.2} parent=39 // pred_region
          %250 = dma.done [#allocation3], 320
        $region44: #{inter_forward.2} parent=39 // pred_fallthru
          _
        // Predicated region
        $region45: #{inter_forward.2} parent=39 // pred_check
          %p251 = pneg %p76
        $region46: #{inter_forward.2} parent=39 // pred_check_branch
          %253 = sbr.rel (%p251) target = $region48
        $region47: #{inter_forward.2} parent=39 // pred_region
          %254 = dma.done [#allocation5], 16
        $region48: #{inter_forward.2} parent=39 // pred_fallthru
          _
        %s255 = sand.u32 %s18, 1
        %s256 = scalar_lea.sflag [#allocation3], %s255
        %s257 = sand.u32 %s89, 1
        %s258 = smul.addr %s257, 1024
        %s259 = scalar_lea.vmem [#allocation6], %s258
        // Predicated region
        $region49: #{inter_forward.2} parent=39 // pred_check
          %p260 = pneg %p102
        $region50: #{inter_forward.2} parent=39 // pred_check_branch
          %262 = sbr.rel (%p260) target = $region52
        $region51: #{inter_forward.2} parent=39 // pred_region
          %263 = dma.done %s256, 16384
        $region52: #{inter_forward.2} parent=39 // pred_fallthru
          _
        %s264 = sand.u32 %s18, 1
        %s265 = scalar_lea.sflag [#allocation3], %s264
        %s266 = sand.u32 %s115, 1
        %s267 = smul.addr %s266, 32
        %s268 = scalar_lea.vmem [#allocation7], %s267
        // Predicated region
        $region53: #{inter_forward.2} parent=39 // pred_check
          %p269 = pneg %p128
        $region54: #{inter_forward.2} parent=39 // pred_check_branch
          %271 = sbr.rel (%p269) target = $region56
        $region55: #{inter_forward.2} parent=39 // pred_region
          %272 = dma.done %s265, 512
        $region56: #{inter_forward.2} parent=39 // pred_fallthru
          _
        %p273 = pneg %p34
        %p274 = pneg %p31
        %p275 = pneg %p55
        %p276 = pneg %p52
        %p277 = pneg %p76
        %p278 = pneg %p73
        %s279 = sand.u32 %s18, 1
        %s280 = scalar_lea.sflag [#allocation3], %s279
        %s281 = sand.u32 %s89, 1
        %s282 = smul.addr %s281, 1024
        %s283 = scalar_lea.vmem [#allocation6], %s282
        %p284 = pneg %p102
        %p285 = pneg %p99
        %s286 = sand.u32 %s18, 1
        %s287 = scalar_lea.sflag [#allocation3], %s286
        %s288 = sand.u32 %s115, 1
        %s289 = smul.addr %s288, 32
        %s290 = scalar_lea.vmem [#allocation7], %s289
        %p291 = pneg %p128
        %p292 = pneg %p125
        %p293 = pneg %p154
        %p294 = pneg %p151
        %s295 = smul.u32 32, %s18
        %p296 = scmp.lt.s32.totalorder %s295, 63
        %s297 = scalar_select %p296, %s295, 63
        %s298 = scalar_lea.vmem %s5, %s297
        %s299 = smul.u32 32, %s18
        %s300 = smul.u32 32, %s18
        %s301 = smul.u32 32, %s18
        %p302 = scmp.lt.s32.totalorder %s301, 63
        %s303 = scalar_select %p302, %s301, 63
        %s304 = scalar_lea.vmem %s5, %s303
        %s305 = smul.u32 32, %s18
        %v307 = vld [vmem:[%s0] sm:$0x1]
        %v308 = vld [vmem:[#allocation2] sm:$0xf]
        %v309 = vld [vmem:[#allocation2 + $0x4] sm:$0xf]
        %v310 = vld [vmem:[#allocation2 + $0x8] sm:$0xf]
        %v311 = vld [vmem:[#allocation2 + $0xc] sm:$0xf]
        %v312 = vld [vmem:[#allocation2 + $0x10] sm:$0x1]
        %v313 = vld [vmem:[#allocation4] sm:$0x1]
        %v315 = vlaneseq
        %v316 = vshrl.u32 %v315, 7
        %v317 = vsub.s32 0, %v316
        %v318 = vrot.slane %v313, %v317
        %v325 = vunpack.c.l.b16 %v308
        %v326 = vunpack.c.l.b16 %v309
        %v327 = vunpack.c.l.b16 %v310
        %v328 = vunpack.c.l.b16 %v311
        %v329 = vunpack.c.l.b16 %v312
        %v330 = vpack.c.b16 %v326, %v325
        %v331 = vpack.c.b16 %v328, %v327
        %v332 = vpack.c.b16 %v329, %v329
        %vm335 = vcmask 277504
        %v337 = vsel %vm335, %v307, 0
        %vm339 = vcmask 1040384
        %v341 = vsel %vm339, %v332, 0
        %343 = vmatprep.subr.bf16.mxu0 0
        %344 = vmatpush1.bf16.msra.mxu0 %v330
        %345 = vmatprep.subr.bf16.mxu0 0
        %346 = vmatpush1.bf16.msra.mxu0 %v331
        %347 = vmatprep.subr.bf16.mxu0 0
        %348 = vmatpush1.bf16.msra.mxu0 %v341
        %349 = vmatprep.subr.bf16.mxu0 0
        %350 = vmatpush1.bf16.msra.mxu0 0
        %351 = vmatprep.subr.bf16.mxu0 0
        %352 = vmatpush1.bf16.msra.mxu0 0
        %353 = vmatprep.subr.bf16.mxu0 0
        %354 = vmatpush1.bf16.msra.mxu0 0
        %355 = vmatprep.subr.bf16.mxu0 0
        %356 = vmatpush1.bf16.msra.mxu0 0
        %357 = vmatprep.subr.bf16.mxu0 0
        %358 = vmatpush1.bf16.msra.mxu0 0
        %359 = vmatprep.subr.bf16.mxu0 0
        %360 = vmatpush1.bf16.msra.mxu0 0
        %361 = vmatprep.subr.bf16.mxu0 0
        %362 = vmatpush1.bf16.msra.mxu0 0
        %363 = vmatprep.subr.bf16.mxu0 0
        %364 = vmatpush1.bf16.msra.mxu0 0
        %365 = vmatprep.subr.bf16.mxu0 0
        %366 = vmatpush1.bf16.msra.mxu0 0
        %367 = vmatprep.subr.bf16.mxu0 0
        %368 = vmatpush1.bf16.msra.mxu0 0
        %369 = vmatprep.subr.bf16.mxu0 0
        %370 = vmatpush1.bf16.msra.mxu0 0
        %371 = vmatprep.subr.bf16.mxu0 0
        %372 = vmatpush1.bf16.msra.mxu0 0
        %373 = vmatprep.subr.bf16.mxu0 0
        %374 = vmatpush1.bf16.msra.mxu0 0
        %375 = vmatprep.mubr.bf16.mxu0 0
        %376 = vmatmul.mubr.bf16.gmra.mrb[0].mxu0 %v337
        %v377 = vpop.f32.mrb[0].mxu0
        %v378 = vadd.f32 %v318, %v377
        %v379 = vpop.f32.mrb[0].mxu0
        %v380 = vpop.f32.mrb[0].mxu0
        %v381 = vpop.f32.mrb[0].mxu0
        %382 = vdwg.mxu0
        %v383 = vpack.c.bf16 %v378, %v378
        %v384 = vld [vmem:[%s259] sm:$0xff]
        %v385 = vld [vmem:[%s259 + $0x8] sm:$0xff]
        %v386 = vld [vmem:[%s259 + $0x10] sm:$0xff]
        %v387 = vld [vmem:[%s259 + $0x18] sm:$0xff]
        %v388 = vld [vmem:[%s259 + $0x20] sm:$0xff]
        %v389 = vld [vmem:[%s259 + $0x28] sm:$0xff]
        %v390 = vld [vmem:[%s259 + $0x30] sm:$0xff]
        %v391 = vld [vmem:[%s259 + $0x38] sm:$0xff]
        %v392 = vld [vmem:[%s259 + $0x40] sm:$0xff]
        %v393 = vld [vmem:[%s259 + $0x48] sm:$0xff]
        %v394 = vld [vmem:[%s259 + $0x50] sm:$0xff]
        %v395 = vld [vmem:[%s259 + $0x58] sm:$0xff]
        %v396 = vld [vmem:[%s259 + $0x60] sm:$0xff]
        %v397 = vld [vmem:[%s259 + $0x68] sm:$0xff]
        %v398 = vld [vmem:[%s259 + $0x70] sm:$0xff]
        %v399 = vld [vmem:[%s259 + $0x78] sm:$0xff]
        %v400 = vld [vmem:[%s259 + $0x80] sm:$0xff]
        %v401 = vld [vmem:[%s259 + $0x88] sm:$0xff]
        %v402 = vld [vmem:[%s259 + $0x90] sm:$0xff]
        %v403 = vld [vmem:[%s259 + $0x98] sm:$0xff]
        %v404 = vld [vmem:[%s259 + $0xa0] sm:$0xff]
        %v405 = vld [vmem:[%s259 + $0xa8] sm:$0xff]
        %v406 = vld [vmem:[%s259 + $0xb0] sm:$0xff]
        %v407 = vld [vmem:[%s259 + $0xb8] sm:$0xff]
        %v408 = vld [vmem:[%s259 + $0xc0] sm:$0xff]
        %v409 = vld [vmem:[%s259 + $0xc8] sm:$0xff]
        %v410 = vld [vmem:[%s259 + $0xd0] sm:$0xff]
        %v411 = vld [vmem:[%s259 + $0xd8] sm:$0xff]
        %v412 = vld [vmem:[%s259 + $0xe0] sm:$0xff]
        %v413 = vld [vmem:[%s259 + $0xe8] sm:$0xff]
        %v414 = vld [vmem:[%s259 + $0xf0] sm:$0xff]
        %v415 = vld [vmem:[%s259 + $0xf8] sm:$0xff]
        %v416 = vld [vmem:[%s259 + $0x100] sm:$0xff]
        %v417 = vld [vmem:[%s259 + $0x108] sm:$0xff]
        %v418 = vld [vmem:[%s259 + $0x110] sm:$0xff]
        %v419 = vld [vmem:[%s259 + $0x118] sm:$0xff]
        %v420 = vld [vmem:[%s259 + $0x120] sm:$0xff]
        %v421 = vld [vmem:[%s259 + $0x128] sm:$0xff]
        %v422 = vld [vmem:[%s259 + $0x130] sm:$0xff]
        %v423 = vld [vmem:[%s259 + $0x138] sm:$0xff]
        %v424 = vld [vmem:[%s259 + $0x140] sm:$0xff]
        %v425 = vld [vmem:[%s259 + $0x148] sm:$0xff]
        %v426 = vld [vmem:[%s259 + $0x150] sm:$0xff]
        %v427 = vld [vmem:[%s259 + $0x158] sm:$0xff]
        %v428 = vld [vmem:[%s259 + $0x160] sm:$0xff]
        %v429 = vld [vmem:[%s259 + $0x168] sm:$0xff]
        %v430 = vld [vmem:[%s259 + $0x170] sm:$0xff]
        %v431 = vld [vmem:[%s259 + $0x178] sm:$0xff]
        %v432 = vld [vmem:[%s259 + $0x180] sm:$0xff]
        %v433 = vld [vmem:[%s259 + $0x188] sm:$0xff]
        %v434 = vld [vmem:[%s259 + $0x190] sm:$0xff]
        %v435 = vld [vmem:[%s259 + $0x198] sm:$0xff]
        %v436 = vld [vmem:[%s259 + $0x1a0] sm:$0xff]
        %v437 = vld [vmem:[%s259 + $0x1a8] sm:$0xff]
        %v438 = vld [vmem:[%s259 + $0x1b0] sm:$0xff]
        %v439 = vld [vmem:[%s259 + $0x1b8] sm:$0xff]
        %v440 = vld [vmem:[%s259 + $0x1c0] sm:$0xff]
        %v441 = vld [vmem:[%s259 + $0x1c8] sm:$0xff]
        %v442 = vld [vmem:[%s259 + $0x1d0] sm:$0xff]
        %v443 = vld [vmem:[%s259 + $0x1d8] sm:$0xff]
        %v444 = vld [vmem:[%s259 + $0x1e0] sm:$0xff]
        %v445 = vld [vmem:[%s259 + $0x1e8] sm:$0xff]
        %v446 = vld [vmem:[%s259 + $0x1f0] sm:$0xff]
        %v447 = vld [vmem:[%s259 + $0x1f8] sm:$0xff]
        %v448 = vld [vmem:[%s259 + $0x200] sm:$0xff]
        %v449 = vld [vmem:[%s259 + $0x208] sm:$0xff]
        %v450 = vld [vmem:[%s259 + $0x210] sm:$0xff]
        %v451 = vld [vmem:[%s259 + $0x218] sm:$0xff]
        %v452 = vld [vmem:[%s259 + $0x220] sm:$0xff]
        %v453 = vld [vmem:[%s259 + $0x228] sm:$0xff]
        %v454 = vld [vmem:[%s259 + $0x230] sm:$0xff]
        %v455 = vld [vmem:[%s259 + $0x238] sm:$0xff]
        %v456 = vld [vmem:[%s259 + $0x240] sm:$0xff]
        %v457 = vld [vmem:[%s259 + $0x248] sm:$0xff]
        %v458 = vld [vmem:[%s259 + $0x250] sm:$0xff]
        %v459 = vld [vmem:[%s259 + $0x258] sm:$0xff]
        %v460 = vld [vmem:[%s259 + $0x260] sm:$0xff]
        %v461 = vld [vmem:[%s259 + $0x268] sm:$0xff]
        %v462 = vld [vmem:[%s259 + $0x270] sm:$0xff]
        %v463 = vld [vmem:[%s259 + $0x278] sm:$0xff]
        %v464 = vld [vmem:[%s259 + $0x280] sm:$0xff]
        %v465 = vld [vmem:[%s259 + $0x288] sm:$0xff]
        %v466 = vld [vmem:[%s259 + $0x290] sm:$0xff]
        %v467 = vld [vmem:[%s259 + $0x298] sm:$0xff]
        %v468 = vld [vmem:[%s259 + $0x2a0] sm:$0xff]
        %v469 = vld [vmem:[%s259 + $0x2a8] sm:$0xff]
        %v470 = vld [vmem:[%s259 + $0x2b0] sm:$0xff]
        %v471 = vld [vmem:[%s259 + $0x2b8] sm:$0xff]
        %v472 = vld [vmem:[%s259 + $0x2c0] sm:$0xff]
        %v473 = vld [vmem:[%s259 + $0x2c8] sm:$0xff]
        %v474 = vld [vmem:[%s259 + $0x2d0] sm:$0xff]
        %v475 = vld [vmem:[%s259 + $0x2d8] sm:$0xff]
        %v476 = vld [vmem:[%s259 + $0x2e0] sm:$0xff]
        %v477 = vld [vmem:[%s259 + $0x2e8] sm:$0xff]
        %v478 = vld [vmem:[%s259 + $0x2f0] sm:$0xff]
        %v479 = vld [vmem:[%s259 + $0x2f8] sm:$0xff]
        %v480 = vld [vmem:[%s259 + $0x300] sm:$0xff]
        %v481 = vld [vmem:[%s259 + $0x308] sm:$0xff]
        %v482 = vld [vmem:[%s259 + $0x310] sm:$0xff]
        %v483 = vld [vmem:[%s259 + $0x318] sm:$0xff]
        %v484 = vld [vmem:[%s259 + $0x320] sm:$0xff]
        %v485 = vld [vmem:[%s259 + $0x328] sm:$0xff]
        %v486 = vld [vmem:[%s259 + $0x330] sm:$0xff]
        %v487 = vld [vmem:[%s259 + $0x338] sm:$0xff]
        %v488 = vld [vmem:[%s259 + $0x340] sm:$0xff]
        %v489 = vld [vmem:[%s259 + $0x348] sm:$0xff]
        %v490 = vld [vmem:[%s259 + $0x350] sm:$0xff]
        %v491 = vld [vmem:[%s259 + $0x358] sm:$0xff]
        %v492 = vld [vmem:[%s259 + $0x360] sm:$0xff]
        %v493 = vld [vmem:[%s259 + $0x368] sm:$0xff]
        %v494 = vld [vmem:[%s259 + $0x370] sm:$0xff]
        %v495 = vld [vmem:[%s259 + $0x378] sm:$0xff]
        %v496 = vld [vmem:[%s259 + $0x380] sm:$0xff]
        %v497 = vld [vmem:[%s259 + $0x388] sm:$0xff]
        %v498 = vld [vmem:[%s259 + $0x390] sm:$0xff]
        %v499 = vld [vmem:[%s259 + $0x398] sm:$0xff]
        %v500 = vld [vmem:[%s259 + $0x3a0] sm:$0xff]
        %v501 = vld [vmem:[%s259 + $0x3a8] sm:$0xff]
        %v502 = vld [vmem:[%s259 + $0x3b0] sm:$0xff]
        %v503 = vld [vmem:[%s259 + $0x3b8] sm:$0xff]
        %v504 = vld [vmem:[%s259 + $0x3c0] sm:$0xff]
        %v505 = vld [vmem:[%s259 + $0x3c8] sm:$0xff]
        %v506 = vld [vmem:[%s259 + $0x3d0] sm:$0xff]
        %v507 = vld [vmem:[%s259 + $0x3d8] sm:$0xff]
        %v508 = vld [vmem:[%s259 + $0x3e0] sm:$0xff]
        %v509 = vld [vmem:[%s259 + $0x3e8] sm:$0xff]
        %v510 = vld [vmem:[%s259 + $0x3f0] sm:$0xff]
        %v511 = vld [vmem:[%s259 + $0x3f8] sm:$0xff]
        %v512 = vld [vmem:[%s268] sm:$0xff]
        %v513 = vld [vmem:[%s268 + $0x8] sm:$0xff]
        %v514 = vld [vmem:[%s268 + $0x10] sm:$0xff]
        %v515 = vld [vmem:[%s268 + $0x18] sm:$0xff]
        %v520 = vlaneseq
        %v521 = vshrl.u32 %v520, 7
        %v522 = vsub.s32 0, %v521
        %v523 = vrot.slane %v512, %v522
        %v524 = vlaneseq
        %v525 = vshrl.u32 %v524, 7
        %v526 = vsub.s32 1, %v525
        %v527 = vrot.slane %v512, %v526
        %v528 = vlaneseq
        %v529 = vshrl.u32 %v528, 7
        %v530 = vsub.s32 2, %v529
        %v531 = vrot.slane %v512, %v530
        %v532 = vlaneseq
        %v533 = vshrl.u32 %v532, 7
        %v534 = vsub.s32 3, %v533
        %v535 = vrot.slane %v512, %v534
        %v536 = vlaneseq
        %v537 = vshrl.u32 %v536, 7
        %v538 = vsub.s32 4, %v537
        %v539 = vrot.slane %v512, %v538
        %v540 = vlaneseq
        %v541 = vshrl.u32 %v540, 7
        %v542 = vsub.s32 5, %v541
        %v543 = vrot.slane %v512, %v542
        %v544 = vlaneseq
        %v545 = vshrl.u32 %v544, 7
        %v546 = vsub.s32 6, %v545
        %v547 = vrot.slane %v512, %v546
        %v548 = vlaneseq
        %v549 = vshrl.u32 %v548, 7
        %v550 = vsub.s32 7, %v549
        %v551 = vrot.slane %v512, %v550
        %v552 = vlaneseq
        %v553 = vshrl.u32 %v552, 7
        %v554 = vsub.s32 0, %v553
        %v555 = vrot.slane %v513, %v554
        %v556 = vlaneseq
        %v557 = vshrl.u32 %v556, 7
        %v558 = vsub.s32 1, %v557
        %v559 = vrot.slane %v513, %v558
        %v560 = vlaneseq
        %v561 = vshrl.u32 %v560, 7
        %v562 = vsub.s32 2, %v561
        %v563 = vrot.slane %v513, %v562
        %v564 = vlaneseq
        %v565 = vshrl.u32 %v564, 7
        %v566 = vsub.s32 3, %v565
        %v567 = vrot.slane %v513, %v566
        %v568 = vlaneseq
        %v569 = vshrl.u32 %v568, 7
        %v570 = vsub.s32 4, %v569
        %v571 = vrot.slane %v513, %v570
        %v572 = vlaneseq
        %v573 = vshrl.u32 %v572, 7
        %v574 = vsub.s32 5, %v573
        %v575 = vrot.slane %v513, %v574
        %v576 = vlaneseq
        %v577 = vshrl.u32 %v576, 7
        %v578 = vsub.s32 6, %v577
        %v579 = vrot.slane %v513, %v578
        %v580 = vlaneseq
        %v581 = vshrl.u32 %v580, 7
        %v582 = vsub.s32 7, %v581
        %v583 = vrot.slane %v513, %v582
        %v584 = vlaneseq
        %v585 = vshrl.u32 %v584, 7
        %v586 = vsub.s32 0, %v585
        %v587 = vrot.slane %v514, %v586
        %v588 = vlaneseq
        %v589 = vshrl.u32 %v588, 7
        %v590 = vsub.s32 1, %v589
        %v591 = vrot.slane %v514, %v590
        %v592 = vlaneseq
        %v593 = vshrl.u32 %v592, 7
        %v594 = vsub.s32 2, %v593
        %v595 = vrot.slane %v514, %v594
        %v596 = vlaneseq
        %v597 = vshrl.u32 %v596, 7
        %v598 = vsub.s32 3, %v597
        %v599 = vrot.slane %v514, %v598
        %v600 = vlaneseq
        %v601 = vshrl.u32 %v600, 7
        %v602 = vsub.s32 4, %v601
        %v603 = vrot.slane %v514, %v602
        %v604 = vlaneseq
        %v605 = vshrl.u32 %v604, 7
        %v606 = vsub.s32 5, %v605
        %v607 = vrot.slane %v514, %v606
        %v608 = vlaneseq
        %v609 = vshrl.u32 %v608, 7
        %v610 = vsub.s32 6, %v609
        %v611 = vrot.slane %v514, %v610
        %v612 = vlaneseq
        %v613 = vshrl.u32 %v612, 7
        %v614 = vsub.s32 7, %v613
        %v615 = vrot.slane %v514, %v614
        %v616 = vlaneseq
        %v617 = vshrl.u32 %v616, 7
        %v618 = vsub.s32 0, %v617
        %v619 = vrot.slane %v515, %v618
        %v620 = vlaneseq
        %v621 = vshrl.u32 %v620, 7
        %v622 = vsub.s32 1, %v621
        %v623 = vrot.slane %v515, %v622
        %v624 = vlaneseq
        %v625 = vshrl.u32 %v624, 7
        %v626 = vsub.s32 2, %v625
        %v627 = vrot.slane %v515, %v626
        %v628 = vlaneseq
        %v629 = vshrl.u32 %v628, 7
        %v630 = vsub.s32 3, %v629
        %v631 = vrot.slane %v515, %v630
        %v632 = vlaneseq
        %v633 = vshrl.u32 %v632, 7
        %v634 = vsub.s32 4, %v633
        %v635 = vrot.slane %v515, %v634
        %v636 = vlaneseq
        %v637 = vshrl.u32 %v636, 7
        %v638 = vsub.s32 5, %v637
        %v639 = vrot.slane %v515, %v638
        %v640 = vlaneseq
        %v641 = vshrl.u32 %v640, 7
        %v642 = vsub.s32 6, %v641
        %v643 = vrot.slane %v515, %v642
        %v644 = vlaneseq
        %v645 = vshrl.u32 %v644, 7
        %v646 = vsub.s32 7, %v645
        %v647 = vrot.slane %v515, %v646
        %v808 = vunpack.c.l.b16 %v384
        %v809 = vunpack.c.h.b16 %v384
        %v810 = vunpack.c.l.b16 %v385
        %v811 = vunpack.c.h.b16 %v385
        %v812 = vunpack.c.l.b16 %v386
        %v813 = vunpack.c.h.b16 %v386
        %v814 = vunpack.c.l.b16 %v387
        %v815 = vunpack.c.h.b16 %v387
        %v816 = vunpack.c.l.b16 %v388
        %v817 = vunpack.c.h.b16 %v388
        %v818 = vunpack.c.l.b16 %v389
        %v819 = vunpack.c.h.b16 %v389
        %v820 = vunpack.c.l.b16 %v390
        %v821 = vunpack.c.h.b16 %v390
        %v822 = vunpack.c.l.b16 %v391
        %v823 = vunpack.c.h.b16 %v391
        %v824 = vunpack.c.l.b16 %v392
        %v825 = vunpack.c.h.b16 %v392
        %v826 = vunpack.c.l.b16 %v393
        %v827 = vunpack.c.h.b16 %v393
        %v828 = vunpack.c.l.b16 %v394
        %v829 = vunpack.c.h.b16 %v394
        %v830 = vunpack.c.l.b16 %v395
        %v831 = vunpack.c.h.b16 %v395
        %v832 = vunpack.c.l.b16 %v396
        %v833 = vunpack.c.h.b16 %v396
        %v834 = vunpack.c.l.b16 %v397
        %v835 = vunpack.c.h.b16 %v397
        %v836 = vunpack.c.l.b16 %v398
        %v837 = vunpack.c.h.b16 %v398
        %v838 = vunpack.c.l.b16 %v399
        %v839 = vunpack.c.h.b16 %v399
        %v840 = vunpack.c.l.b16 %v400
        %v841 = vunpack.c.h.b16 %v400
        %v842 = vunpack.c.l.b16 %v401
        %v843 = vunpack.c.h.b16 %v401
        %v844 = vunpack.c.l.b16 %v402
        %v845 = vunpack.c.h.b16 %v402
        %v846 = vunpack.c.l.b16 %v403
        %v847 = vunpack.c.h.b16 %v403
        %v848 = vunpack.c.l.b16 %v404
        %v849 = vunpack.c.h.b16 %v404
        %v850 = vunpack.c.l.b16 %v405
        %v851 = vunpack.c.h.b16 %v405
        %v852 = vunpack.c.l.b16 %v406
        %v853 = vunpack.c.h.b16 %v406
        %v854 = vunpack.c.l.b16 %v407
        %v855 = vunpack.c.h.b16 %v407
        %v856 = vunpack.c.l.b16 %v408
        %v857 = vunpack.c.h.b16 %v408
        %v858 = vunpack.c.l.b16 %v409
        %v859 = vunpack.c.h.b16 %v409
        %v860 = vunpack.c.l.b16 %v410
        %v861 = vunpack.c.h.b16 %v410
        %v862 = vunpack.c.l.b16 %v411
        %v863 = vunpack.c.h.b16 %v411
        %v864 = vunpack.c.l.b16 %v412
        %v865 = vunpack.c.h.b16 %v412
        %v866 = vunpack.c.l.b16 %v413
        %v867 = vunpack.c.h.b16 %v413
        %v868 = vunpack.c.l.b16 %v414
        %v869 = vunpack.c.h.b16 %v414
        %v870 = vunpack.c.l.b16 %v415
        %v871 = vunpack.c.h.b16 %v415
        %v872 = vunpack.c.l.b16 %v416
        %v873 = vunpack.c.h.b16 %v416
        %v874 = vunpack.c.l.b16 %v417
        %v875 = vunpack.c.h.b16 %v417
        %v876 = vunpack.c.l.b16 %v418
        %v877 = vunpack.c.h.b16 %v418
        %v878 = vunpack.c.l.b16 %v419
        %v879 = vunpack.c.h.b16 %v419
        %v880 = vunpack.c.l.b16 %v420
        %v881 = vunpack.c.h.b16 %v420
        %v882 = vunpack.c.l.b16 %v421
        %v883 = vunpack.c.h.b16 %v421
        %v884 = vunpack.c.l.b16 %v422
        %v885 = vunpack.c.h.b16 %v422
        %v886 = vunpack.c.l.b16 %v423
        %v887 = vunpack.c.h.b16 %v423
        %v888 = vunpack.c.l.b16 %v424
        %v889 = vunpack.c.h.b16 %v424
        %v890 = vunpack.c.l.b16 %v425
        %v891 = vunpack.c.h.b16 %v425
        %v892 = vunpack.c.l.b16 %v426
        %v893 = vunpack.c.h.b16 %v426
        %v894 = vunpack.c.l.b16 %v427
        %v895 = vunpack.c.h.b16 %v427
        %v896 = vunpack.c.l.b16 %v428
        %v897 = vunpack.c.h.b16 %v428
        %v898 = vunpack.c.l.b16 %v429
        %v899 = vunpack.c.h.b16 %v429
        %v900 = vunpack.c.l.b16 %v430
        %v901 = vunpack.c.h.b16 %v430
        %v902 = vunpack.c.l.b16 %v431
        %v903 = vunpack.c.h.b16 %v431
        %v904 = vunpack.c.l.b16 %v432
        %v905 = vunpack.c.h.b16 %v432
        %v906 = vunpack.c.l.b16 %v433
        %v907 = vunpack.c.h.b16 %v433
        %v908 = vunpack.c.l.b16 %v434
        %v909 = vunpack.c.h.b16 %v434
        %v910 = vunpack.c.l.b16 %v435
        %v911 = vunpack.c.h.b16 %v435
        %v912 = vunpack.c.l.b16 %v436
        %v913 = vunpack.c.h.b16 %v436
        %v914 = vunpack.c.l.b16 %v437
        %v915 = vunpack.c.h.b16 %v437
        %v916 = vunpack.c.l.b16 %v438
        %v917 = vunpack.c.h.b16 %v438
        %v918 = vunpack.c.l.b16 %v439
        %v919 = vunpack.c.h.b16 %v439
        %v920 = vunpack.c.l.b16 %v440
        %v921 = vunpack.c.h.b16 %v440
        %v922 = vunpack.c.l.b16 %v441
        %v923 = vunpack.c.h.b16 %v441
        %v924 = vunpack.c.l.b16 %v442
        %v925 = vunpack.c.h.b16 %v442
        %v926 = vunpack.c.l.b16 %v443
        %v927 = vunpack.c.h.b16 %v443
        %v928 = vunpack.c.l.b16 %v444
        %v929 = vunpack.c.h.b16 %v444
        %v930 = vunpack.c.l.b16 %v445
        %v931 = vunpack.c.h.b16 %v445
        %v932 = vunpack.c.l.b16 %v446
        %v933 = vunpack.c.h.b16 %v446
        %v934 = vunpack.c.l.b16 %v447
        %v935 = vunpack.c.h.b16 %v447
        %v936 = vunpack.c.l.b16 %v448
        %v937 = vunpack.c.h.b16 %v448
        %v938 = vunpack.c.l.b16 %v449
        %v939 = vunpack.c.h.b16 %v449
        %v940 = vunpack.c.l.b16 %v450
        %v941 = vunpack.c.h.b16 %v450
        %v942 = vunpack.c.l.b16 %v451
        %v943 = vunpack.c.h.b16 %v451
        %v944 = vunpack.c.l.b16 %v452
        %v945 = vunpack.c.h.b16 %v452
        %v946 = vunpack.c.l.b16 %v453
        %v947 = vunpack.c.h.b16 %v453
        %v948 = vunpack.c.l.b16 %v454
        %v949 = vunpack.c.h.b16 %v454
        %v950 = vunpack.c.l.b16 %v455
        %v951 = vunpack.c.h.b16 %v455
        %v952 = vunpack.c.l.b16 %v456
        %v953 = vunpack.c.h.b16 %v456
        %v954 = vunpack.c.l.b16 %v457
        %v955 = vunpack.c.h.b16 %v457
        %v956 = vunpack.c.l.b16 %v458
        %v957 = vunpack.c.h.b16 %v458
        %v958 = vunpack.c.l.b16 %v459
        %v959 = vunpack.c.h.b16 %v459
        %v960 = vunpack.c.l.b16 %v460
        %v961 = vunpack.c.h.b16 %v460
        %v962 = vunpack.c.l.b16 %v461
        %v963 = vunpack.c.h.b16 %v461
        %v964 = vunpack.c.l.b16 %v462
        %v965 = vunpack.c.h.b16 %v462
        %v966 = vunpack.c.l.b16 %v463
        %v967 = vunpack.c.h.b16 %v463
        %v968 = vunpack.c.l.b16 %v464
        %v969 = vunpack.c.h.b16 %v464
        %v970 = vunpack.c.l.b16 %v465
        %v971 = vunpack.c.h.b16 %v465
        %v972 = vunpack.c.l.b16 %v466
        %v973 = vunpack.c.h.b16 %v466
        %v974 = vunpack.c.l.b16 %v467
        %v975 = vunpack.c.h.b16 %v467
        %v976 = vunpack.c.l.b16 %v468
        %v977 = vunpack.c.h.b16 %v468
        %v978 = vunpack.c.l.b16 %v469
        %v979 = vunpack.c.h.b16 %v469
        %v980 = vunpack.c.l.b16 %v470
        %v981 = vunpack.c.h.b16 %v470
        %v982 = vunpack.c.l.b16 %v471
        %v983 = vunpack.c.h.b16 %v471
        %v984 = vunpack.c.l.b16 %v472
        %v985 = vunpack.c.h.b16 %v472
        %v986 = vunpack.c.l.b16 %v473
        %v987 = vunpack.c.h.b16 %v473
        %v988 = vunpack.c.l.b16 %v474
        %v989 = vunpack.c.h.b16 %v474
        %v990 = vunpack.c.l.b16 %v475
        %v991 = vunpack.c.h.b16 %v475
        %v992 = vunpack.c.l.b16 %v476
        %v993 = vunpack.c.h.b16 %v476
        %v994 = vunpack.c.l.b16 %v477
        %v995 = vunpack.c.h.b16 %v477
        %v996 = vunpack.c.l.b16 %v478
        %v997 = vunpack.c.h.b16 %v478
        %v998 = vunpack.c.l.b16 %v479
        %v999 = vunpack.c.h.b16 %v479
        %v1000 = vunpack.c.l.b16 %v480
        %v1001 = vunpack.c.h.b16 %v480
        %v1002 = vunpack.c.l.b16 %v481
        %v1003 = vunpack.c.h.b16 %v481
        %v1004 = vunpack.c.l.b16 %v482
        %v1005 = vunpack.c.h.b16 %v482
        %v1006 = vunpack.c.l.b16 %v483
        %v1007 = vunpack.c.h.b16 %v483
        %v1008 = vunpack.c.l.b16 %v484
        %v1009 = vunpack.c.h.b16 %v484
        %v1010 = vunpack.c.l.b16 %v485
        %v1011 = vunpack.c.h.b16 %v485
        %v1012 = vunpack.c.l.b16 %v486
        %v1013 = vunpack.c.h.b16 %v486
        %v1014 = vunpack.c.l.b16 %v487
        %v1015 = vunpack.c.h.b16 %v487
        %v1016 = vunpack.c.l.b16 %v488
        %v1017 = vunpack.c.h.b16 %v488
        %v1018 = vunpack.c.l.b16 %v489
        %v1019 = vunpack.c.h.b16 %v489
        %v1020 = vunpack.c.l.b16 %v490
        %v1021 = vunpack.c.h.b16 %v490
        %v1022 = vunpack.c.l.b16 %v491
        %v1023 = vunpack.c.h.b16 %v491
        %v1024 = vunpack.c.l.b16 %v492
        %v1025 = vunpack.c.h.b16 %v492
        %v1026 = vunpack.c.l.b16 %v493
        %v1027 = vunpack.c.h.b16 %v493
        %v1028 = vunpack.c.l.b16 %v494
        %v1029 = vunpack.c.h.b16 %v494
        %v1030 = vunpack.c.l.b16 %v495
        %v1031 = vunpack.c.h.b16 %v495
        %v1032 = vunpack.c.l.b16 %v496
        %v1033 = vunpack.c.h.b16 %v496
        %v1034 = vunpack.c.l.b16 %v497
        %v1035 = vunpack.c.h.b16 %v497
        %v1036 = vunpack.c.l.b16 %v498
        %v1037 = vunpack.c.h.b16 %v498
        %v1038 = vunpack.c.l.b16 %v499
        %v1039 = vunpack.c.h.b16 %v499
        %v1040 = vunpack.c.l.b16 %v500
        %v1041 = vunpack.c.h.b16 %v500
        %v1042 = vunpack.c.l.b16 %v501
        %v1043 = vunpack.c.h.b16 %v501
        %v1044 = vunpack.c.l.b16 %v502
        %v1045 = vunpack.c.h.b16 %v502
        %v1046 = vunpack.c.l.b16 %v503
        %v1047 = vunpack.c.h.b16 %v503
        %v1048 = vunpack.c.l.b16 %v504
        %v1049 = vunpack.c.h.b16 %v504
        %v1050 = vunpack.c.l.b16 %v505
        %v1051 = vunpack.c.h.b16 %v505
        %v1052 = vunpack.c.l.b16 %v506
        %v1053 = vunpack.c.h.b16 %v506
        %v1054 = vunpack.c.l.b16 %v507
        %v1055 = vunpack.c.h.b16 %v507
        %v1056 = vunpack.c.l.b16 %v508
        %v1057 = vunpack.c.h.b16 %v508
        %v1058 = vunpack.c.l.b16 %v509
        %v1059 = vunpack.c.h.b16 %v509
        %v1060 = vunpack.c.l.b16 %v510
        %v1061 = vunpack.c.h.b16 %v510
        %v1062 = vunpack.c.l.b16 %v511
        %v1063 = vunpack.c.h.b16 %v511
        %v1064 = vpack.c.b16 %v840, %v808
        %v1065 = vpack.c.b16 %v841, %v809
        %v1066 = vpack.c.b16 %v842, %v810
        %v1067 = vpack.c.b16 %v843, %v811
        %v1068 = vpack.c.b16 %v844, %v812
        %v1069 = vpack.c.b16 %v845, %v813
        %v1070 = vpack.c.b16 %v846, %v814
        %v1071 = vpack.c.b16 %v847, %v815
        %v1072 = vpack.c.b16 %v848, %v816
        %v1073 = vpack.c.b16 %v849, %v817
        %v1074 = vpack.c.b16 %v850, %v818
        %v1075 = vpack.c.b16 %v851, %v819
        %v1076 = vpack.c.b16 %v852, %v820
        %v1077 = vpack.c.b16 %v853, %v821
        %v1078 = vpack.c.b16 %v854, %v822
        %v1079 = vpack.c.b16 %v855, %v823
        %v1080 = vpack.c.b16 %v856, %v824
        %v1081 = vpack.c.b16 %v857, %v825
        %v1082 = vpack.c.b16 %v858, %v826
        %v1083 = vpack.c.b16 %v859, %v827
        %v1084 = vpack.c.b16 %v860, %v828
        %v1085 = vpack.c.b16 %v861, %v829
        %v1086 = vpack.c.b16 %v862, %v830
        %v1087 = vpack.c.b16 %v863, %v831
        %v1088 = vpack.c.b16 %v864, %v832
        %v1089 = vpack.c.b16 %v865, %v833
        %v1090 = vpack.c.b16 %v866, %v834
        %v1091 = vpack.c.b16 %v867, %v835
        %v1092 = vpack.c.b16 %v868, %v836
        %v1093 = vpack.c.b16 %v869, %v837
        %v1094 = vpack.c.b16 %v870, %v838
        %v1095 = vpack.c.b16 %v871, %v839
        %v1096 = vpack.c.b16 %v904, %v872
        %v1097 = vpack.c.b16 %v905, %v873
        %v1098 = vpack.c.b16 %v906, %v874
        %v1099 = vpack.c.b16 %v907, %v875
        %v1100 = vpack.c.b16 %v908, %v876
        %v1101 = vpack.c.b16 %v909, %v877
        %v1102 = vpack.c.b16 %v910, %v878
        %v1103 = vpack.c.b16 %v911, %v879
        %v1104 = vpack.c.b16 %v912, %v880
        %v1105 = vpack.c.b16 %v913, %v881
        %v1106 = vpack.c.b16 %v914, %v882
        %v1107 = vpack.c.b16 %v915, %v883
        %v1108 = vpack.c.b16 %v916, %v884
        %v1109 = vpack.c.b16 %v917, %v885
        %v1110 = vpack.c.b16 %v918, %v886
        %v1111 = vpack.c.b16 %v919, %v887
        %v1112 = vpack.c.b16 %v920, %v888
        %v1113 = vpack.c.b16 %v921, %v889
        %v1114 = vpack.c.b16 %v922, %v890
        %v1115 = vpack.c.b16 %v923, %v891
        %v1116 = vpack.c.b16 %v924, %v892
        %v1117 = vpack.c.b16 %v925, %v893
        %v1118 = vpack.c.b16 %v926, %v894
        %v1119 = vpack.c.b16 %v927, %v895
        %v1120 = vpack.c.b16 %v928, %v896
        %v1121 = vpack.c.b16 %v929, %v897
        %v1122 = vpack.c.b16 %v930, %v898
        %v1123 = vpack.c.b16 %v931, %v899
        %v1124 = vpack.c.b16 %v932, %v900
        %v1125 = vpack.c.b16 %v933, %v901
        %v1126 = vpack.c.b16 %v934, %v902
        %v1127 = vpack.c.b16 %v935, %v903
        %v1128 = vpack.c.b16 %v968, %v936
        %v1129 = vpack.c.b16 %v969, %v937
        %v1130 = vpack.c.b16 %v970, %v938
        %v1131 = vpack.c.b16 %v971, %v939
        %v1132 = vpack.c.b16 %v972, %v940
        %v1133 = vpack.c.b16 %v973, %v941
        %v1134 = vpack.c.b16 %v974, %v942
        %v1135 = vpack.c.b16 %v975, %v943
        %v1136 = vpack.c.b16 %v976, %v944
        %v1137 = vpack.c.b16 %v977, %v945
        %v1138 = vpack.c.b16 %v978, %v946
        %v1139 = vpack.c.b16 %v979, %v947
        %v1140 = vpack.c.b16 %v980, %v948
        %v1141 = vpack.c.b16 %v981, %v949
        %v1142 = vpack.c.b16 %v982, %v950
        %v1143 = vpack.c.b16 %v983, %v951
        %v1144 = vpack.c.b16 %v984, %v952
        %v1145 = vpack.c.b16 %v985, %v953
        %v1146 = vpack.c.b16 %v986, %v954
        %v1147 = vpack.c.b16 %v987, %v955
        %v1148 = vpack.c.b16 %v988, %v956
        %v1149 = vpack.c.b16 %v989, %v957
        %v1150 = vpack.c.b16 %v990, %v958
        %v1151 = vpack.c.b16 %v991, %v959
        %v1152 = vpack.c.b16 %v992, %v960
        %v1153 = vpack.c.b16 %v993, %v961
        %v1154 = vpack.c.b16 %v994, %v962
        %v1155 = vpack.c.b16 %v995, %v963
        %v1156 = vpack.c.b16 %v996, %v964
        %v1157 = vpack.c.b16 %v997, %v965
        %v1158 = vpack.c.b16 %v998, %v966
        %v1159 = vpack.c.b16 %v999, %v967
        %v1160 = vpack.c.b16 %v1032, %v1000
        %v1161 = vpack.c.b16 %v1033, %v1001
        %v1162 = vpack.c.b16 %v1034, %v1002
        %v1163 = vpack.c.b16 %v1035, %v1003
        %v1164 = vpack.c.b16 %v1036, %v1004
        %v1165 = vpack.c.b16 %v1037, %v1005
        %v1166 = vpack.c.b16 %v1038, %v1006
        %v1167 = vpack.c.b16 %v1039, %v1007
        %v1168 = vpack.c.b16 %v1040, %v1008
        %v1169 = vpack.c.b16 %v1041, %v1009
        %v1170 = vpack.c.b16 %v1042, %v1010
        %v1171 = vpack.c.b16 %v1043, %v1011
        %v1172 = vpack.c.b16 %v1044, %v1012
        %v1173 = vpack.c.b16 %v1045, %v1013
        %v1174 = vpack.c.b16 %v1046, %v1014
        %v1175 = vpack.c.b16 %v1047, %v1015
        %v1176 = vpack.c.b16 %v1048, %v1016
        %v1177 = vpack.c.b16 %v1049, %v1017
        %v1178 = vpack.c.b16 %v1050, %v1018
        %v1179 = vpack.c.b16 %v1051, %v1019
        %v1180 = vpack.c.b16 %v1052, %v1020
        %v1181 = vpack.c.b16 %v1053, %v1021
        %v1182 = vpack.c.b16 %v1054, %v1022
        %v1183 = vpack.c.b16 %v1055, %v1023
        %v1184 = vpack.c.b16 %v1056, %v1024
        %v1185 = vpack.c.b16 %v1057, %v1025
        %v1186 = vpack.c.b16 %v1058, %v1026
        %v1187 = vpack.c.b16 %v1059, %v1027
        %v1188 = vpack.c.b16 %v1060, %v1028
        %v1189 = vpack.c.b16 %v1061, %v1029
        %v1190 = vpack.c.b16 %v1062, %v1030
        %v1191 = vpack.c.b16 %v1063, %v1031
        %vm1320 = vcmask 523264
        %v1322 = vsel %vm1320, %v383, 0
        %1324 = vmatprep.subr.bf16.mxu0 %v1065
        %1325 = vmatpush1.bf16.msra.mxu0 %v1064
        %1326 = vmatprep.subr.bf16.mxu0 %v1097
        %1327 = vmatpush1.bf16.msra.mxu0 %v1096
        %1328 = vmatprep.subr.bf16.mxu0 %v1129
        %1329 = vmatpush1.bf16.msra.mxu0 %v1128
        %1330 = vmatprep.subr.bf16.mxu0 %v1161
        %1331 = vmatpush1.bf16.msra.mxu0 %v1160
        %1332 = vmatprep.subr.bf16.mxu0 0
        %1333 = vmatpush1.bf16.msra.mxu0 0
        %1334 = vmatprep.subr.bf16.mxu0 0
        %1335 = vmatpush1.bf16.msra.mxu0 0
        %1336 = vmatprep.subr.bf16.mxu0 0
        %1337 = vmatpush1.bf16.msra.mxu0 0
        %1338 = vmatprep.subr.bf16.mxu0 0
        %1339 = vmatpush1.bf16.msra.mxu0 0
        %1340 = vmatprep.subr.bf16.mxu0 0
        %1341 = vmatpush1.bf16.msra.mxu0 0
        %1342 = vmatprep.subr.bf16.mxu0 0
        %1343 = vmatpush1.bf16.msra.mxu0 0
        %1344 = vmatprep.subr.bf16.mxu0 0
        %1345 = vmatpush1.bf16.msra.mxu0 0
        %1346 = vmatprep.subr.bf16.mxu0 0
        %1347 = vmatpush1.bf16.msra.mxu0 0
        %1348 = vmatprep.subr.bf16.mxu0 0
        %1349 = vmatpush1.bf16.msra.mxu0 0
        %1350 = vmatprep.subr.bf16.mxu0 0
        %1351 = vmatpush1.bf16.msra.mxu0 0
        %1352 = vmatprep.subr.bf16.mxu0 0
        %1353 = vmatpush1.bf16.msra.mxu0 0
        %1354 = vmatprep.subr.bf16.mxu0 0
        %1355 = vmatpush1.bf16.msra.mxu0 0
        %1356 = vmatprep.mubr.bf16.mxu0 0
        %1357 = vmatmul.mubr.bf16.gmra.mrb[0].mxu0 %v1322
        %v1358 = vpop.f32.mrb[0].mxu0
        %v1359 = vadd.f32 %v523, %v1358
        %v1360 = vpop.f32.mrb[0].mxu0
        %v1361 = vadd.f32 %v527, %v1360
        %v1362 = vpop.f32.mrb[0].mxu0
        %v1363 = vpop.f32.mrb[0].mxu0
        %1364 = vdwg.mxu0
        %1365 = vmatprep.subr.bf16.mxu0 %v1067
        %1366 = vmatpush1.bf16.msra.mxu0 %v1066
        %1367 = vmatprep.subr.bf16.mxu0 %v1099
        %1368 = vmatpush1.bf16.msra.mxu0 %v1098
        %1369 = vmatprep.subr.bf16.mxu0 %v1131
        %1370 = vmatpush1.bf16.msra.mxu0 %v1130
        %1371 = vmatprep.subr.bf16.mxu0 %v1163
        %1372 = vmatpush1.bf16.msra.mxu0 %v1162
        %1373 = vmatprep.subr.bf16.mxu0 0
        %1374 = vmatpush1.bf16.msra.mxu0 0
        %1375 = vmatprep.subr.bf16.mxu0 0
        %1376 = vmatpush1.bf16.msra.mxu0 0
        %1377 = vmatprep.subr.bf16.mxu0 0
        %1378 = vmatpush1.bf16.msra.mxu0 0
        %1379 = vmatprep.subr.bf16.mxu0 0
        %1380 = vmatpush1.bf16.msra.mxu0 0
        %1381 = vmatprep.subr.bf16.mxu0 0
        %1382 = vmatpush1.bf16.msra.mxu0 0
        %1383 = vmatprep.subr.bf16.mxu0 0
        %1384 = vmatpush1.bf16.msra.mxu0 0
        %1385 = vmatprep.subr.bf16.mxu0 0
        %1386 = vmatpush1.bf16.msra.mxu0 0
        %1387 = vmatprep.subr.bf16.mxu0 0
        %1388 = vmatpush1.bf16.msra.mxu0 0
        %1389 = vmatprep.subr.bf16.mxu0 0
        %1390 = vmatpush1.bf16.msra.mxu0 0
        %1391 = vmatprep.subr.bf16.mxu0 0
        %1392 = vmatpush1.bf16.msra.mxu0 0
        %1393 = vmatprep.subr.bf16.mxu0 0
        %1394 = vmatpush1.bf16.msra.mxu0 0
        %1395 = vmatprep.subr.bf16.mxu0 0
        %1396 = vmatpush1.bf16.msra.mxu0 0
        %1397 = vmatprep.mubr.bf16.mxu0 0
        %1398 = vmatmul.mubr.bf16.gmra.mrb[0].mxu0 %v1322
        %v1399 = vpop.f32.mrb[0].mxu0
        %v1400 = vadd.f32 %v531, %v1399
        %v1401 = vpop.f32.mrb[0].mxu0
        %v1402 = vadd.f32 %v535, %v1401
        %v1403 = vpop.f32.mrb[0].mxu0
        %v1404 = vpop.f32.mrb[0].mxu0
        %1405 = vdwg.mxu0
        %1406 = vmatprep.subr.bf16.mxu0 %v1069
        %1407 = vmatpush1.bf16.msra.mxu0 %v1068
        %1408 = vmatprep.subr.bf16.mxu0 %v1101
        %1409 = vmatpush1.bf16.msra.mxu0 %v1100
        %1410 = vmatprep.subr.bf16.mxu0 %v1133
        %1411 = vmatpush1.bf16.msra.mxu0 %v1132
        %1412 = vmatprep.subr.bf16.mxu0 %v1165
        %1413 = vmatpush1.bf16.msra.mxu0 %v1164
        %1414 = vmatprep.subr.bf16.mxu0 0
        %1415 = vmatpush1.bf16.msra.mxu0 0
        %1416 = vmatprep.subr.bf16.mxu0 0
        %1417 = vmatpush1.bf16.msra.mxu0 0
        %1418 = vmatprep.subr.bf16.mxu0 0
        %1419 = vmatpush1.bf16.msra.mxu0 0
        %1420 = vmatprep.subr.bf16.mxu0 0
        %1421 = vmatpush1.bf16.msra.mxu0 0
        %1422 = vmatprep.subr.bf16.mxu0 0
        %1423 = vmatpush1.bf16.msra.mxu0 0
        %1424 = vmatprep.subr.bf16.mxu0 0
        %1425 = vmatpush1.bf16.msra.mxu0 0
        %1426 = vmatprep.subr.bf16.mxu0 0
        %1427 = vmatpush1.bf16.msra.mxu0 0
        %1428 = vmatprep.subr.bf16.mxu0 0
        %1429 = vmatpush1.bf16.msra.mxu0 0
        %1430 = vmatprep.subr.bf16.mxu0 0
        %1431 = vmatpush1.bf16.msra.mxu0 0
        %1432 = vmatprep.subr.bf16.mxu0 0
        %1433 = vmatpush1.bf16.msra.mxu0 0
        %1434 = vmatprep.subr.bf16.mxu0 0
        %1435 = vmatpush1.bf16.msra.mxu0 0
        %1436 = vmatprep.subr.bf16.mxu0 0
        %1437 = vmatpush1.bf16.msra.mxu0 0
        %1438 = vmatprep.mubr.bf16.mxu0 0
        %1439 = vmatmul.mubr.bf16.gmra.mrb[0].mxu0 %v1322
        %v1440 = vpop.f32.mrb[0].mxu0
        %v1441 = vadd.f32 %v539, %v1440
        %v1442 = vpop.f32.mrb[0].mxu0
        %v1443 = vadd.f32 %v543, %v1442
        %v1444 = vpop.f32.mrb[0].mxu0
        %v1445 = vpop.f32.mrb[0].mxu0
        %1446 = vdwg.mxu0
        %1447 = vmatprep.subr.bf16.mxu0 %v1071
        %1448 = vmatpush1.bf16.msra.mxu0 %v1070
        %1449 = vmatprep.subr.bf16.mxu0 %v1103
        %1450 = vmatpush1.bf16.msra.mxu0 %v1102
        %1451 = vmatprep.subr.bf16.mxu0 %v1135
        %1452 = vmatpush1.bf16.msra.mxu0 %v1134
        %1453 = vmatprep.subr.bf16.mxu0 %v1167
        %1454 = vmatpush1.bf16.msra.mxu0 %v1166
        %1455 = vmatprep.subr.bf16.mxu0 0
        %1456 = vmatpush1.bf16.msra.mxu0 0
        %1457 = vmatprep.subr.bf16.mxu0 0
        %1458 = vmatpush1.bf16.msra.mxu0 0
        %1459 = vmatprep.subr.bf16.mxu0 0
        %1460 = vmatpush1.bf16.msra.mxu0 0
        %1461 = vmatprep.subr.bf16.mxu0 0
        %1462 = vmatpush1.bf16.msra.mxu0 0
        %1463 = vmatprep.subr.bf16.mxu0 0
        %1464 = vmatpush1.bf16.msra.mxu0 0
        %1465 = vmatprep.subr.bf16.mxu0 0
        %1466 = vmatpush1.bf16.msra.mxu0 0
        %1467 = vmatprep.subr.bf16.mxu0 0
        %1468 = vmatpush1.bf16.msra.mxu0 0
        %1469 = vmatprep.subr.bf16.mxu0 0
        %1470 = vmatpush1.bf16.msra.mxu0 0
        %1471 = vmatprep.subr.bf16.mxu0 0
        %1472 = vmatpush1.bf16.msra.mxu0 0
        %1473 = vmatprep.subr.bf16.mxu0 0
        %1474 = vmatpush1.bf16.msra.mxu0 0
        %1475 = vmatprep.subr.bf16.mxu0 0
        %1476 = vmatpush1.bf16.msra.mxu0 0
        %1477 = vmatprep.subr.bf16.mxu0 0
        %1478 = vmatpush1.bf16.msra.mxu0 0
        %1479 = vmatprep.mubr.bf16.mxu0 0
        %1480 = vmatmul.mubr.bf16.gmra.mrb[0].mxu0 %v1322
        %v1481 = vpop.f32.mrb[0].mxu0
        %v1482 = vadd.f32 %v547, %v1481
        %v1483 = vpop.f32.mrb[0].mxu0
        %v1484 = vadd.f32 %v551, %v1483
        %v1485 = vpop.f32.mrb[0].mxu0
        %v1486 = vpop.f32.mrb[0].mxu0
        %1487 = vdwg.mxu0
        %1488 = vmatprep.subr.bf16.mxu0 %v1073
        %1489 = vmatpush1.bf16.msra.mxu0 %v1072
        %1490 = vmatprep.subr.bf16.mxu0 %v1105
        %1491 = vmatpush1.bf16.msra.mxu0 %v1104
        %1492 = vmatprep.subr.bf16.mxu0 %v1137
        %1493 = vmatpush1.bf16.msra.mxu0 %v1136
        %1494 = vmatprep.subr.bf16.mxu0 %v1169
        %1495 = vmatpush1.bf16.msra.mxu0 %v1168
        %1496 = vmatprep.subr.bf16.mxu0 0
        %1497 = vmatpush1.bf16.msra.mxu0 0
        %1498 = vmatprep.subr.bf16.mxu0 0
        %1499 = vmatpush1.bf16.msra.mxu0 0
        %1500 = vmatprep.subr.bf16.mxu0 0
        %1501 = vmatpush1.bf16.msra.mxu0 0
        %1502 = vmatprep.subr.bf16.mxu0 0
        %1503 = vmatpush1.bf16.msra.mxu0 0
        %1504 = vmatprep.subr.bf16.mxu0 0
        %1505 = vmatpush1.bf16.msra.mxu0 0
        %1506 = vmatprep.subr.bf16.mxu0 0
        %1507 = vmatpush1.bf16.msra.mxu0 0
        %1508 = vmatprep.subr.bf16.mxu0 0
        %1509 = vmatpush1.bf16.msra.mxu0 0
        %1510 = vmatprep.subr.bf16.mxu0 0
        %1511 = vmatpush1.bf16.msra.mxu0 0
        %1512 = vmatprep.subr.bf16.mxu0 0
        %1513 = vmatpush1.bf16.msra.mxu0 0
        %1514 = vmatprep.subr.bf16.mxu0 0
        %1515 = vmatpush1.bf16.msra.mxu0 0
        %1516 = vmatprep.subr.bf16.mxu0 0
        %1517 = vmatpush1.bf16.msra.mxu0 0
        %1518 = vmatprep.subr.bf16.mxu0 0
        %1519 = vmatpush1.bf16.msra.mxu0 0
        %1520 = vmatprep.mubr.bf16.mxu0 0
        %1521 = vmatmul.mubr.bf16.gmra.mrb[0].mxu0 %v1322
        %v1522 = vpop.f32.mrb[0].mxu0
        %v1523 = vadd.f32 %v555, %v1522
        %v1524 = vpop.f32.mrb[0].mxu0
        %v1525 = vadd.f32 %v559, %v1524
        %v1526 = vpop.f32.mrb[0].mxu0
        %v1527 = vpop.f32.mrb[0].mxu0
        %1528 = vdwg.mxu0
        %1529 = vmatprep.subr.bf16.mxu0 %v1075
        %1530 = vmatpush1.bf16.msra.mxu0 %v1074
        %1531 = vmatprep.subr.bf16.mxu0 %v1107
        %1532 = vmatpush1.bf16.msra.mxu0 %v1106
        %1533 = vmatprep.subr.bf16.mxu0 %v1139
        %1534 = vmatpush1.bf16.msra.mxu0 %v1138
        %1535 = vmatprep.subr.bf16.mxu0 %v1171
        %1536 = vmatpush1.bf16.msra.mxu0 %v1170
        %1537 = vmatprep.subr.bf16.mxu0 0
        %1538 = vmatpush1.bf16.msra.mxu0 0
        %1539 = vmatprep.subr.bf16.mxu0 0
        %1540 = vmatpush1.bf16.msra.mxu0 0
        %1541 = vmatprep.subr.bf16.mxu0 0
        %1542 = vmatpush1.bf16.msra.mxu0 0
        %1543 = vmatprep.subr.bf16.mxu0 0
        %1544 = vmatpush1.bf16.msra.mxu0 0
        %1545 = vmatprep.subr.bf16.mxu0 0
        %1546 = vmatpush1.bf16.msra.mxu0 0
        %1547 = vmatprep.subr.bf16.mxu0 0
        %1548 = vmatpush1.bf16.msra.mxu0 0
        %1549 = vmatprep.subr.bf16.mxu0 0
        %1550 = vmatpush1.bf16.msra.mxu0 0
        %1551 = vmatprep.subr.bf16.mxu0 0
        %1552 = vmatpush1.bf16.msra.mxu0 0
        %1553 = vmatprep.subr.bf16.mxu0 0
        %1554 = vmatpush1.bf16.msra.mxu0 0
        %1555 = vmatprep.subr.bf16.mxu0 0
        %1556 = vmatpush1.bf16.msra.mxu0 0
        %1557 = vmatprep.subr.bf16.mxu0 0
        %1558 = vmatpush1.bf16.msra.mxu0 0
        %1559 = vmatprep.subr.bf16.mxu0 0
        %1560 = vmatpush1.bf16.msra.mxu0 0
        %1561 = vmatprep.mubr.bf16.mxu0 0
        %1562 = vmatmul.mubr.bf16.gmra.mrb[0].mxu0 %v1322
        %v1563 = vpop.f32.mrb[0].mxu0
        %v1564 = vadd.f32 %v563, %v1563
        %v1565 = vpop.f32.mrb[0].mxu0
        %v1566 = vadd.f32 %v567, %v1565
        %v1567 = vpop.f32.mrb[0].mxu0
        %v1568 = vpop.f32.mrb[0].mxu0
        %1569 = vdwg.mxu0
        %1570 = vmatprep.subr.bf16.mxu0 %v1077
        %1571 = vmatpush1.bf16.msra.mxu0 %v1076
        %1572 = vmatprep.subr.bf16.mxu0 %v1109
        %1573 = vmatpush1.bf16.msra.mxu0 %v1108
        %1574 = vmatprep.subr.bf16.mxu0 %v1141
        %1575 = vmatpush1.bf16.msra.mxu0 %v1140
        %1576 = vmatprep.subr.bf16.mxu0 %v1173
        %1577 = vmatpush1.bf16.msra.mxu0 %v1172
        %1578 = vmatprep.subr.bf16.mxu0 0
        %1579 = vmatpush1.bf16.msra.mxu0 0
        %1580 = vmatprep.subr.bf16.mxu0 0
        %1581 = vmatpush1.bf16.msra.mxu0 0
        %1582 = vmatprep.subr.bf16.mxu0 0
        %1583 = vmatpush1.bf16.msra.mxu0 0
        %1584 = vmatprep.subr.bf16.mxu0 0
        %1585 = vmatpush1.bf16.msra.mxu0 0
        %1586 = vmatprep.subr.bf16.mxu0 0
        %1587 = vmatpush1.bf16.msra.mxu0 0
        %1588 = vmatprep.subr.bf16.mxu0 0
        %1589 = vmatpush1.bf16.msra.mxu0 0
        %1590 = vmatprep.subr.bf16.mxu0 0
        %1591 = vmatpush1.bf16.msra.mxu0 0
        %1592 = vmatprep.subr.bf16.mxu0 0
        %1593 = vmatpush1.bf16.msra.mxu0 0
        %1594 = vmatprep.subr.bf16.mxu0 0
        %1595 = vmatpush1.bf16.msra.mxu0 0
        %1596 = vmatprep.subr.bf16.mxu0 0
        %1597 = vmatpush1.bf16.msra.mxu0 0
        %1598 = vmatprep.subr.bf16.mxu0 0
        %1599 = vmatpush1.bf16.msra.mxu0 0
        %1600 = vmatprep.subr.bf16.mxu0 0
        %1601 = vmatpush1.bf16.msra.mxu0 0
        %1602 = vmatprep.mubr.bf16.mxu0 0
        %1603 = vmatmul.mubr.bf16.gmra.mrb[0].mxu0 %v1322
        %v1604 = vpop.f32.mrb[0].mxu0
        %v1605 = vadd.f32 %v571, %v1604
        %v1606 = vpop.f32.mrb[0].mxu0
        %v1607 = vadd.f32 %v575, %v1606
        %v1608 = vpop.f32.mrb[0].mxu0
        %v1609 = vpop.f32.mrb[0].mxu0
        %1610 = vdwg.mxu0
        %1611 = vmatprep.subr.bf16.mxu0 %v1079
        %1612 = vmatpush1.bf16.msra.mxu0 %v1078
        %1613 = vmatprep.subr.bf16.mxu0 %v1111
        %1614 = vmatpush1.bf16.msra.mxu0 %v1110
        %1615 = vmatprep.subr.bf16.mxu0 %v1143
        %1616 = vmatpush1.bf16.msra.mxu0 %v1142
        %1617 = vmatprep.subr.bf16.mxu0 %v1175
        %1618 = vmatpush1.bf16.msra.mxu0 %v1174
        %1619 = vmatprep.subr.bf16.mxu0 0
        %1620 = vmatpush1.bf16.msra.mxu0 0
        %1621 = vmatprep.subr.bf16.mxu0 0
        %1622 = vmatpush1.bf16.msra.mxu0 0
        %1623 = vmatprep.subr.bf16.mxu0 0
        %1624 = vmatpush1.bf16.msra.mxu0 0
        %1625 = vmatprep.subr.bf16.mxu0 0
        %1626 = vmatpush1.bf16.msra.mxu0 0
        %1627 = vmatprep.subr.bf16.mxu0 0
        %1628 = vmatpush1.bf16.msra.mxu0 0
        %1629 = vmatprep.subr.bf16.mxu0 0
        %1630 = vmatpush1.bf16.msra.mxu0 0
        %1631 = vmatprep.subr.bf16.mxu0 0
        %1632 = vmatpush1.bf16.msra.mxu0 0
        %1633 = vmatprep.subr.bf16.mxu0 0
        %1634 = vmatpush1.bf16.msra.mxu0 0
        %1635 = vmatprep.subr.bf16.mxu0 0
        %1636 = vmatpush1.bf16.msra.mxu0 0
        %1637 = vmatprep.subr.bf16.mxu0 0
        %1638 = vmatpush1.bf16.msra.mxu0 0
        %1639 = vmatprep.subr.bf16.mxu0 0
        %1640 = vmatpush1.bf16.msra.mxu0 0
        %1641 = vmatprep.subr.bf16.mxu0 0
        %1642 = vmatpush1.bf16.msra.mxu0 0
        %1643 = vmatprep.mubr.bf16.mxu0 0
        %1644 = vmatmul.mubr.bf16.gmra.mrb[0].mxu0 %v1322
        %v1645 = vpop.f32.mrb[0].mxu0
        %v1646 = vadd.f32 %v579, %v1645
        %v1647 = vpop.f32.mrb[0].mxu0
        %v1648 = vadd.f32 %v583, %v1647
        %v1649 = vpop.f32.mrb[0].mxu0
        %v1650 = vpop.f32.mrb[0].mxu0
        %1651 = vdwg.mxu0
        %1652 = vmatprep.subr.bf16.mxu0 %v1081
        %1653 = vmatpush1.bf16.msra.mxu0 %v1080
        %1654 = vmatprep.subr.bf16.mxu0 %v1113
        %1655 = vmatpush1.bf16.msra.mxu0 %v1112
        %1656 = vmatprep.subr.bf16.mxu0 %v1145
        %1657 = vmatpush1.bf16.msra.mxu0 %v1144
        %1658 = vmatprep.subr.bf16.mxu0 %v1177
        %1659 = vmatpush1.bf16.msra.mxu0 %v1176
        %1660 = vmatprep.subr.bf16.mxu0 0
        %1661 = vmatpush1.bf16.msra.mxu0 0
        %1662 = vmatprep.subr.bf16.mxu0 0
        %1663 = vmatpush1.bf16.msra.mxu0 0
        %1664 = vmatprep.subr.bf16.mxu0 0
        %1665 = vmatpush1.bf16.msra.mxu0 0
        %1666 = vmatprep.subr.bf16.mxu0 0
        %1667 = vmatpush1.bf16.msra.mxu0 0
        %1668 = vmatprep.subr.bf16.mxu0 0
        %1669 = vmatpush1.bf16.msra.mxu0 0
        %1670 = vmatprep.subr.bf16.mxu0 0
        %1671 = vmatpush1.bf16.msra.mxu0 0
        %1672 = vmatprep.subr.bf16.mxu0 0
        %1673 = vmatpush1.bf16.msra.mxu0 0
        %1674 = vmatprep.subr.bf16.mxu0 0
        %1675 = vmatpush1.bf16.msra.mxu0 0
        %1676 = vmatprep.subr.bf16.mxu0 0
        %1677 = vmatpush1.bf16.msra.mxu0 0
        %1678 = vmatprep.subr.bf16.mxu0 0
        %1679 = vmatpush1.bf16.msra.mxu0 0
        %1680 = vmatprep.subr.bf16.mxu0 0
        %1681 = vmatpush1.bf16.msra.mxu0 0
        %1682 = vmatprep.subr.bf16.mxu0 0
        %1683 = vmatpush1.bf16.msra.mxu0 0
        %1684 = vmatprep.mubr.bf16.mxu0 0
        %1685 = vmatmul.mubr.bf16.gmra.mrb[0].mxu0 %v1322
        %v1686 = vpop.f32.mrb[0].mxu0
        %v1687 = vadd.f32 %v587, %v1686
        %v1688 = vpop.f32.mrb[0].mxu0
        %v1689 = vadd.f32 %v591, %v1688
        %v1690 = vpop.f32.mrb[0].mxu0
        %v1691 = vpop.f32.mrb[0].mxu0
        %1692 = vdwg.mxu0
        %1693 = vmatprep.subr.bf16.mxu0 %v1083
        %1694 = vmatpush1.bf16.msra.mxu0 %v1082
        %1695 = vmatprep.subr.bf16.mxu0 %v1115
        %1696 = vmatpush1.bf16.msra.mxu0 %v1114
        %1697 = vmatprep.subr.bf16.mxu0 %v1147
        %1698 = vmatpush1.bf16.msra.mxu0 %v1146
        %1699 = vmatprep.subr.bf16.mxu0 %v1179
        %1700 = vmatpush1.bf16.msra.mxu0 %v1178
        %1701 = vmatprep.subr.bf16.mxu0 0
        %1702 = vmatpush1.bf16.msra.mxu0 0
        %1703 = vmatprep.subr.bf16.mxu0 0
        %1704 = vmatpush1.bf16.msra.mxu0 0
        %1705 = vmatprep.subr.bf16.mxu0 0
        %1706 = vmatpush1.bf16.msra.mxu0 0
        %1707 = vmatprep.subr.bf16.mxu0 0
        %1708 = vmatpush1.bf16.msra.mxu0 0
        %1709 = vmatprep.subr.bf16.mxu0 0
        %1710 = vmatpush1.bf16.msra.mxu0 0
        %1711 = vmatprep.subr.bf16.mxu0 0
        %1712 = vmatpush1.bf16.msra.mxu0 0
        %1713 = vmatprep.subr.bf16.mxu0 0
        %1714 = vmatpush1.bf16.msra.mxu0 0
        %1715 = vmatprep.subr.bf16.mxu0 0
        %1716 = vmatpush1.bf16.msra.mxu0 0
        %1717 = vmatprep.subr.bf16.mxu0 0
        %1718 = vmatpush1.bf16.msra.mxu0 0
        %1719 = vmatprep.subr.bf16.mxu0 0
        %1720 = vmatpush1.bf16.msra.mxu0 0
        %1721 = vmatprep.subr.bf16.mxu0 0
        %1722 = vmatpush1.bf16.msra.mxu0 0
        %1723 = vmatprep.subr.bf16.mxu0 0
        %1724 = vmatpush1.bf16.msra.mxu0 0
        %1725 = vmatprep.mubr.bf16.mxu0 0
        %1726 = vmatmul.mubr.bf16.gmra.mrb[0].mxu0 %v1322
        %v1727 = vpop.f32.mrb[0].mxu0
        %v1728 = vadd.f32 %v595, %v1727
        %v1729 = vpop.f32.mrb[0].mxu0
        %v1730 = vadd.f32 %v599, %v1729
        %v1731 = vpop.f32.mrb[0].mxu0
        %v1732 = vpop.f32.mrb[0].mxu0
        %1733 = vdwg.mxu0
        %1734 = vmatprep.subr.bf16.mxu0 %v1085
        %1735 = vmatpush1.bf16.msra.mxu0 %v1084
        %1736 = vmatprep.subr.bf16.mxu0 %v1117
        %1737 = vmatpush1.bf16.msra.mxu0 %v1116
        %1738 = vmatprep.subr.bf16.mxu0 %v1149
        %1739 = vmatpush1.bf16.msra.mxu0 %v1148
        %1740 = vmatprep.subr.bf16.mxu0 %v1181
        %1741 = vmatpush1.bf16.msra.mxu0 %v1180
        %1742 = vmatprep.subr.bf16.mxu0 0
        %1743 = vmatpush1.bf16.msra.mxu0 0
        %1744 = vmatprep.subr.bf16.mxu0 0
        %1745 = vmatpush1.bf16.msra.mxu0 0
        %1746 = vmatprep.subr.bf16.mxu0 0
        %1747 = vmatpush1.bf16.msra.mxu0 0
        %1748 = vmatprep.subr.bf16.mxu0 0
        %1749 = vmatpush1.bf16.msra.mxu0 0
        %1750 = vmatprep.subr.bf16.mxu0 0
        %1751 = vmatpush1.bf16.msra.mxu0 0
        %1752 = vmatprep.subr.bf16.mxu0 0
        %1753 = vmatpush1.bf16.msra.mxu0 0
        %1754 = vmatprep.subr.bf16.mxu0 0
        %1755 = vmatpush1.bf16.msra.mxu0 0
        %1756 = vmatprep.subr.bf16.mxu0 0
        %1757 = vmatpush1.bf16.msra.mxu0 0
        %1758 = vmatprep.subr.bf16.mxu0 0
        %1759 = vmatpush1.bf16.msra.mxu0 0
        %1760 = vmatprep.subr.bf16.mxu0 0
        %1761 = vmatpush1.bf16.msra.mxu0 0
        %1762 = vmatprep.subr.bf16.mxu0 0
        %1763 = vmatpush1.bf16.msra.mxu0 0
        %1764 = vmatprep.subr.bf16.mxu0 0
        %1765 = vmatpush1.bf16.msra.mxu0 0
        %1766 = vmatprep.mubr.bf16.mxu0 0
        %1767 = vmatmul.mubr.bf16.gmra.mrb[0].mxu0 %v1322
        %v1768 = vpop.f32.mrb[0].mxu0
        %v1769 = vadd.f32 %v603, %v1768
        %v1770 = vpop.f32.mrb[0].mxu0
        %v1771 = vadd.f32 %v607, %v1770
        %v1772 = vpop.f32.mrb[0].mxu0
        %v1773 = vpop.f32.mrb[0].mxu0
        %1774 = vdwg.mxu0
        %1775 = vmatprep.subr.bf16.mxu0 %v1087
        %1776 = vmatpush1.bf16.msra.mxu0 %v1086
        %1777 = vmatprep.subr.bf16.mxu0 %v1119
        %1778 = vmatpush1.bf16.msra.mxu0 %v1118
        %1779 = vmatprep.subr.bf16.mxu0 %v1151
        %1780 = vmatpush1.bf16.msra.mxu0 %v1150
        %1781 = vmatprep.subr.bf16.mxu0 %v1183
        %1782 = vmatpush1.bf16.msra.mxu0 %v1182
        %1783 = vmatprep.subr.bf16.mxu0 0
        %1784 = vmatpush1.bf16.msra.mxu0 0
        %1785 = vmatprep.subr.bf16.mxu0 0
        %1786 = vmatpush1.bf16.msra.mxu0 0
        %1787 = vmatprep.subr.bf16.mxu0 0
        %1788 = vmatpush1.bf16.msra.mxu0 0
        %1789 = vmatprep.subr.bf16.mxu0 0
        %1790 = vmatpush1.bf16.msra.mxu0 0
        %1791 = vmatprep.subr.bf16.mxu0 0
        %1792 = vmatpush1.bf16.msra.mxu0 0
        %1793 = vmatprep.subr.bf16.mxu0 0
        %1794 = vmatpush1.bf16.msra.mxu0 0
        %1795 = vmatprep.subr.bf16.mxu0 0
        %1796 = vmatpush1.bf16.msra.mxu0 0
        %1797 = vmatprep.subr.bf16.mxu0 0
        %1798 = vmatpush1.bf16.msra.mxu0 0
        %1799 = vmatprep.subr.bf16.mxu0 0
        %1800 = vmatpush1.bf16.msra.mxu0 0
        %1801 = vmatprep.subr.bf16.mxu0 0
        %1802 = vmatpush1.bf16.msra.mxu0 0
        %1803 = vmatprep.subr.bf16.mxu0 0
        %1804 = vmatpush1.bf16.msra.mxu0 0
        %1805 = vmatprep.subr.bf16.mxu0 0
        %1806 = vmatpush1.bf16.msra.mxu0 0
        %1807 = vmatprep.mubr.bf16.mxu0 0
        %1808 = vmatmul.mubr.bf16.gmra.mrb[0].mxu0 %v1322
        %v1809 = vpop.f32.mrb[0].mxu0
        %v1810 = vadd.f32 %v611, %v1809
        %v1811 = vpop.f32.mrb[0].mxu0
        %v1812 = vadd.f32 %v615, %v1811
        %v1813 = vpop.f32.mrb[0].mxu0
        %v1814 = vpop.f32.mrb[0].mxu0
        %1815 = vdwg.mxu0
        %1816 = vmatprep.subr.bf16.mxu0 %v1089
        %1817 = vmatpush1.bf16.msra.mxu0 %v1088
        %1818 = vmatprep.subr.bf16.mxu0 %v1121
        %1819 = vmatpush1.bf16.msra.mxu0 %v1120
        %1820 = vmatprep.subr.bf16.mxu0 %v1153
        %1821 = vmatpush1.bf16.msra.mxu0 %v1152
        %1822 = vmatprep.subr.bf16.mxu0 %v1185
        %1823 = vmatpush1.bf16.msra.mxu0 %v1184
        %1824 = vmatprep.subr.bf16.mxu0 0
        %1825 = vmatpush1.bf16.msra.mxu0 0
        %1826 = vmatprep.subr.bf16.mxu0 0
        %1827 = vmatpush1.bf16.msra.mxu0 0
        %1828 = vmatprep.subr.bf16.mxu0 0
        %1829 = vmatpush1.bf16.msra.mxu0 0
        %1830 = vmatprep.subr.bf16.mxu0 0
        %1831 = vmatpush1.bf16.msra.mxu0 0
        %1832 = vmatprep.subr.bf16.mxu0 0
        %1833 = vmatpush1.bf16.msra.mxu0 0
        %1834 = vmatprep.subr.bf16.mxu0 0
        %1835 = vmatpush1.bf16.msra.mxu0 0
        %1836 = vmatprep.subr.bf16.mxu0 0
        %1837 = vmatpush1.bf16.msra.mxu0 0
        %1838 = vmatprep.subr.bf16.mxu0 0
        %1839 = vmatpush1.bf16.msra.mxu0 0
        %1840 = vmatprep.subr.bf16.mxu0 0
        %1841 = vmatpush1.bf16.msra.mxu0 0
        %1842 = vmatprep.subr.bf16.mxu0 0
        %1843 = vmatpush1.bf16.msra.mxu0 0
        %1844 = vmatprep.subr.bf16.mxu0 0
        %1845 = vmatpush1.bf16.msra.mxu0 0
        %1846 = vmatprep.subr.bf16.mxu0 0
        %1847 = vmatpush1.bf16.msra.mxu0 0
        %1848 = vmatprep.mubr.bf16.mxu0 0
        %1849 = vmatmul.mubr.bf16.gmra.mrb[0].mxu0 %v1322
        %v1850 = vpop.f32.mrb[0].mxu0
        %v1851 = vadd.f32 %v619, %v1850
        %v1852 = vpop.f32.mrb[0].mxu0
        %v1853 = vadd.f32 %v623, %v1852
        %v1854 = vpop.f32.mrb[0].mxu0
        %v1855 = vpop.f32.mrb[0].mxu0
        %1856 = vdwg.mxu0
        %1857 = vmatprep.subr.bf16.mxu0 %v1091
        %1858 = vmatpush1.bf16.msra.mxu0 %v1090
        %1859 = vmatprep.subr.bf16.mxu0 %v1123
        %1860 = vmatpush1.bf16.msra.mxu0 %v1122
        %1861 = vmatprep.subr.bf16.mxu0 %v1155
        %1862 = vmatpush1.bf16.msra.mxu0 %v1154
        %1863 = vmatprep.subr.bf16.mxu0 %v1187
        %1864 = vmatpush1.bf16.msra.mxu0 %v1186
        %1865 = vmatprep.subr.bf16.mxu0 0
        %1866 = vmatpush1.bf16.msra.mxu0 0
        %1867 = vmatprep.subr.bf16.mxu0 0
        %1868 = vmatpush1.bf16.msra.mxu0 0
        %1869 = vmatprep.subr.bf16.mxu0 0
        %1870 = vmatpush1.bf16.msra.mxu0 0
        %1871 = vmatprep.subr.bf16.mxu0 0
        %1872 = vmatpush1.bf16.msra.mxu0 0
        %1873 = vmatprep.subr.bf16.mxu0 0
        %1874 = vmatpush1.bf16.msra.mxu0 0
        %1875 = vmatprep.subr.bf16.mxu0 0
        %1876 = vmatpush1.bf16.msra.mxu0 0
        %1877 = vmatprep.subr.bf16.mxu0 0
        %1878 = vmatpush1.bf16.msra.mxu0 0
        %1879 = vmatprep.subr.bf16.mxu0 0
        %1880 = vmatpush1.bf16.msra.mxu0 0
        %1881 = vmatprep.subr.bf16.mxu0 0
        %1882 = vmatpush1.bf16.msra.mxu0 0
        %1883 = vmatprep.subr.bf16.mxu0 0
        %1884 = vmatpush1.bf16.msra.mxu0 0
        %1885 = vmatprep.subr.bf16.mxu0 0
        %1886 = vmatpush1.bf16.msra.mxu0 0
        %1887 = vmatprep.subr.bf16.mxu0 0
        %1888 = vmatpush1.bf16.msra.mxu0 0
        %1889 = vmatprep.mubr.bf16.mxu0 0
        %1890 = vmatmul.mubr.bf16.gmra.mrb[0].mxu0 %v1322
        %v1891 = vpop.f32.mrb[0].mxu0
        %v1892 = vadd.f32 %v627, %v1891
        %v1893 = vpop.f32.mrb[0].mxu0
        %v1894 = vadd.f32 %v631, %v1893
        %v1895 = vpop.f32.mrb[0].mxu0
        %v1896 = vpop.f32.mrb[0].mxu0
        %1897 = vdwg.mxu0
        %1898 = vmatprep.subr.bf16.mxu0 %v1093
        %1899 = vmatpush1.bf16.msra.mxu0 %v1092
        %1900 = vmatprep.subr.bf16.mxu0 %v1125
        %1901 = vmatpush1.bf16.msra.mxu0 %v1124
        %1902 = vmatprep.subr.bf16.mxu0 %v1157
        %1903 = vmatpush1.bf16.msra.mxu0 %v1156
        %1904 = vmatprep.subr.bf16.mxu0 %v1189
        %1905 = vmatpush1.bf16.msra.mxu0 %v1188
        %1906 = vmatprep.subr.bf16.mxu0 0
        %1907 = vmatpush1.bf16.msra.mxu0 0
        %1908 = vmatprep.subr.bf16.mxu0 0
        %1909 = vmatpush1.bf16.msra.mxu0 0
        %1910 = vmatprep.subr.bf16.mxu0 0
        %1911 = vmatpush1.bf16.msra.mxu0 0
        %1912 = vmatprep.subr.bf16.mxu0 0
        %1913 = vmatpush1.bf16.msra.mxu0 0
        %1914 = vmatprep.subr.bf16.mxu0 0
        %1915 = vmatpush1.bf16.msra.mxu0 0
        %1916 = vmatprep.subr.bf16.mxu0 0
        %1917 = vmatpush1.bf16.msra.mxu0 0
        %1918 = vmatprep.subr.bf16.mxu0 0
        %1919 = vmatpush1.bf16.msra.mxu0 0
        %1920 = vmatprep.subr.bf16.mxu0 0
        %1921 = vmatpush1.bf16.msra.mxu0 0
        %1922 = vmatprep.subr.bf16.mxu0 0
        %1923 = vmatpush1.bf16.msra.mxu0 0
        %1924 = vmatprep.subr.bf16.mxu0 0
        %1925 = vmatpush1.bf16.msra.mxu0 0
        %1926 = vmatprep.subr.bf16.mxu0 0
        %1927 = vmatpush1.bf16.msra.mxu0 0
        %1928 = vmatprep.subr.bf16.mxu0 0
        %1929 = vmatpush1.bf16.msra.mxu0 0
        %1930 = vmatprep.mubr.bf16.mxu0 0
        %1931 = vmatmul.mubr.bf16.gmra.mrb[0].mxu0 %v1322
        %v1932 = vpop.f32.mrb[0].mxu0
        %v1933 = vadd.f32 %v635, %v1932
        %v1934 = vpop.f32.mrb[0].mxu0
        %v1935 = vadd.f32 %v639, %v1934
        %v1936 = vpop.f32.mrb[0].mxu0
        %v1937 = vpop.f32.mrb[0].mxu0
        %1938 = vdwg.mxu0
        %1939 = vmatprep.subr.bf16.mxu0 %v1095
        %1940 = vmatpush1.bf16.msra.mxu0 %v1094
        %1941 = vmatprep.subr.bf16.mxu0 %v1127
        %1942 = vmatpush1.bf16.msra.mxu0 %v1126
        %1943 = vmatprep.subr.bf16.mxu0 %v1159
        %1944 = vmatpush1.bf16.msra.mxu0 %v1158
        %1945 = vmatprep.subr.bf16.mxu0 %v1191
        %1946 = vmatpush1.bf16.msra.mxu0 %v1190
        %1947 = vmatprep.subr.bf16.mxu0 0
        %1948 = vmatpush1.bf16.msra.mxu0 0
        %1949 = vmatprep.subr.bf16.mxu0 0
        %1950 = vmatpush1.bf16.msra.mxu0 0
        %1951 = vmatprep.subr.bf16.mxu0 0
        %1952 = vmatpush1.bf16.msra.mxu0 0
        %1953 = vmatprep.subr.bf16.mxu0 0
        %1954 = vmatpush1.bf16.msra.mxu0 0
        %1955 = vmatprep.subr.bf16.mxu0 0
        %1956 = vmatpush1.bf16.msra.mxu0 0
        %1957 = vmatprep.subr.bf16.mxu0 0
        %1958 = vmatpush1.bf16.msra.mxu0 0
        %1959 = vmatprep.subr.bf16.mxu0 0
        %1960 = vmatpush1.bf16.msra.mxu0 0
        %1961 = vmatprep.subr.bf16.mxu0 0
        %1962 = vmatpush1.bf16.msra.mxu0 0
        %1963 = vmatprep.subr.bf16.mxu0 0
        %1964 = vmatpush1.bf16.msra.mxu0 0
        %1965 = vmatprep.subr.bf16.mxu0 0
        %1966 = vmatpush1.bf16.msra.mxu0 0
        %1967 = vmatprep.subr.bf16.mxu0 0
        %1968 = vmatpush1.bf16.msra.mxu0 0
        %1969 = vmatprep.subr.bf16.mxu0 0
        %1970 = vmatpush1.bf16.msra.mxu0 0
        %1971 = vmatprep.mubr.bf16.mxu0 0
        %1972 = vmatmul.mubr.bf16.gmra.mrb[0].mxu0 %v1322
        %v1973 = vpop.f32.mrb[0].mxu0
        %v1974 = vadd.f32 %v643, %v1973
        %v1975 = vpop.f32.mrb[0].mxu0
        %v1976 = vadd.f32 %v647, %v1975
        %v1977 = vpop.f32.mrb[0].mxu0
        %v1978 = vpop.f32.mrb[0].mxu0
        %1979 = vdwg.mxu0
        %v1980 = vpack.c.bf16 %v1359, %v1359
        %v1981 = vpack.c.bf16 %v1361, %v1361
        %v1982 = vpack.c.bf16 %v1400, %v1400
        %v1983 = vpack.c.bf16 %v1402, %v1402
        %v1984 = vpack.c.bf16 %v1441, %v1441
        %v1985 = vpack.c.bf16 %v1443, %v1443
        %v1986 = vpack.c.bf16 %v1482, %v1482
        %v1987 = vpack.c.bf16 %v1484, %v1484
        %v1988 = vpack.c.bf16 %v1523, %v1523
        %v1989 = vpack.c.bf16 %v1525, %v1525
        %v1990 = vpack.c.bf16 %v1564, %v1564
        %v1991 = vpack.c.bf16 %v1566, %v1566
        %v1992 = vpack.c.bf16 %v1605, %v1605
        %v1993 = vpack.c.bf16 %v1607, %v1607
        %v1994 = vpack.c.bf16 %v1646, %v1646
        %v1995 = vpack.c.bf16 %v1648, %v1648
        %v1996 = vpack.c.bf16 %v1687, %v1687
        %v1997 = vpack.c.bf16 %v1689, %v1689
        %v1998 = vpack.c.bf16 %v1728, %v1728
        %v1999 = vpack.c.bf16 %v1730, %v1730
        %v2000 = vpack.c.bf16 %v1769, %v1769
        %v2001 = vpack.c.bf16 %v1771, %v1771
        %v2002 = vpack.c.bf16 %v1810, %v1810
        %v2003 = vpack.c.bf16 %v1812, %v1812
        %v2004 = vpack.c.bf16 %v1851, %v1851
        %v2005 = vpack.c.bf16 %v1853, %v1853
        %v2006 = vpack.c.bf16 %v1892, %v1892
        %v2007 = vpack.c.bf16 %v1894, %v1894
        %v2008 = vpack.c.bf16 %v1933, %v1933
        %v2009 = vpack.c.bf16 %v1935, %v1935
        %v2010 = vpack.c.bf16 %v1974, %v1974
        %v2011 = vpack.c.bf16 %v1976, %v1976
        %v2044 = vcombine.low %v1980, %v1981
        %v2045 = vcombine.low %v1982, %v1983
        %v2046 = vcombine.low %v1984, %v1985
        %v2047 = vcombine.low %v1986, %v1987
        %v2049 = vunpack.c.l.s4 1966171168
        %v2050 = vunpack.c.0.s8 %v2049
        %v2051 = vlaneseq
        %v2052 = vshrl.u32 %v2051, 7
        %v2053 = vsub.s32 %v2050, %v2052
        %v2054 = vrot.slane %v2044, %v2053
        %v2056 = vunpack.c.l.s4 1966171168
        %v2057 = vunpack.c.0.s8 %v2056
        %v2058 = vlaneseq
        %v2059 = vshrl.u32 %v2058, 7
        %v2060 = vsub.s32 %v2057, %v2059
        %v2061 = vrot.slane %v2045, %v2060
        %v2063 = vunpack.c.l.s4 1966171168
        %v2064 = vunpack.c.0.s8 %v2063
        %v2065 = vlaneseq
        %v2066 = vshrl.u32 %v2065, 7
        %v2067 = vsub.s32 %v2064, %v2066
        %v2068 = vrot.slane %v2046, %v2067
        %v2070 = vunpack.c.l.s4 1966171168
        %v2071 = vunpack.c.0.s8 %v2070
        %v2072 = vlaneseq
        %v2073 = vshrl.u32 %v2072, 7
        %v2074 = vsub.s32 %v2071, %v2073
        %v2075 = vrot.slane %v2047, %v2074
        %v2076 = vcombine.low %v2054, %v2061
        %v2077 = vcombine.low %v2068, %v2075
        %v2079 = vunpack.c.l.s4 1966171168
        %v2080 = vunpack.c.0.s8 %v2079
        %v2081 = vlaneseq
        %v2082 = vshrl.u32 %v2081, 7
        %v2083 = vsub.s32 %v2080, %v2082
        %v2084 = vrot.slane %v2076, %v2083
        %v2086 = vunpack.c.l.s4 1966171168
        %v2087 = vunpack.c.0.s8 %v2086
        %v2088 = vlaneseq
        %v2089 = vshrl.u32 %v2088, 7
        %v2090 = vsub.s32 %v2087, %v2089
        %v2091 = vrot.slane %v2077, %v2090
        %v2092 = vcombine.low %v2084, %v2091
        %v2093 = vcombine.low %v1988, %v1989
        %v2094 = vcombine.low %v1990, %v1991
        %v2095 = vcombine.low %v1992, %v1993
        %v2096 = vcombine.low %v1994, %v1995
        %v2098 = vunpack.c.l.s4 1966171168
        %v2099 = vunpack.c.0.s8 %v2098
        %v2100 = vlaneseq
        %v2101 = vshrl.u32 %v2100, 7
        %v2102 = vsub.s32 %v2099, %v2101
        %v2103 = vrot.slane %v2093, %v2102
        %v2105 = vunpack.c.l.s4 1966171168
        %v2106 = vunpack.c.0.s8 %v2105
        %v2107 = vlaneseq
        %v2108 = vshrl.u32 %v2107, 7
        %v2109 = vsub.s32 %v2106, %v2108
        %v2110 = vrot.slane %v2094, %v2109
        %v2112 = vunpack.c.l.s4 1966171168
        %v2113 = vunpack.c.0.s8 %v2112
        %v2114 = vlaneseq
        %v2115 = vshrl.u32 %v2114, 7
        %v2116 = vsub.s32 %v2113, %v2115
        %v2117 = vrot.slane %v2095, %v2116
        %v2119 = vunpack.c.l.s4 1966171168
        %v2120 = vunpack.c.0.s8 %v2119
        %v2121 = vlaneseq
        %v2122 = vshrl.u32 %v2121, 7
        %v2123 = vsub.s32 %v2120, %v2122
        %v2124 = vrot.slane %v2096, %v2123
        %v2125 = vcombine.low %v2103, %v2110
        %v2126 = vcombine.low %v2117, %v2124
        %v2128 = vunpack.c.l.s4 1966171168
        %v2129 = vunpack.c.0.s8 %v2128
        %v2130 = vlaneseq
        %v2131 = vshrl.u32 %v2130, 7
        %v2132 = vsub.s32 %v2129, %v2131
        %v2133 = vrot.slane %v2125, %v2132
        %v2135 = vunpack.c.l.s4 1966171168
        %v2136 = vunpack.c.0.s8 %v2135
        %v2137 = vlaneseq
        %v2138 = vshrl.u32 %v2137, 7
        %v2139 = vsub.s32 %v2136, %v2138
        %v2140 = vrot.slane %v2126, %v2139
        %v2141 = vcombine.low %v2133, %v2140
        %v2142 = vcombine.low %v1996, %v1997
        %v2143 = vcombine.low %v1998, %v1999
        %v2144 = vcombine.low %v2000, %v2001
        %v2145 = vcombine.low %v2002, %v2003
        %v2147 = vunpack.c.l.s4 1966171168
        %v2148 = vunpack.c.0.s8 %v2147
        %v2149 = vlaneseq
        %v2150 = vshrl.u32 %v2149, 7
        %v2151 = vsub.s32 %v2148, %v2150
        %v2152 = vrot.slane %v2142, %v2151
        %v2154 = vunpack.c.l.s4 1966171168
        %v2155 = vunpack.c.0.s8 %v2154
        %v2156 = vlaneseq
        %v2157 = vshrl.u32 %v2156, 7
        %v2158 = vsub.s32 %v2155, %v2157
        %v2159 = vrot.slane %v2143, %v2158
        %v2161 = vunpack.c.l.s4 1966171168
        %v2162 = vunpack.c.0.s8 %v2161
        %v2163 = vlaneseq
        %v2164 = vshrl.u32 %v2163, 7
        %v2165 = vsub.s32 %v2162, %v2164
        %v2166 = vrot.slane %v2144, %v2165
        %v2168 = vunpack.c.l.s4 1966171168
        %v2169 = vunpack.c.0.s8 %v2168
        %v2170 = vlaneseq
        %v2171 = vshrl.u32 %v2170, 7
        %v2172 = vsub.s32 %v2169, %v2171
        %v2173 = vrot.slane %v2145, %v2172
        %v2174 = vcombine.low %v2152, %v2159
        %v2175 = vcombine.low %v2166, %v2173
        %v2177 = vunpack.c.l.s4 1966171168
        %v2178 = vunpack.c.0.s8 %v2177
        %v2179 = vlaneseq
        %v2180 = vshrl.u32 %v2179, 7
        %v2181 = vsub.s32 %v2178, %v2180
        %v2182 = vrot.slane %v2174, %v2181
        %v2184 = vunpack.c.l.s4 1966171168
        %v2185 = vunpack.c.0.s8 %v2184
        %v2186 = vlaneseq
        %v2187 = vshrl.u32 %v2186, 7
        %v2188 = vsub.s32 %v2185, %v2187
        %v2189 = vrot.slane %v2175, %v2188
        %v2190 = vcombine.low %v2182, %v2189
        %v2191 = vcombine.low %v2004, %v2005
        %v2192 = vcombine.low %v2006, %v2007
        %v2193 = vcombine.low %v2008, %v2009
        %v2194 = vcombine.low %v2010, %v2011
        %v2196 = vunpack.c.l.s4 1966171168
        %v2197 = vunpack.c.0.s8 %v2196
        %v2198 = vlaneseq
        %v2199 = vshrl.u32 %v2198, 7
        %v2200 = vsub.s32 %v2197, %v2199
        %v2201 = vrot.slane %v2191, %v2200
        %v2203 = vunpack.c.l.s4 1966171168
        %v2204 = vunpack.c.0.s8 %v2203
        %v2205 = vlaneseq
        %v2206 = vshrl.u32 %v2205, 7
        %v2207 = vsub.s32 %v2204, %v2206
        %v2208 = vrot.slane %v2192, %v2207
        %v2210 = vunpack.c.l.s4 1966171168
        %v2211 = vunpack.c.0.s8 %v2210
        %v2212 = vlaneseq
        %v2213 = vshrl.u32 %v2212, 7
        %v2214 = vsub.s32 %v2211, %v2213
        %v2215 = vrot.slane %v2193, %v2214
        %v2217 = vunpack.c.l.s4 1966171168
        %v2218 = vunpack.c.0.s8 %v2217
        %v2219 = vlaneseq
        %v2220 = vshrl.u32 %v2219, 7
        %v2221 = vsub.s32 %v2218, %v2220
        %v2222 = vrot.slane %v2194, %v2221
        %v2223 = vcombine.low %v2201, %v2208
        %v2224 = vcombine.low %v2215, %v2222
        %v2226 = vunpack.c.l.s4 1966171168
        %v2227 = vunpack.c.0.s8 %v2226
        %v2228 = vlaneseq
        %v2229 = vshrl.u32 %v2228, 7
        %v2230 = vsub.s32 %v2227, %v2229
        %v2231 = vrot.slane %v2223, %v2230
        %v2233 = vunpack.c.l.s4 1966171168
        %v2234 = vunpack.c.0.s8 %v2233
        %v2235 = vlaneseq
        %v2236 = vshrl.u32 %v2235, 7
        %v2237 = vsub.s32 %v2234, %v2236
        %v2238 = vrot.slane %v2224, %v2237
        %v2239 = vcombine.low %v2231, %v2238
        %2244 = vst [vmem:[%s304] sm:$0xff] %v2092
        %2245 = vst [vmem:[%s304 + $0x8] sm:$0xff] %v2141
        %2246 = vst [vmem:[%s304 + $0x10] sm:$0xff] %v2190
        %2247 = vst [vmem:[%s304 + $0x18] sm:$0xff] %v2239
        %s2248 = smul.u32 32, %s18
        %p2249 = scmp.lt.s32.totalorder %s2248, 63
        %s2250 = scalar_select %p2249, %s2248, 63
        %s2251 = scalar_lea.vmem %s5, %s2250
        // Predicated region
        $region57: #{inter_forward.2} parent=39 // pred_check
          %p2252 = pneg %p151
        $region58: #{inter_forward.2} parent=39 // pred_check_branch
          %2254 = sbr.rel (%p2252) target = $region60
        $region59: #{inter_forward.2} parent=39 // pred_region
          %s2255 = smul.u32 32, %s18
        $region60: #{inter_forward.2} parent=39 // pred_fallthru
          _
      $region40: #{inter_forward.2} parent=5 // pred_fallthru
        _
      %p2256 = scmp.le.s32.totalorder 2, %s13
      // Predicated region
      $region61: #{inter_forward.2} parent=5 // pred_check
        %p2257 = pneg %p2256
      $region62: #{inter_forward.2} parent=5 // pred_check_branch
        %2259 = sbr.rel (%p2257) target = $region64
      $region63: #{inter_forward.2} parent=5 // pred_region
        %s2260 = ssub.s32 %s13, 2
        // Predicated region
        $region65: #{inter_forward.2} parent=63 // pred_check
          %p2261 = pneg %p157
        $region66: #{inter_forward.2} parent=63 // pred_check_branch
          %2263 = sbr.rel (%p2261) target = $region68
        $region67: #{inter_forward.2} parent=63 // pred_region
          %s2264 = smul.u32 32, %s19
          %p2265 = scmp.lt.s32.totalorder %s2264, 63
          %s2266 = scalar_select %p2265, %s2264, 63
          %s2267 = scalar_lea.vmem %s5, %s2266
        $region68: #{inter_forward.2} parent=63 // pred_fallthru
          _
      $region64: #{inter_forward.2} parent=5 // pred_fallthru
        _
    $region6: #{inter_forward.2} parent=1 // loop_footer
      %s17 = sadd.s32 1, %s13
    $region7: #{inter_forward.2} parent=1 // loop_footer_branch
      %12 = sbr.rel target = $region3
    $region8: #{inter_forward.2} parent=1 // loop_exit
      _
    %2268 = vsyncpa [#allocation3], 1
    %s2269 = scalar_lea.sflag [#allocation3], 1
    %2270 = vsyncpa %s2269, 1
    %2271 = vsyncpa [#allocation5], 1

// kernel: inter_forward.3
$region0: #{inter_forward.3}
  #allocation0 [shape = 'u32[]', space=smem, size = 0x4, offset = 0x4, fixed_abs, tag = 'smem constant byte address 0x4 - core index']
  #allocation1 [shape = 'u32[144,128]{1,0:T(1,128)}', space=vmem, size = 0x12000, scoped, tag = 'internal scratch']
  %s0 = inlined_call_operand.vmem [shape: bf16[2,18,18,32], index: 0, kind: input, shape index: {}]
  %s1 = inlined_call_operand.hbm [shape: bf16[288,128], index: 1, kind: input, shape index: {}]
  %s2 = inlined_call_operand.hbm [shape: f32[1,128], index: 2, kind: input, shape index: {}]
  %s3 = inlined_call_operand.vmem [shape: f32[2,256,128], index: 3, kind: output, shape index: {}]
  %s4 = sld [smem:[#allocation0]]
  $region53: #{inter_forward.3} parent=0
    _
  %s6 = ssub.s32 1, %s4
  %s7 = scalar_select 0, %s6, %s4
  $region1: #{inter_forward.3} parent=0
    #allocation2 [shape = 'u8[73728]{0}', space=vmem, size = 0x12000, scoped, tag = 'input window, operand 1, single buffered']
    #allocation3 [shape = 's32[2]{0}', space=sflag, size = 0x8, scoped, tag = 'scoped memory for inter_forward.3']
    #allocation4 [shape = 'u8[512]{0}', space=vmem, size = 0x400, scoped, tag = 'input window, operand 2, single buffered']
    #allocation5 [shape = 's32[1]{0}', space=sflag, size = 0x4, scoped, tag = 'scoped memory for inter_forward.3']
    %8 = vsyncpa [#allocation3], 0
    %9 = vsyncpa [#allocation5], 0
    loop: start=0, step=1, limit=4
    $region2: #{inter_forward.3} parent=1 // loop_pre_header
      _
    $region3: #{inter_forward.3} parent=1 // loop_header
      %s11 = sphi 0, %s15
      %p12 = scmp.ge.s32.totalorder %s11, 4
      %s18 = sphi 0, %s30
      %s19 = sphi 0, %s26
      %s20 = sphi 0, %s18
      %s21 = sphi 0, %s19
      %s22 = sphi 0, %s20
      %s23 = sphi 0, %s21
      %s33 = sphi 0, %s35
      %s36 = sphi 0, %s33
      %s37 = sphi 0, %s36
      %s53 = sphi 0, %s37
      %s59 = sphi 0, %s61
      %s62 = sphi 0, %s59
      %s63 = sphi 0, %s62
      %s79 = sphi 0, %s63
      %s85 = sphi 0, %s87
      %s88 = sphi 0, %s85
      %s89 = sphi 0, %s88
      %s105 = sphi 0, %s89
      %s113 = sphi 0, %s115
      %s116 = sphi 0, %s113
      %s117 = sphi 0, %s116
      %s133 = sphi 0, %s117
    $region4: #{inter_forward.3} parent=1 // loop_header_branch
      %14 = sbr.rel (%p12) target = $region8
    $region5: #{inter_forward.3} parent=1 // loop_body
      %s16 = ssub.s32 %s11, 1
      %s17 = ssub.s32 %s11, 2
      %s24 = sadd.s32 1, %s19
      %p25 = scmp.ge.s32.totalorder %s24, 1
      %s26 = scalar_select %p25, 0, %s24
      %s27 = sadd.s32 1, %s18
      %s28 = scalar_select %p25, %s27, %s18
      %p29 = scmp.ge.s32.totalorder %s28, 2
      %s30 = scalar_select %p29, 0, %s28
      %s31 = ssub.s32 %s18, %s30
      %p32 = scmp.eq.s32.totalorder %s31, 0
      %s34 = sadd.s32 %s33, 1
      %s35 = scalar_select %p32, %s33, %s34
      %p38 = pneg %p32
      %p39 = scmp.eq.s32.totalorder %s11, 1
      %p40 = por %p38, %p39
      %p41 = scmp.ne.s32.totalorder %s33, %s36
      %p42 = scmp.eq.s32.totalorder %s11, 0
      %p43 = por %p41, %p42
      %p44 = scmp.ne.s32.totalorder %s33, %s36
      %p45 = scmp.eq.s32.totalorder %s16, 1
      %p46 = por %p44, %p45
      %p47 = scmp.ne.s32.totalorder %s36, %s37
      %p48 = scmp.eq.s32.totalorder %s16, 0
      %p49 = por %p47, %p48
      %p50 = scmp.ne.s32.totalorder %s36, %s37
      %p51 = scmp.eq.s32.totalorder %s17, 1
      %p52 = por %p50, %p51
      %p54 = scmp.ne.s32.totalorder %s37, %s53
      %p55 = scmp.eq.s32.totalorder %s17, 0
      %p56 = por %p54, %p55
      %s57 = ssub.s32 %s19, %s26
      %p58 = scmp.eq.s32.totalorder %s57, 0
      %s60 = sadd.s32 %s59, 1
      %s61 = scalar_select %p58, %s59, %s60
      %p64 = pneg %p58
      %p65 = scmp.eq.s32.totalorder %s11, 1
      %p66 = por %p64, %p65
      %p67 = scmp.ne.s32.totalorder %s59, %s62
      %p68 = scmp.eq.s32.totalorder %s11, 0
      %p69 = por %p67, %p68
      %p70 = scmp.ne.s32.totalorder %s59, %s62
      %p71 = scmp.eq.s32.totalorder %s16, 1
      %p72 = por %p70, %p71
      %p73 = scmp.ne.s32.totalorder %s62, %s63
      %p74 = scmp.eq.s32.totalorder %s16, 0
      %p75 = por %p73, %p74
      %p76 = scmp.ne.s32.totalorder %s62, %s63
      %p77 = scmp.eq.s32.totalorder %s17, 1
      %p78 = por %p76, %p77
      %p80 = scmp.ne.s32.totalorder %s63, %s79
      %p81 = scmp.eq.s32.totalorder %s17, 0
      %p82 = por %p80, %p81
      %s83 = ssub.s32 %s19, %s26
      %p84 = scmp.eq.s32.totalorder %s83, 0
      %s86 = sadd.s32 %s85, 1
      %s87 = scalar_select %p84, %s85, %s86
      %p90 = pneg %p84
      %p91 = scmp.eq.s32.totalorder %s11, 1
      %p92 = por %p90, %p91
      %p93 = scmp.ne.s32.totalorder %s85, %s88
      %p94 = scmp.eq.s32.totalorder %s11, 0
      %p95 = por %p93, %p94
      %p96 = scmp.ne.s32.totalorder %s85, %s88
      %p97 = scmp.eq.s32.totalorder %s16, 1
      %p98 = por %p96, %p97
      %p99 = scmp.ne.s32.totalorder %s88, %s89
      %p100 = scmp.eq.s32.totalorder %s16, 0
      %p101 = por %p99, %p100
      %p102 = scmp.ne.s32.totalorder %s88, %s89
      %p103 = scmp.eq.s32.totalorder %s17, 1
      %p104 = por %p102, %p103
      %p106 = scmp.ne.s32.totalorder %s89, %s105
      %p107 = scmp.eq.s32.totalorder %s17, 0
      %p108 = por %p106, %p107
      %s109 = ssub.s32 %s18, %s30
      %s110 = ssub.s32 %s19, %s26
      %s111 = sor.u32 %s109, %s110
      %p112 = scmp.eq.s32.totalorder %s111, 0
      %s114 = sadd.s32 %s113, 1
      %s115 = scalar_select %p112, %s113, %s114
      %p118 = pneg %p112
      %p119 = scmp.eq.s32.totalorder %s11, 1
      %p120 = por %p118, %p119
      %p121 = scmp.ne.s32.totalorder %s113, %s116
      %p122 = scmp.eq.s32.totalorder %s11, 0
      %p123 = por %p121, %p122
      %p124 = scmp.ne.s32.totalorder %s113, %s116
      %p125 = scmp.eq.s32.totalorder %s16, 1
      %p126 = por %p124, %p125
      %p127 = scmp.ne.s32.totalorder %s116, %s117
      %p128 = scmp.eq.s32.totalorder %s16, 0
      %p129 = por %p127, %p128
      %p130 = scmp.ne.s32.totalorder %s116, %s117
      %p131 = scmp.eq.s32.totalorder %s17, 1
      %p132 = por %p130, %p131
      %p134 = scmp.ne.s32.totalorder %s117, %s133
      %p135 = scmp.eq.s32.totalorder %s17, 0
      %p136 = por %p134, %p135
      %p137 = scmp.le.s32.totalorder 1, %s11
      %p138 = scmp.lt.s32.totalorder %s11, 3
      %p139 = pnand %p137, %p138
      %p140 = pneg %p139
      // Predicated region
      $region9: #{inter_forward.3} parent=5 // pred_check
        _
      $region10: #{inter_forward.3} parent=5 // pred_check_branch
        %142 = sbr.rel (%p139) target = $region12
      $region11: #{inter_forward.3} parent=5 // pred_region
        %s143 = ssub.s32 %s11, 1
        // Predicated region
        $region13: #{inter_forward.3} parent=11 // pred_check
          %p144 = pneg %p75
        $region14: #{inter_forward.3} parent=11 // pred_check_branch
          %146 = sbr.rel (%p144) target = $region16
        $region15: #{inter_forward.3} parent=11 // pred_region
          %s148 = ssub.s32 2304, 2304
          %149 = vsyncadd [#allocation3], %s148
          %s150 = smul.addr %s21, 64
          %s151 = scalar_lea.hbm %s1, %s150
          %s152 = sshll.u32 [#allocation2], 4
          %s153 = int_to_ptr.vmem [resolvable:$true] %s152
          %158 = dma.hbm_to_vmem [thread:$0]  %s151, 2304, %s153, [#allocation3], 64, 64, 4
        $region16: #{inter_forward.3} parent=11 // pred_fallthru
          _
        // Predicated region
        $region17: #{inter_forward.3} parent=11 // pred_check
          %p159 = pneg %p101
        $region18: #{inter_forward.3} parent=11 // pred_check_branch
          %161 = sbr.rel (%p159) target = $region20
        $region19: #{inter_forward.3} parent=11 // pred_region
          %s163 = ssub.s32 16, 16
          %164 = vsyncadd [#allocation5], %s163
          %s165 = smul.addr %s21, 16
          %s166 = scalar_lea.hbm %s2, %s165
          %s168 = sshll.u32 [#allocation4], 4
          %s169 = int_to_ptr.vmem [resolvable:$true] %s168
          %171 = dma.hbm_to_vmem [thread:$0]  %s166, 16, %s169, [#allocation5]
        $region20: #{inter_forward.3} parent=11 // pred_fallthru
          _
      $region12: #{inter_forward.3} parent=5 // pred_fallthru
        _
      %p172 = scmp.lt.s32.totalorder %s11, 2
      // Predicated region
      $region21: #{inter_forward.3} parent=5 // pred_check
        %p173 = pneg %p172
      $region22: #{inter_forward.3} parent=5 // pred_check_branch
        %175 = sbr.rel (%p173) target = $region24
      $region23: #{inter_forward.3} parent=5 // pred_region
        // Predicated region
        $region25: #{inter_forward.3} parent=23 // pred_check
          %p176 = pneg %p43
        $region26: #{inter_forward.3} parent=23 // pred_check_branch
          %178 = sbr.rel (%p176) target = $region28
        $region27: #{inter_forward.3} parent=23 // pred_region
          %p179 = scmp.lt.s32.totalorder %s18, 1
          %s180 = scalar_select %p179, %s18, 1
          %s181 = smul.addr %s180, 54
          %s182 = smul.addr %s181, 4
          %s183 = scalar_lea.vmem %s0, %s182
        $region28: #{inter_forward.3} parent=23 // pred_fallthru
          _
      $region24: #{inter_forward.3} parent=5 // pred_fallthru
        _
      %p184 = scmp.le.s32.totalorder 1, %s11
      %p185 = scmp.lt.s32.totalorder %s11, 3
      %p186 = pnand %p184, %p185
      %p187 = pneg %p186
      // Predicated region
      $region29: #{inter_forward.3} parent=5 // pred_check
        _
      $region30: #{inter_forward.3} parent=5 // pred_check_branch
        %189 = sbr.rel (%p186) target = $region32
      $region31: #{inter_forward.3} parent=5 // pred_region
        %s190 = ssub.s32 %s11, 1
        // Predicated region
        $region33: #{inter_forward.3} parent=31 // pred_check
          %p191 = pneg %p75
        $region34: #{inter_forward.3} parent=31 // pred_check_branch
          %193 = sbr.rel (%p191) target = $region36
        $region35: #{inter_forward.3} parent=31 // pred_region
          %194 = dma.done [#allocation3], 2304
        $region36: #{inter_forward.3} parent=31 // pred_fallthru
          _
        // Predicated region
        $region37: #{inter_forward.3} parent=31 // pred_check
          %p195 = pneg %p101
        $region38: #{inter_forward.3} parent=31 // pred_check_branch
          %197 = sbr.rel (%p195) target = $region40
        $region39: #{inter_forward.3} parent=31 // pred_region
          %198 = dma.done [#allocation5], 16
        $region40: #{inter_forward.3} parent=31 // pred_fallthru
          _
        %p199 = scmp.lt.s32.totalorder %s20, 1
        %s200 = scalar_select %p199, %s20, 1
        %s201 = smul.addr %s200, 54
        %s202 = smul.addr %s201, 4
        %s203 = scalar_lea.vmem %s0, %s202
        %p204 = pneg %p49
        %p205 = pneg %p46
        %p206 = pneg %p75
        %p207 = pneg %p72
        %p208 = pneg %p101
        %p209 = pneg %p98
        %p210 = pneg %p129
        %p211 = pneg %p126
        %p212 = scmp.lt.s32.totalorder %s20, 1
        %s213 = scalar_select %p212, %s20, 1
        %p214 = scmp.lt.s32.totalorder %s21, 0
        %s215 = scalar_select %p214, %s21, 0
        %s216 = smul.addr %s213, 32
        %s217 = sadd.s32 %s215, %s216
        %s218 = smul.addr %s217, 8
        %s219 = scalar_lea.vmem %s3, %s218
        %p220 = scmp.lt.s32.totalorder %s20, 1
        %s221 = scalar_select %p220, %s20, 1
        %s222 = smul.addr %s221, 54
        %s223 = smul.addr %s222, 4
        %s224 = scalar_lea.vmem %s0, %s223
        %p225 = scmp.lt.s32.totalorder %s20, 1
        %s226 = scalar_select %p225, %s20, 1
        %p227 = scmp.lt.s32.totalorder %s21, 0
        %s228 = scalar_select %p227, %s21, 0
        %s229 = smul.addr %s226, 32
        %s230 = sadd.s32 %s228, %s229
        %s231 = smul.addr %s230, 8
        %s232 = scalar_lea.vmem %s3, %s231
        %v234 = vld [vmem:[%s224] sm:$0xf]
        %v235 = vld [vmem:[%s224 + $0x4] sm:$0xf]
        %v236 = vld [vmem:[%s224 + $0x8] sm:$0x1]
        %v237 = vld [vmem:[%s224 + $0xc] sm:$0xf]
        %v238 = vld [vmem:[%s224 + $0x10] sm:$0xf]
        %v239 = vld [vmem:[%s224 + $0x14] sm:$0x1]
        %v240 = vld [vmem:[%s224 + $0x18] sm:$0xf]
        %v241 = vld [vmem:[%s224 + $0x1c] sm:$0xf]
        %v242 = vld [vmem:[%s224 + $0x20] sm:$0x1]
        %v243 = vld [vmem:[%s224 + $0x24] sm:$0xf]
        %v244 = vld [vmem:[%s224 + $0x28] sm:$0xf]
        %v245 = vld [vmem:[%s224 + $0x2c] sm:$0x1]
        %v246 = vld [vmem:[%s224 + $0x30] sm:$0xf]
        %v247 = vld [vmem:[%s224 + $0x34] sm:$0xf]
        %v248 = vld [vmem:[%s224 + $0x38] sm:$0x1]
        %v249 = vld [vmem:[%s224 + $0x3c] sm:$0xf]
        %v250 = vld [vmem:[%s224 + $0x40] sm:$0xf]
        %v251 = vld [vmem:[%s224 + $0x44] sm:$0x1]
        %v252 = vld [vmem:[%s224 + $0x48] sm:$0xf]
        %v253 = vld [vmem:[%s224 + $0x4c] sm:$0xf]
        %v254 = vld [vmem:[%s224 + $0x50] sm:$0x1]
        %v255 = vld [vmem:[%s224 + $0x54] sm:$0xf]
        %v256 = vld [vmem:[%s224 + $0x58] sm:$0xf]
        %v257 = vld [vmem:[%s224 + $0x5c] sm:$0x1]
        %v258 = vld [vmem:[%s224 + $0x60] sm:$0xf]
        %v259 = vld [vmem:[%s224 + $0x64] sm:$0xf]
        %v260 = vld [vmem:[%s224 + $0x68] sm:$0x1]
        %v261 = vld [vmem:[%s224 + $0x6c] sm:$0xf]
        %v262 = vld [vmem:[%s224 + $0x70] sm:$0xf]
        %v263 = vld [vmem:[%s224 + $0x74] sm:$0x1]
        %v264 = vld [vmem:[%s224 + $0x78] sm:$0xf]
        %v265 = vld [vmem:[%s224 + $0x7c] sm:$0xf]
        %v266 = vld [vmem:[%s224 + $0x80] sm:$0x1]
        %v267 = vld [vmem:[%s224 + $0x84] sm:$0xf]
        %v268 = vld [vmem:[%s224 + $0x88] sm:$0xf]
        %v269 = vld [vmem:[%s224 + $0x8c] sm:$0x1]
        %v270 = vld [vmem:[%s224 + $0x90] sm:$0xf]
        %v271 = vld [vmem:[%s224 + $0x94] sm:$0xf]
        %v272 = vld [vmem:[%s224 + $0x98] sm:$0x1]
        %v273 = vld [vmem:[%s224 + $0x9c] sm:$0xf]
        %v274 = vld [vmem:[%s224 + $0xa0] sm:$0xf]
        %v275 = vld [vmem:[%s224 + $0xa4] sm:$0x1]
        %v276 = vld [vmem:[%s224 + $0xa8] sm:$0xf]
        %v277 = vld [vmem:[%s224 + $0xac] sm:$0xf]
        %v278 = vld [vmem:[%s224 + $0xb0] sm:$0x1]
        %v279 = vld [vmem:[%s224 + $0xb4] sm:$0xf]
        %v280 = vld [vmem:[%s224 + $0xb8] sm:$0xf]
        %v281 = vld [vmem:[%s224 + $0xbc] sm:$0x1]
        %v282 = vld [vmem:[%s224 + $0xc0] sm:$0xf]
        %v283 = vld [vmem:[%s224 + $0xc4] sm:$0xf]
        %v284 = vld [vmem:[%s224 + $0xc8] sm:$0x1]
        %v285 = vld [vmem:[%s224 + $0xcc] sm:$0xf]
        %v286 = vld [vmem:[%s224 + $0xd0] sm:$0xf]
        %v287 = vld [vmem:[%s224 + $0xd4] sm:$0x1]
        %v288 = vld [vmem:[#allocation2] sm:$0xf]
        %v289 = vld [vmem:[#allocation2 + $0x4] sm:$0xf]
        %v290 = vld [vmem:[#allocation2 + $0x8] sm:$0xf]
        %v291 = vld [vmem:[#allocation2 + $0xc] sm:$0xf]
        %vm292 = vsmask.f32 3328
        %vm293 = vsmask.f32 7440
        %vm294 = vmor %vm292, %vm293
        %v296 = vshrl.u32 %v234, 16
        %v298 = vrot.slane %v296, 4
        %v299 = vshll.u32 %v234, 16
        %v301 = vrot.slane %v299, 5
        %v302 = vor.u32 %v298, %v301
        %v303 = vrot.slane %v302, 4
        %v305 = vshll.u32 %v235, 16
        %v307 = vrot.slane %v305, 5
        %v308 = vsel %vm294, %v303, %v307
        %v309 = vshrl.u32 %v235, 16
        %v311 = vrot.slane %v309, 4
        %v312 = vor.u32 %v311, %v307
        %v313 = vrot.slane %v312, 4
        %v315 = vshll.u32 %v236, 16
        %v317 = vrot.slane %v315, 5
        %v318 = vsel %vm294, %v313, %v317
        %v320 = vshrl.u32 %v237, 16
        %v322 = vrot.slane %v320, 4
        %v323 = vshll.u32 %v237, 16
        %v325 = vrot.slane %v323, 5
        %v326 = vor.u32 %v322, %v325
        %v327 = vrot.slane %v326, 4
        %v329 = vshll.u32 %v238, 16
        %v331 = vrot.slane %v329, 5
        %v332 = vsel %vm294, %v327, %v331
        %v333 = vshrl.u32 %v238, 16
        %v335 = vrot.slane %v333, 4
        %v336 = vor.u32 %v335, %v331
        %v337 = vrot.slane %v336, 4
        %v339 = vshll.u32 %v239, 16
        %v341 = vrot.slane %v339, 5
        %v342 = vsel %vm294, %v337, %v341
        %v344 = vshrl.u32 %v240, 16
        %v346 = vrot.slane %v344, 4
        %v347 = vshll.u32 %v240, 16
        %v349 = vrot.slane %v347, 5
        %v350 = vor.u32 %v346, %v349
        %v351 = vrot.slane %v350, 4
        %v353 = vshll.u32 %v241, 16
        %v355 = vrot.slane %v353, 5
        %v356 = vsel %vm294, %v351, %v355
        %v357 = vshrl.u32 %v241, 16
        %v359 = vrot.slane %v357, 4
        %v360 = vor.u32 %v359, %v355
        %v361 = vrot.slane %v360, 4
        %v363 = vshll.u32 %v242, 16
        %v365 = vrot.slane %v363, 5
        %v366 = vsel %vm294, %v361, %v365
        %v368 = vshrl.u32 %v243, 16
        %v370 = vrot.slane %v368, 4
        %v371 = vshll.u32 %v243, 16
        %v373 = vrot.slane %v371, 5
        %v374 = vor.u32 %v370, %v373
        %v375 = vrot.slane %v374, 4
        %v377 = vshll.u32 %v244, 16
        %v379 = vrot.slane %v377, 5
        %v380 = vsel %vm294, %v375, %v379
        %v381 = vshrl.u32 %v244, 16
        %v383 = vrot.slane %v381, 4
        %v384 = vor.u32 %v383, %v379
        %v385 = vrot.slane %v384, 4
        %v387 = vshll.u32 %v245, 16
        %v389 = vrot.slane %v387, 5
        %v390 = vsel %vm294, %v385, %v389
        %v392 = vshrl.u32 %v246, 16
        %v394 = vrot.slane %v392, 4
        %v395 = vshll.u32 %v246, 16
        %v397 = vrot.slane %v395, 5
        %v398 = vor.u32 %v394, %v397
        %v399 = vrot.slane %v398, 4
        %v401 = vshll.u32 %v247, 16
        %v403 = vrot.slane %v401, 5
        %v404 = vsel %vm294, %v399, %v403
        %v405 = vshrl.u32 %v247, 16
        %v407 = vrot.slane %v405, 4
        %v408 = vor.u32 %v407, %v403
        %v409 = vrot.slane %v408, 4
        %v411 = vshll.u32 %v248, 16
        %v413 = vrot.slane %v411, 5
        %v414 = vsel %vm294, %v409, %v413
        %v416 = vshrl.u32 %v249, 16
        %v418 = vrot.slane %v416, 4
        %v419 = vshll.u32 %v249, 16
        %v421 = vrot.slane %v419, 5
        %v422 = vor.u32 %v418, %v421
        %v423 = vrot.slane %v422, 4
        %v425 = vshll.u32 %v250, 16
        %v427 = vrot.slane %v425, 5
        %v428 = vsel %vm294, %v423, %v427
        %v429 = vshrl.u32 %v250, 16
        %v431 = vrot.slane %v429, 4
        %v432 = vor.u32 %v431, %v427
        %v433 = vrot.slane %v432, 4
        %v435 = vshll.u32 %v251, 16
        %v437 = vrot.slane %v435, 5
        %v438 = vsel %vm294, %v433, %v437
        %v440 = vshrl.u32 %v252, 16
        %v442 = vrot.slane %v440, 4
        %v443 = vshll.u32 %v252, 16
        %v445 = vrot.slane %v443, 5
        %v446 = vor.u32 %v442, %v445
        %v447 = vrot.slane %v446, 4
        %v449 = vshll.u32 %v253, 16
        %v451 = vrot.slane %v449, 5
        %v452 = vsel %vm294, %v447, %v451
        %v453 = vshrl.u32 %v253, 16
        %v455 = vrot.slane %v453, 4
        %v456 = vor.u32 %v455, %v451
        %v457 = vrot.slane %v456, 4
        %v459 = vshll.u32 %v254, 16
        %v461 = vrot.slane %v459, 5
        %v462 = vsel %vm294, %v457, %v461
        %v464 = vshrl.u32 %v255, 16
        %v466 = vrot.slane %v464, 4
        %v467 = vshll.u32 %v255, 16
        %v469 = vrot.slane %v467, 5
        %v470 = vor.u32 %v466, %v469
        %v471 = vrot.slane %v470, 4
        %v473 = vshll.u32 %v256, 16
        %v475 = vrot.slane %v473, 5
        %v476 = vsel %vm294, %v471, %v475
        %v477 = vshrl.u32 %v256, 16
        %v479 = vrot.slane %v477, 4
        %v480 = vor.u32 %v479, %v475
        %v481 = vrot.slane %v480, 4
        %v483 = vshll.u32 %v257, 16
        %v485 = vrot.slane %v483, 5
        %v486 = vsel %vm294, %v481, %v485
        %v488 = vshrl.u32 %v258, 16
        %v490 = vrot.slane %v488, 4
        %v491 = vshll.u32 %v258, 16
        %v493 = vrot.slane %v491, 5
        %v494 = vor.u32 %v490, %v493
        %v495 = vrot.slane %v494, 4
        %v497 = vshll.u32 %v259, 16
        %v499 = vrot.slane %v497, 5
        %v500 = vsel %vm294, %v495, %v499
        %v501 = vshrl.u32 %v259, 16
        %v503 = vrot.slane %v501, 4
        %v504 = vor.u32 %v503, %v499
        %v505 = vrot.slane %v504, 4
        %v507 = vshll.u32 %v260, 16
        %v509 = vrot.slane %v507, 5
        %v510 = vsel %vm294, %v505, %v509
        %v512 = vshrl.u32 %v261, 16
        %v514 = vrot.slane %v512, 4
        %v515 = vshll.u32 %v261, 16
        %v517 = vrot.slane %v515, 5
        %v518 = vor.u32 %v514, %v517
        %v519 = vrot.slane %v518, 4
        %v521 = vshll.u32 %v262, 16
        %v523 = vrot.slane %v521, 5
        %v524 = vsel %vm294, %v519, %v523
        %v525 = vshrl.u32 %v262, 16
        %v527 = vrot.slane %v525, 4
        %v528 = vor.u32 %v527, %v523
        %v529 = vrot.slane %v528, 4
        %v531 = vshll.u32 %v263, 16
        %v533 = vrot.slane %v531, 5
        %v534 = vsel %vm294, %v529, %v533
        %v536 = vshrl.u32 %v264, 16
        %v538 = vrot.slane %v536, 4
        %v539 = vshll.u32 %v264, 16
        %v541 = vrot.slane %v539, 5
        %v542 = vor.u32 %v538, %v541
        %v543 = vrot.slane %v542, 4
        %v545 = vshll.u32 %v265, 16
        %v547 = vrot.slane %v545, 5
        %v548 = vsel %vm294, %v543, %v547
        %v549 = vshrl.u32 %v265, 16
        %v551 = vrot.slane %v549, 4
        %v552 = vor.u32 %v551, %v547
        %v553 = vrot.slane %v552, 4
        %v555 = vshll.u32 %v266, 16
        %v557 = vrot.slane %v555, 5
        %v558 = vsel %vm294, %v553, %v557
        %v560 = vshrl.u32 %v267, 16
        %v562 = vrot.slane %v560, 4
        %v563 = vshll.u32 %v267, 16
        %v565 = vrot.slane %v563, 5
        %v566 = vor.u32 %v562, %v565
        %v567 = vrot.slane %v566, 4
        %v569 = vshll.u32 %v268, 16
        %v571 = vrot.slane %v569, 5
        %v572 = vsel %vm294, %v567, %v571
        %v573 = vshrl.u32 %v268, 16
        %v575 = vrot.slane %v573, 4
        %v576 = vor.u32 %v575, %v571
        %v577 = vrot.slane %v576, 4
        %v579 = vshll.u32 %v269, 16
        %v581 = vrot.slane %v579, 5
        %v582 = vsel %vm294, %v577, %v581
        %v584 = vshrl.u32 %v270, 16
        %v586 = vrot.slane %v584, 4
        %v587 = vshll.u32 %v270, 16
        %v589 = vrot.slane %v587, 5
        %v590 = vor.u32 %v586, %v589
        %v591 = vrot.slane %v590, 4
        %v593 = vshll.u32 %v271, 16
        %v595 = vrot.slane %v593, 5
        %v596 = vsel %vm294, %v591, %v595
        %v597 = vshrl.u32 %v271, 16
        %v599 = vrot.slane %v597, 4
        %v600 = vor.u32 %v599, %v595
        %v601 = vrot.slane %v600, 4
        %v603 = vshll.u32 %v272, 16
        %v605 = vrot.slane %v603, 5
        %v606 = vsel %vm294, %v601, %v605
        %v608 = vshrl.u32 %v273, 16
        %v610 = vrot.slane %v608, 4
        %v611 = vshll.u32 %v273, 16
        %v613 = vrot.slane %v611, 5
        %v614 = vor.u32 %v610, %v613
        %v615 = vrot.slane %v614, 4
        %v617 = vshll.u32 %v274, 16
        %v619 = vrot.slane %v617, 5
        %v620 = vsel %vm294, %v615, %v619
        %v621 = vshrl.u32 %v274, 16
        %v623 = vrot.slane %v621, 4
        %v624 = vor.u32 %v623, %v619
        %v625 = vrot.slane %v624, 4
        %v627 = vshll.u32 %v275, 16
        %v629 = vrot.slane %v627, 5
        %v630 = vsel %vm294, %v625, %v629
        %v632 = vshrl.u32 %v276, 16
        %v634 = vrot.slane %v632, 4
        %v635 = vshll.u32 %v276, 16
        %v637 = vrot.slane %v635, 5
        %v638 = vor.u32 %v634, %v637
        %v639 = vrot.slane %v638, 4
        %v641 = vshll.u32 %v277, 16
        %v643 = vrot.slane %v641, 5
        %v644 = vsel %vm294, %v639, %v643
        %v645 = vshrl.u32 %v277, 16
        %v647 = vrot.slane %v645, 4
        %v648 = vor.u32 %v647, %v643
        %v649 = vrot.slane %v648, 4
        %v651 = vshll.u32 %v278, 16
        %v653 = vrot.slane %v651, 5
        %v654 = vsel %vm294, %v649, %v653
        %v656 = vshrl.u32 %v279, 16
        %v658 = vrot.slane %v656, 4
        %v659 = vshll.u32 %v279, 16
        %v661 = vrot.slane %v659, 5
        %v662 = vor.u32 %v658, %v661
        %v663 = vrot.slane %v662, 4
        %v665 = vshll.u32 %v280, 16
        %v667 = vrot.slane %v665, 5
        %v668 = vsel %vm294, %v663, %v667
        %v669 = vshrl.u32 %v280, 16
        %v671 = vrot.slane %v669, 4
        %v672 = vor.u32 %v671, %v667
        %v673 = vrot.slane %v672, 4
        %v675 = vshll.u32 %v281, 16
        %v677 = vrot.slane %v675, 5
        %v678 = vsel %vm294, %v673, %v677
        %v679 = vld [vmem:[#allocation2 + $0x10] sm:$0xf]
        %v680 = vld [vmem:[#allocation2 + $0x14] sm:$0xf]
        %v681 = vld [vmem:[#allocation2 + $0x18] sm:$0xf]
        %v682 = vld [vmem:[#allocation2 + $0x1c] sm:$0xf]
        %v683 = vunpack.c.l.b16 %v308
        %v684 = vunpack.c.l.b16 %v318
        %v685 = vunpack.c.l.b16 %v332
        %v686 = vunpack.c.l.b16 %v342
        %v687 = vunpack.c.l.b16 %v356
        %v688 = vunpack.c.l.b16 %v366
        %v689 = vunpack.c.l.b16 %v380
        %v690 = vunpack.c.l.b16 %v390
        %v691 = vunpack.c.l.b16 %v404
        %v692 = vunpack.c.l.b16 %v414
        %v693 = vunpack.c.l.b16 %v428
        %v694 = vunpack.c.l.b16 %v438
        %v695 = vunpack.c.l.b16 %v452
        %v696 = vunpack.c.l.b16 %v462
        %v697 = vunpack.c.l.b16 %v476
        %v698 = vunpack.c.l.b16 %v486
        %v699 = vunpack.c.l.b16 %v500
        %v700 = vunpack.c.l.b16 %v510
        %v701 = vunpack.c.l.b16 %v524
        %v702 = vunpack.c.l.b16 %v534
        %v703 = vunpack.c.l.b16 %v548
        %v704 = vunpack.c.l.b16 %v558
        %v705 = vunpack.c.l.b16 %v572
        %v706 = vunpack.c.l.b16 %v582
        %v707 = vunpack.c.l.b16 %v596
        %v708 = vunpack.c.l.b16 %v606
        %v709 = vunpack.c.l.b16 %v620
        %v710 = vunpack.c.l.b16 %v630
        %v711 = vunpack.c.l.b16 %v644
        %v712 = vunpack.c.l.b16 %v654
        %v713 = vunpack.c.l.b16 %v668
        %v714 = vunpack.c.l.b16 %v678
        %v715 = vpack.c.b16 %v684, %v683
        %v716 = vpack.c.b16 %v686, %v685
        %v717 = vpack.c.b16 %v688, %v687
        %v718 = vpack.c.b16 %v690, %v689
        %v719 = vpack.c.b16 %v692, %v691
        %v720 = vpack.c.b16 %v694, %v693
        %v721 = vpack.c.b16 %v696, %v695
        %v722 = vpack.c.b16 %v698, %v697
        %v723 = vpack.c.b16 %v700, %v699
        %v724 = vpack.c.b16 %v702, %v701
        %v725 = vpack.c.b16 %v704, %v703
        %v726 = vpack.c.b16 %v706, %v705
        %v727 = vpack.c.b16 %v708, %v707
        %v728 = vpack.c.b16 %v710, %v709
        %v729 = vpack.c.b16 %v712, %v711
        %v730 = vpack.c.b16 %v714, %v713
        %v735 = vunpack.c.l.b16 %v679
        %v736 = vunpack.c.l.b16 %v680
        %v737 = vunpack.c.l.b16 %v681
        %v738 = vunpack.c.l.b16 %v682
        %v739 = vpack.c.b16 %v736, %v735
        %v740 = vpack.c.b16 %v738, %v737
        %vm743 = vcmask 261120
        %v745 = vsel %vm743, %v715, 0
        %v748 = vsel %vm743, %v716, 0
        %v751 = vsel %vm743, %v717, 0
        %v754 = vsel %vm743, %v718, 0
        %v757 = vsel %vm743, %v719, 0
        %v760 = vsel %vm743, %v720, 0
        %v763 = vsel %vm743, %v721, 0
        %v766 = vsel %vm743, %v722, 0
        %v769 = vsel %vm743, %v723, 0
        %v772 = vsel %vm743, %v724, 0
        %v775 = vsel %vm743, %v725, 0
        %v778 = vsel %vm743, %v726, 0
        %v781 = vsel %vm743, %v727, 0
        %v784 = vsel %vm743, %v728, 0
        %v787 = vsel %vm743, %v729, 0
        %v790 = vsel %vm743, %v730, 0
        %792 = vmatprep.subr.bf16.mxu0 0
        %793 = vmatpush1.bf16.msra.mxu0 %v739
        %794 = vmatprep.subr.bf16.mxu0 0
        %795 = vmatpush1.bf16.msra.mxu0 %v740
        %796 = vmatprep.subr.bf16.mxu0 0
        %797 = vmatpush1.bf16.msra.mxu0 0
        %798 = vmatprep.subr.bf16.mxu0 0
        %799 = vmatpush1.bf16.msra.mxu0 0
        %800 = vmatprep.subr.bf16.mxu0 0
        %801 = vmatpush1.bf16.msra.mxu0 0
        %802 = vmatprep.subr.bf16.mxu0 0
        %803 = vmatpush1.bf16.msra.mxu0 0
        %804 = vmatprep.subr.bf16.mxu0 0
        %805 = vmatpush1.bf16.msra.mxu0 0
        %806 = vmatprep.subr.bf16.mxu0 0
        %807 = vmatpush1.bf16.msra.mxu0 0
        %808 = vmatprep.subr.bf16.mxu0 0
        %809 = vmatpush1.bf16.msra.mxu0 0
        %810 = vmatprep.subr.bf16.mxu0 0
        %811 = vmatpush1.bf16.msra.mxu0 0
        %812 = vmatprep.subr.bf16.mxu0 0
        %813 = vmatpush1.bf16.msra.mxu0 0
        %814 = vmatprep.subr.bf16.mxu0 0
        %815 = vmatpush1.bf16.msra.mxu0 0
        %816 = vmatprep.subr.bf16.mxu0 0
        %817 = vmatpush1.bf16.msra.mxu0 0
        %818 = vmatprep.subr.bf16.mxu0 0
        %819 = vmatpush1.bf16.msra.mxu0 0
        %820 = vmatprep.subr.bf16.mxu0 0
        %821 = vmatpush1.bf16.msra.mxu0 0
        %822 = vmatprep.subr.bf16.mxu0 0
        %823 = vmatpush1.bf16.msra.mxu0 0
        %824 = vmatprep.mubr.bf16.mxu0 0
        %825 = vmatmul.mubr.bf16.gmra.mrb[0].mxu0 %v745
        %v826 = vpop.f32.mrb[0].mxu0
        %v827 = vadd.f32 0.0, %v826
        %v828 = vpop.f32.mrb[0].mxu0
        %v829 = vpop.f32.mrb[0].mxu0
        %v830 = vadd.f32 0.0, %v829
        %v831 = vpop.f32.mrb[0].mxu0
        %832 = vmatprep.mubr.bf16.mxu0 0
        %833 = vmatmul.mubr.bf16.gmra.mrb[0].mxu0 %v748
        %v834 = vpop.f32.mrb[0].mxu0
        %v835 = vadd.f32 0.0, %v834
        %v836 = vpop.f32.mrb[0].mxu0
        %v837 = vpop.f32.mrb[0].mxu0
        %v838 = vadd.f32 0.0, %v837
        %v839 = vpop.f32.mrb[0].mxu0
        %840 = vmatprep.mubr.bf16.mxu0 0
        %841 = vmatmul.mubr.bf16.gmra.mrb[0].mxu0 %v751
        %v842 = vpop.f32.mrb[0].mxu0
        %v843 = vadd.f32 0.0, %v842
        %v844 = vpop.f32.mrb[0].mxu0
        %v845 = vpop.f32.mrb[0].mxu0
        %v846 = vadd.f32 0.0, %v845
        %v847 = vpop.f32.mrb[0].mxu0
        %848 = vmatprep.mubr.bf16.mxu0 0
        %849 = vmatmul.mubr.bf16.gmra.mrb[0].mxu0 %v754
        %v850 = vpop.f32.mrb[0].mxu0
        %v851 = vadd.f32 0.0, %v850
        %v852 = vpop.f32.mrb[0].mxu0
        %v853 = vpop.f32.mrb[0].mxu0
        %v854 = vadd.f32 0.0, %v853
        %v855 = vpop.f32.mrb[0].mxu0
        %856 = vmatprep.mubr.bf16.mxu0 0
        %857 = vmatmul.mubr.bf16.gmra.mrb[0].mxu0 %v757
        %v858 = vpop.f32.mrb[0].mxu0
        %v859 = vadd.f32 0.0, %v858
        %v860 = vpop.f32.mrb[0].mxu0
        %v861 = vpop.f32.mrb[0].mxu0
        %v862 = vadd.f32 0.0, %v861
        %v863 = vpop.f32.mrb[0].mxu0
        %864 = vmatprep.mubr.bf16.mxu0 0
        %865 = vmatmul.mubr.bf16.gmra.mrb[0].mxu0 %v760
        %v866 = vpop.f32.mrb[0].mxu0
        %v867 = vadd.f32 0.0, %v866
        %v868 = vpop.f32.mrb[0].mxu0
        %v869 = vpop.f32.mrb[0].mxu0
        %v870 = vadd.f32 0.0, %v869
        %v871 = vpop.f32.mrb[0].mxu0
        %872 = vmatprep.mubr.bf16.mxu0 0
        %873 = vmatmul.mubr.bf16.gmra.mrb[0].mxu0 %v763
        %v874 = vpop.f32.mrb[0].mxu0
        %v875 = vadd.f32 0.0, %v874
        %v876 = vpop.f32.mrb[0].mxu0
        %v877 = vpop.f32.mrb[0].mxu0
        %v878 = vadd.f32 0.0, %v877
        %v879 = vpop.f32.mrb[0].mxu0
        %880 = vmatprep.mubr.bf16.mxu0 0
        %881 = vmatmul.mubr.bf16.gmra.mrb[0].mxu0 %v766
        %v882 = vpop.f32.mrb[0].mxu0
        %v883 = vadd.f32 0.0, %v882
        %v884 = vpop.f32.mrb[0].mxu0
        %v885 = vpop.f32.mrb[0].mxu0
        %v886 = vadd.f32 0.0, %v885
        %v887 = vpop.f32.mrb[0].mxu0
        %888 = vmatprep.mubr.bf16.mxu0 0
        %889 = vmatmul.mubr.bf16.gmra.mrb[0].mxu0 %v769
        %v890 = vpop.f32.mrb[0].mxu0
        %v891 = vadd.f32 0.0, %v890
        %v892 = vpop.f32.mrb[0].mxu0
        %v893 = vpop.f32.mrb[0].mxu0
        %v894 = vadd.f32 0.0, %v893
        %v895 = vpop.f32.mrb[0].mxu0
        %896 = vmatprep.mubr.bf16.mxu0 0
        %897 = vmatmul.mubr.bf16.gmra.mrb[0].mxu0 %v772
        %v898 = vpop.f32.mrb[0].mxu0
        %v899 = vadd.f32 0.0, %v898
        %v900 = vpop.f32.mrb[0].mxu0
        %v901 = vpop.f32.mrb[0].mxu0
        %v902 = vadd.f32 0.0, %v901
        %v903 = vpop.f32.mrb[0].mxu0
        %904 = vmatprep.mubr.bf16.mxu0 0
        %905 = vmatmul.mubr.bf16.gmra.mrb[0].mxu0 %v775
        %v906 = vpop.f32.mrb[0].mxu0
        %v907 = vadd.f32 0.0, %v906
        %v908 = vpop.f32.mrb[0].mxu0
        %v909 = vpop.f32.mrb[0].mxu0
        %v910 = vadd.f32 0.0, %v909
        %v911 = vpop.f32.mrb[0].mxu0
        %912 = vmatprep.mubr.bf16.mxu0 0
        %913 = vmatmul.mubr.bf16.gmra.mrb[0].mxu0 %v778
        %v914 = vpop.f32.mrb[0].mxu0
        %v915 = vadd.f32 0.0, %v914
        %v916 = vpop.f32.mrb[0].mxu0
        %v917 = vpop.f32.mrb[0].mxu0
        %v918 = vadd.f32 0.0, %v917
        %v919 = vpop.f32.mrb[0].mxu0
        %920 = vmatprep.mubr.bf16.mxu0 0
        %921 = vmatmul.mubr.bf16.gmra.mrb[0].mxu0 %v781
        %v922 = vpop.f32.mrb[0].mxu0
        %v923 = vadd.f32 0.0, %v922
        %v924 = vpop.f32.mrb[0].mxu0
        %v925 = vpop.f32.mrb[0].mxu0
        %v926 = vadd.f32 0.0, %v925
        %v927 = vpop.f32.mrb[0].mxu0
        %928 = vmatprep.mubr.bf16.mxu0 0
        %929 = vmatmul.mubr.bf16.gmra.mrb[0].mxu0 %v784
        %v930 = vpop.f32.mrb[0].mxu0
        %v931 = vadd.f32 0.0, %v930
        %v932 = vpop.f32.mrb[0].mxu0
        %v933 = vpop.f32.mrb[0].mxu0
        %v934 = vadd.f32 0.0, %v933
        %v935 = vpop.f32.mrb[0].mxu0
        %936 = vmatprep.mubr.bf16.mxu0 0
        %937 = vmatmul.mubr.bf16.gmra.mrb[0].mxu0 %v787
        %v938 = vpop.f32.mrb[0].mxu0
        %v939 = vadd.f32 0.0, %v938
        %v940 = vpop.f32.mrb[0].mxu0
        %v941 = vpop.f32.mrb[0].mxu0
        %v942 = vadd.f32 0.0, %v941
        %v943 = vpop.f32.mrb[0].mxu0
        %944 = vmatprep.mubr.bf16.mxu0 0
        %945 = vmatmul.mubr.bf16.gmra.mrb[0].mxu0 %v790
        %v946 = vpop.f32.mrb[0].mxu0
        %v947 = vadd.f32 0.0, %v946
        %v948 = vpop.f32.mrb[0].mxu0
        %v949 = vpop.f32.mrb[0].mxu0
        %v950 = vadd.f32 0.0, %v949
        %v951 = vpop.f32.mrb[0].mxu0
        %952 = vdwg.mxu0
        %v985 = vunpack.c.l.b16 %v234
        %v986 = vunpack.c.l.b16 %v235
        %v987 = vunpack.c.l.b16 %v237
        %v988 = vunpack.c.l.b16 %v238
        %v989 = vunpack.c.l.b16 %v240
        %v990 = vunpack.c.l.b16 %v241
        %v991 = vunpack.c.l.b16 %v243
        %v992 = vunpack.c.l.b16 %v244
        %v993 = vunpack.c.l.b16 %v246
        %v994 = vunpack.c.l.b16 %v247
        %v995 = vunpack.c.l.b16 %v249
        %v996 = vunpack.c.l.b16 %v250
        %v997 = vunpack.c.l.b16 %v252
        %v998 = vunpack.c.l.b16 %v253
        %v999 = vunpack.c.l.b16 %v255
        %v1000 = vunpack.c.l.b16 %v256
        %v1001 = vunpack.c.l.b16 %v258
        %v1002 = vunpack.c.l.b16 %v259
        %v1003 = vunpack.c.l.b16 %v261
        %v1004 = vunpack.c.l.b16 %v262
        %v1005 = vunpack.c.l.b16 %v264
        %v1006 = vunpack.c.l.b16 %v265
        %v1007 = vunpack.c.l.b16 %v267
        %v1008 = vunpack.c.l.b16 %v268
        %v1009 = vunpack.c.l.b16 %v270
        %v1010 = vunpack.c.l.b16 %v271
        %v1011 = vunpack.c.l.b16 %v273
        %v1012 = vunpack.c.l.b16 %v274
        %v1013 = vunpack.c.l.b16 %v276
        %v1014 = vunpack.c.l.b16 %v277
        %v1015 = vunpack.c.l.b16 %v279
        %v1016 = vunpack.c.l.b16 %v280
        %v1017 = vpack.c.b16 %v986, %v985
        %v1018 = vpack.c.b16 %v988, %v987
        %v1019 = vpack.c.b16 %v990, %v989
        %v1020 = vpack.c.b16 %v992, %v991
        %v1021 = vpack.c.b16 %v994, %v993
        %v1022 = vpack.c.b16 %v996, %v995
        %v1023 = vpack.c.b16 %v998, %v997
        %v1024 = vpack.c.b16 %v1000, %v999
        %v1025 = vpack.c.b16 %v1002, %v1001
        %v1026 = vpack.c.b16 %v1004, %v1003
        %v1027 = vpack.c.b16 %v1006, %v1005
        %v1028 = vpack.c.b16 %v1008, %v1007
        %v1029 = vpack.c.b16 %v1010, %v1009
        %v1030 = vpack.c.b16 %v1012, %v1011
        %v1031 = vpack.c.b16 %v1014, %v1013
        %v1032 = vpack.c.b16 %v1016, %v1015
        %v1037 = vunpack.c.l.b16 %v288
        %v1038 = vunpack.c.l.b16 %v289
        %v1039 = vunpack.c.l.b16 %v290
        %v1040 = vunpack.c.l.b16 %v291
        %v1041 = vpack.c.b16 %v1038, %v1037
        %v1042 = vpack.c.b16 %v1040, %v1039
        %v1046 = vsel %vm743, %v1017, 0
        %v1049 = vsel %vm743, %v1018, 0
        %v1052 = vsel %vm743, %v1019, 0
        %v1055 = vsel %vm743, %v1020, 0
        %v1058 = vsel %vm743, %v1021, 0
        %v1061 = vsel %vm743, %v1022, 0
        %v1064 = vsel %vm743, %v1023, 0
        %v1067 = vsel %vm743, %v1024, 0
        %v1070 = vsel %vm743, %v1025, 0
        %v1073 = vsel %vm743, %v1026, 0
        %v1076 = vsel %vm743, %v1027, 0
        %v1079 = vsel %vm743, %v1028, 0
        %v1082 = vsel %vm743, %v1029, 0
        %v1085 = vsel %vm743, %v1030, 0
        %v1088 = vsel %vm743, %v1031, 0
        %v1091 = vsel %vm743, %v1032, 0
        %1093 = vmatprep.subr.bf16.mxu0 0
        %1094 = vmatpush1.bf16.msra.mxu0 %v1041
        %1095 = vmatprep.subr.bf16.mxu0 0
        %1096 = vmatpush1.bf16.msra.mxu0 %v1042
        %1097 = vmatprep.subr.bf16.mxu0 0
        %1098 = vmatpush1.bf16.msra.mxu0 0
        %1099 = vmatprep.subr.bf16.mxu0 0
        %1100 = vmatpush1.bf16.msra.mxu0 0
        %1101 = vmatprep.subr.bf16.mxu0 0
        %1102 = vmatpush1.bf16.msra.mxu0 0
        %1103 = vmatprep.subr.bf16.mxu0 0
        %1104 = vmatpush1.bf16.msra.mxu0 0
        %1105 = vmatprep.subr.bf16.mxu0 0
        %1106 = vmatpush1.bf16.msra.mxu0 0
        %1107 = vmatprep.subr.bf16.mxu0 0
        %1108 = vmatpush1.bf16.msra.mxu0 0
        %1109 = vmatprep.subr.bf16.mxu0 0
        %1110 = vmatpush1.bf16.msra.mxu0 0
        %1111 = vmatprep.subr.bf16.mxu0 0
        %1112 = vmatpush1.bf16.msra.mxu0 0
        %1113 = vmatprep.subr.bf16.mxu0 0
        %1114 = vmatpush1.bf16.msra.mxu0 0
        %1115 = vmatprep.subr.bf16.mxu0 0
        %1116 = vmatpush1.bf16.msra.mxu0 0
        %1117 = vmatprep.subr.bf16.mxu0 0
        %1118 = vmatpush1.bf16.msra.mxu0 0
        %1119 = vmatprep.subr.bf16.mxu0 0
        %1120 = vmatpush1.bf16.msra.mxu0 0
        %1121 = vmatprep.subr.bf16.mxu0 0
        %1122 = vmatpush1.bf16.msra.mxu0 0
        %1123 = vmatprep.subr.bf16.mxu0 0
        %1124 = vmatpush1.bf16.msra.mxu0 0
        %1125 = vmatprep.mubr.bf16.mxu0 0
        %1126 = vmatmul.mubr.bf16.gmra.mrb[0].mxu0 %v1046
        %v1127 = vpop.f32.mrb[0].mxu0
        %v1128 = vadd.f32 %v827, %v1127
        %v1129 = vpop.f32.mrb[0].mxu0
        %v1130 = vpop.f32.mrb[0].mxu0
        %v1131 = vadd.f32 %v830, %v1130
        %v1132 = vpop.f32.mrb[0].mxu0
        %1133 = vmatprep.mubr.bf16.mxu0 0
        %1134 = vmatmul.mubr.bf16.gmra.mrb[0].mxu0 %v1049
        %v1135 = vpop.f32.mrb[0].mxu0
        %v1136 = vadd.f32 %v835, %v1135
        %v1137 = vpop.f32.mrb[0].mxu0
        %v1138 = vpop.f32.mrb[0].mxu0
        %v1139 = vadd.f32 %v838, %v1138
        %v1140 = vpop.f32.mrb[0].mxu0
        %1141 = vmatprep.mubr.bf16.mxu0 0
        %1142 = vmatmul.mubr.bf16.gmra.mrb[0].mxu0 %v1052
        %v1143 = vpop.f32.mrb[0].mxu0
        %v1144 = vadd.f32 %v843, %v1143
        %v1145 = vpop.f32.mrb[0].mxu0
        %v1146 = vpop.f32.mrb[0].mxu0
        %v1147 = vadd.f32 %v846, %v1146
        %v1148 = vpop.f32.mrb[0].mxu0
        %1149 = vmatprep.mubr.bf16.mxu0 0
        %1150 = vmatmul.mubr.bf16.gmra.mrb[0].mxu0 %v1055
        %v1151 = vpop.f32.mrb[0].mxu0
        %v1152 = vadd.f32 %v851, %v1151
        %v1153 = vpop.f32.mrb[0].mxu0
        %v1154 = vpop.f32.mrb[0].mxu0
        %v1155 = vadd.f32 %v854, %v1154
        %v1156 = vpop.f32.mrb[0].mxu0
        %1157 = vmatprep.mubr.bf16.mxu0 0
        %1158 = vmatmul.mubr.bf16.gmra.mrb[0].mxu0 %v1058
        %v1159 = vpop.f32.mrb[0].mxu0
        %v1160 = vadd.f32 %v859, %v1159
        %v1161 = vpop.f32.mrb[0].mxu0
        %v1162 = vpop.f32.mrb[0].mxu0
        %v1163 = vadd.f32 %v862, %v1162
        %v1164 = vpop.f32.mrb[0].mxu0
        %1165 = vmatprep.mubr.bf16.mxu0 0
        %1166 = vmatmul.mubr.bf16.gmra.mrb[0].mxu0 %v1061
        %v1167 = vpop.f32.mrb[0].mxu0
        %v1168 = vadd.f32 %v867, %v1167
        %v1169 = vpop.f32.mrb[0].mxu0
        %v1170 = vpop.f32.mrb[0].mxu0
        %v1171 = vadd.f32 %v870, %v1170
        %v1172 = vpop.f32.mrb[0].mxu0
        %1173 = vmatprep.mubr.bf16.mxu0 0
        %1174 = vmatmul.mubr.bf16.gmra.mrb[0].mxu0 %v1064
        %v1175 = vpop.f32.mrb[0].mxu0
        %v1176 = vadd.f32 %v875, %v1175
        %v1177 = vpop.f32.mrb[0].mxu0
        %v1178 = vpop.f32.mrb[0].mxu0
        %v1179 = vadd.f32 %v878, %v1178
        %v1180 = vpop.f32.mrb[0].mxu0
        %1181 = vmatprep.mubr.bf16.mxu0 0
        %1182 = vmatmul.mubr.bf16.gmra.mrb[0].mxu0 %v1067
        %v1183 = vpop.f32.mrb[0].mxu0
        %v1184 = vadd.f32 %v883, %v1183
        %v1185 = vpop.f32.mrb[0].mxu0
        %v1186 = vpop.f32.mrb[0].mxu0
        %v1187 = vadd.f32 %v886, %v1186
        %v1188 = vpop.f32.mrb[0].mxu0
        %1189 = vmatprep.mubr.bf16.mxu0 0
        %1190 = vmatmul.mubr.bf16.gmra.mrb[0].mxu0 %v1070
        %v1191 = vpop.f32.mrb[0].mxu0
        %v1192 = vadd.f32 %v891, %v1191
        %v1193 = vpop.f32.mrb[0].mxu0
        %v1194 = vpop.f32.mrb[0].mxu0
        %v1195 = vadd.f32 %v894, %v1194
        %v1196 = vpop.f32.mrb[0].mxu0
        %1197 = vmatprep.mubr.bf16.mxu0 0
        %1198 = vmatmul.mubr.bf16.gmra.mrb[0].mxu0 %v1073
        %v1199 = vpop.f32.mrb[0].mxu0
        %v1200 = vadd.f32 %v899, %v1199
        %v1201 = vpop.f32.mrb[0].mxu0
        %v1202 = vpop.f32.mrb[0].mxu0
        %v1203 = vadd.f32 %v902, %v1202
        %v1204 = vpop.f32.mrb[0].mxu0
        %1205 = vmatprep.mubr.bf16.mxu0 0
        %1206 = vmatmul.mubr.bf16.gmra.mrb[0].mxu0 %v1076
        %v1207 = vpop.f32.mrb[0].mxu0
        %v1208 = vadd.f32 %v907, %v1207
        %v1209 = vpop.f32.mrb[0].mxu0
        %v1210 = vpop.f32.mrb[0].mxu0
        %v1211 = vadd.f32 %v910, %v1210
        %v1212 = vpop.f32.mrb[0].mxu0
        %1213 = vmatprep.mubr.bf16.mxu0 0
        %1214 = vmatmul.mubr.bf16.gmra.mrb[0].mxu0 %v1079
        %v1215 = vpop.f32.mrb[0].mxu0
        %v1216 = vadd.f32 %v915, %v1215
        %v1217 = vpop.f32.mrb[0].mxu0
        %v1218 = vpop.f32.mrb[0].mxu0
        %v1219 = vadd.f32 %v918, %v1218
        %v1220 = vpop.f32.mrb[0].mxu0
        %1221 = vmatprep.mubr.bf16.mxu0 0
        %1222 = vmatmul.mubr.bf16.gmra.mrb[0].mxu0 %v1082
        %v1223 = vpop.f32.mrb[0].mxu0
        %v1224 = vadd.f32 %v923, %v1223
        %v1225 = vpop.f32.mrb[0].mxu0
        %v1226 = vpop.f32.mrb[0].mxu0
        %v1227 = vadd.f32 %v926, %v1226
        %v1228 = vpop.f32.mrb[0].mxu0
        %1229 = vmatprep.mubr.bf16.mxu0 0
        %1230 = vmatmul.mubr.bf16.gmra.mrb[0].mxu0 %v1085
        %v1231 = vpop.f32.mrb[0].mxu0
        %v1232 = vadd.f32 %v931, %v1231
        %v1233 = vpop.f32.mrb[0].mxu0
        %v1234 = vpop.f32.mrb[0].mxu0
        %v1235 = vadd.f32 %v934, %v1234
        %v1236 = vpop.f32.mrb[0].mxu0
        %1237 = vmatprep.mubr.bf16.mxu0 0
        %1238 = vmatmul.mubr.bf16.gmra.mrb[0].mxu0 %v1088
        %v1239 = vpop.f32.mrb[0].mxu0
        %v1240 = vadd.f32 %v939, %v1239
        %v1241 = vpop.f32.mrb[0].mxu0
        %v1242 = vpop.f32.mrb[0].mxu0
        %v1243 = vadd.f32 %v942, %v1242
        %v1244 = vpop.f32.mrb[0].mxu0
        %1245 = vmatprep.mubr.bf16.mxu0 0
        %1246 = vmatmul.mubr.bf16.gmra.mrb[0].mxu0 %v1091
        %v1247 = vpop.f32.mrb[0].mxu0
        %v1248 = vadd.f32 %v947, %v1247
        %v1249 = vpop.f32.mrb[0].mxu0
        %v1250 = vpop.f32.mrb[0].mxu0
        %v1251 = vadd.f32 %v950, %v1250
        %v1252 = vpop.f32.mrb[0].mxu0
        %1253 = vdwg.mxu0
        %vm1270 = vcmask 1042432
        %vm1271 = vcmask 1046532
        %vm1272 = vmor %vm1270, %vm1271
        %v1273 = vrot.slane %v234, 5
        %v1274 = vrot.slane %v1273, 4
        %v1275 = vrot.slane %v235, 5
        %v1276 = vsel %vm1272, %v1274, %v1275
        %v1277 = vrot.slane %v1275, 4
        %v1278 = vrot.slane %v236, 5
        %v1279 = vsel %vm1272, %v1277, %v1278
        %v1280 = vrot.slane %v237, 5
        %v1281 = vrot.slane %v1280, 4
        %v1282 = vrot.slane %v238, 5
        %v1283 = vsel %vm1272, %v1281, %v1282
        %v1284 = vrot.slane %v1282, 4
        %v1285 = vrot.slane %v239, 5
        %v1286 = vsel %vm1272, %v1284, %v1285
        %v1287 = vrot.slane %v240, 5
        %v1288 = vrot.slane %v1287, 4
        %v1289 = vrot.slane %v241, 5
        %v1290 = vsel %vm1272, %v1288, %v1289
        %v1291 = vrot.slane %v1289, 4
        %v1292 = vrot.slane %v242, 5
        %v1293 = vsel %vm1272, %v1291, %v1292
        %v1294 = vrot.slane %v243, 5
        %v1295 = vrot.slane %v1294, 4
        %v1296 = vrot.slane %v244, 5
        %v1297 = vsel %vm1272, %v1295, %v1296
        %v1298 = vrot.slane %v1296, 4
        %v1299 = vrot.slane %v245, 5
        %v1300 = vsel %vm1272, %v1298, %v1299
        %v1301 = vrot.slane %v246, 5
        %v1302 = vrot.slane %v1301, 4
        %v1303 = vrot.slane %v247, 5
        %v1304 = vsel %vm1272, %v1302, %v1303
        %v1305 = vrot.slane %v1303, 4
        %v1306 = vrot.slane %v248, 5
        %v1307 = vsel %vm1272, %v1305, %v1306
        %v1308 = vrot.slane %v249, 5
        %v1309 = vrot.slane %v1308, 4
        %v1310 = vrot.slane %v250, 5
        %v1311 = vsel %vm1272, %v1309, %v1310
        %v1312 = vrot.slane %v1310, 4
        %v1313 = vrot.slane %v251, 5
        %v1314 = vsel %vm1272, %v1312, %v1313
        %v1315 = vrot.slane %v252, 5
        %v1316 = vrot.slane %v1315, 4
        %v1317 = vrot.slane %v253, 5
        %v1318 = vsel %vm1272, %v1316, %v1317
        %v1319 = vrot.slane %v1317, 4
        %v1320 = vrot.slane %v254, 5
        %v1321 = vsel %vm1272, %v1319, %v1320
        %v1322 = vrot.slane %v255, 5
        %v1323 = vrot.slane %v1322, 4
        %v1324 = vrot.slane %v256, 5
        %v1325 = vsel %vm1272, %v1323, %v1324
        %v1326 = vrot.slane %v1324, 4
        %v1327 = vrot.slane %v257, 5
        %v1328 = vsel %vm1272, %v1326, %v1327
        %v1329 = vrot.slane %v258, 5
        %v1330 = vrot.slane %v1329, 4
        %v1331 = vrot.slane %v259, 5
        %v1332 = vsel %vm1272, %v1330, %v1331
        %v1333 = vrot.slane %v1331, 4
        %v1334 = vrot.slane %v260, 5
        %v1335 = vsel %vm1272, %v1333, %v1334
        %v1336 = vrot.slane %v261, 5
        %v1337 = vrot.slane %v1336, 4
        %v1338 = vrot.slane %v262, 5
        %v1339 = vsel %vm1272, %v1337, %v1338
        %v1340 = vrot.slane %v1338, 4
        %v1341 = vrot.slane %v263, 5
        %v1342 = vsel %vm1272, %v1340, %v1341
        %v1343 = vrot.slane %v264, 5
        %v1344 = vrot.slane %v1343, 4
        %v1345 = vrot.slane %v265, 5
        %v1346 = vsel %vm1272, %v1344, %v1345
        %v1347 = vrot.slane %v1345, 4
        %v1348 = vrot.slane %v266, 5
        %v1349 = vsel %vm1272, %v1347, %v1348
        %v1350 = vrot.slane %v267, 5
        %v1351 = vrot.slane %v1350, 4
        %v1352 = vrot.slane %v268, 5
        %v1353 = vsel %vm1272, %v1351, %v1352
        %v1354 = vrot.slane %v1352, 4
        %v1355 = vrot.slane %v269, 5
        %v1356 = vsel %vm1272, %v1354, %v1355
        %v1357 = vrot.slane %v270, 5
        %v1358 = vrot.slane %v1357, 4
        %v1359 = vrot.slane %v271, 5
        %v1360 = vsel %vm1272, %v1358, %v1359
        %v1361 = vrot.slane %v1359, 4
        %v1362 = vrot.slane %v272, 5
        %v1363 = vsel %vm1272, %v1361, %v1362
        %v1364 = vrot.slane %v273, 5
        %v1365 = vrot.slane %v1364, 4
        %v1366 = vrot.slane %v274, 5
        %v1367 = vsel %vm1272, %v1365, %v1366
        %v1368 = vrot.slane %v1366, 4
        %v1369 = vrot.slane %v275, 5
        %v1370 = vsel %vm1272, %v1368, %v1369
        %v1371 = vrot.slane %v276, 5
        %v1372 = vrot.slane %v1371, 4
        %v1373 = vrot.slane %v277, 5
        %v1374 = vsel %vm1272, %v1372, %v1373
        %v1375 = vrot.slane %v1373, 4
        %v1376 = vrot.slane %v278, 5
        %v1377 = vsel %vm1272, %v1375, %v1376
        %v1378 = vrot.slane %v279, 5
        %v1379 = vrot.slane %v1378, 4
        %v1380 = vrot.slane %v280, 5
        %v1381 = vsel %vm1272, %v1379, %v1380
        %v1382 = vrot.slane %v1380, 4
        %v1383 = vrot.slane %v281, 5
        %v1384 = vsel %vm1272, %v1382, %v1383
        %v1385 = vld [vmem:[#allocation2 + $0x20] sm:$0xf]
        %v1386 = vld [vmem:[#allocation2 + $0x24] sm:$0xf]
        %v1387 = vld [vmem:[#allocation2 + $0x28] sm:$0xf]
        %v1388 = vld [vmem:[#allocation2 + $0x2c] sm:$0xf]
        %v1389 = vunpack.c.l.b16 %v1276
        %v1390 = vunpack.c.l.b16 %v1279
        %v1391 = vunpack.c.l.b16 %v1283
        %v1392 = vunpack.c.l.b16 %v1286
        %v1393 = vunpack.c.l.b16 %v1290
        %v1394 = vunpack.c.l.b16 %v1293
        %v1395 = vunpack.c.l.b16 %v1297
        %v1396 = vunpack.c.l.b16 %v1300
        %v1397 = vunpack.c.l.b16 %v1304
        %v1398 = vunpack.c.l.b16 %v1307
        %v1399 = vunpack.c.l.b16 %v1311
        %v1400 = vunpack.c.l.b16 %v1314
        %v1401 = vunpack.c.l.b16 %v1318
        %v1402 = vunpack.c.l.b16 %v1321
        %v1403 = vunpack.c.l.b16 %v1325
        %v1404 = vunpack.c.l.b16 %v1328
        %v1405 = vunpack.c.l.b16 %v1332
        %v1406 = vunpack.c.l.b16 %v1335
        %v1407 = vunpack.c.l.b16 %v1339
        %v1408 = vunpack.c.l.b16 %v1342
        %v1409 = vunpack.c.l.b16 %v1346
        %v1410 = vunpack.c.l.b16 %v1349
        %v1411 = vunpack.c.l.b16 %v1353
        %v1412 = vunpack.c.l.b16 %v1356
        %v1413 = vunpack.c.l.b16 %v1360
        %v1414 = vunpack.c.l.b16 %v1363
        %v1415 = vunpack.c.l.b16 %v1367
        %v1416 = vunpack.c.l.b16 %v1370
        %v1417 = vunpack.c.l.b16 %v1374
        %v1418 = vunpack.c.l.b16 %v1377
        %v1419 = vunpack.c.l.b16 %v1381
        %v1420 = vunpack.c.l.b16 %v1384
        %v1421 = vpack.c.b16 %v1390, %v1389
        %v1422 = vpack.c.b16 %v1392, %v1391
        %v1423 = vpack.c.b16 %v1394, %v1393
        %v1424 = vpack.c.b16 %v1396, %v1395
        %v1425 = vpack.c.b16 %v1398, %v1397
        %v1426 = vpack.c.b16 %v1400, %v1399
        %v1427 = vpack.c.b16 %v1402, %v1401
        %v1428 = vpack.c.b16 %v1404, %v1403
        %v1429 = vpack.c.b16 %v1406, %v1405
        %v1430 = vpack.c.b16 %v1408, %v1407
        %v1431 = vpack.c.b16 %v1410, %v1409
        %v1432 = vpack.c.b16 %v1412, %v1411
        %v1433 = vpack.c.b16 %v1414, %v1413
        %v1434 = vpack.c.b16 %v1416, %v1415
        %v1435 = vpack.c.b16 %v1418, %v1417
        %v1436 = vpack.c.b16 %v1420, %v1419
        %v1441 = vunpack.c.l.b16 %v1385
        %v1442 = vunpack.c.l.b16 %v1386
        %v1443 = vunpack.c.l.b16 %v1387
        %v1444 = vunpack.c.l.b16 %v1388
        %v1445 = vpack.c.b16 %v1442, %v1441
        %v1446 = vpack.c.b16 %v1444, %v1443
        %v1450 = vsel %vm743, %v1421, 0
        %v1453 = vsel %vm743, %v1422, 0
        %v1456 = vsel %vm743, %v1423, 0
        %v1459 = vsel %vm743, %v1424, 0
        %v1462 = vsel %vm743, %v1425, 0
        %v1465 = vsel %vm743, %v1426, 0
        %v1468 = vsel %vm743, %v1427, 0
        %v1471 = vsel %vm743, %v1428, 0
        %v1474 = vsel %vm743, %v1429, 0
        %v1477 = vsel %vm743, %v1430, 0
        %v1480 = vsel %vm743, %v1431, 0
        %v1483 = vsel %vm743, %v1432, 0
        %v1486 = vsel %vm743, %v1433, 0
        %v1489 = vsel %vm743, %v1434, 0
        %v1492 = vsel %vm743, %v1435, 0
        %v1495 = vsel %vm743, %v1436, 0
        %1497 = vmatprep.subr.bf16.mxu0 0
        %1498 = vmatpush1.bf16.msra.mxu0 %v1445
        %1499 = vmatprep.subr.bf16.mxu0 0
        %1500 = vmatpush1.bf16.msra.mxu0 %v1446
        %1501 = vmatprep.subr.bf16.mxu0 0
        %1502 = vmatpush1.bf16.msra.mxu0 0
        %1503 = vmatprep.subr.bf16.mxu0 0
        %1504 = vmatpush1.bf16.msra.mxu0 0
        %1505 = vmatprep.subr.bf16.mxu0 0
        %1506 = vmatpush1.bf16.msra.mxu0 0
        %1507 = vmatprep.subr.bf16.mxu0 0
        %1508 = vmatpush1.bf16.msra.mxu0 0
        %1509 = vmatprep.subr.bf16.mxu0 0
        %1510 = vmatpush1.bf16.msra.mxu0 0
        %1511 = vmatprep.subr.bf16.mxu0 0
        %1512 = vmatpush1.bf16.msra.mxu0 0
        %1513 = vmatprep.subr.bf16.mxu0 0
        %1514 = vmatpush1.bf16.msra.mxu0 0
        %1515 = vmatprep.subr.bf16.mxu0 0
        %1516 = vmatpush1.bf16.msra.mxu0 0
        %1517 = vmatprep.subr.bf16.mxu0 0
        %1518 = vmatpush1.bf16.msra.mxu0 0
        %1519 = vmatprep.subr.bf16.mxu0 0
        %1520 = vmatpush1.bf16.msra.mxu0 0
        %1521 = vmatprep.subr.bf16.mxu0 0
        %1522 = vmatpush1.bf16.msra.mxu0 0
        %1523 = vmatprep.subr.bf16.mxu0 0
        %1524 = vmatpush1.bf16.msra.mxu0 0
        %1525 = vmatprep.subr.bf16.mxu0 0
        %1526 = vmatpush1.bf16.msra.mxu0 0
        %1527 = vmatprep.subr.bf16.mxu0 0
        %1528 = vmatpush1.bf16.msra.mxu0 0
        %1529 = vmatprep.mubr.bf16.mxu0 0
        %1530 = vmatmul.mubr.bf16.gmra.mrb[0].mxu0 %v1450
        %v1531 = vpop.f32.mrb[0].mxu0
        %v1532 = vadd.f32 0.0, %v1531
        %v1533 = vpop.f32.mrb[0].mxu0
        %v1534 = vpop.f32.mrb[0].mxu0
        %v1535 = vadd.f32 0.0, %v1534
        %v1536 = vpop.f32.mrb[0].mxu0
        %1537 = vmatprep.mubr.bf16.mxu0 0
        %1538 = vmatmul.mubr.bf16.gmra.mrb[0].mxu0 %v1453
        %v1539 = vpop.f32.mrb[0].mxu0
        %v1540 = vadd.f32 0.0, %v1539
        %v1541 = vpop.f32.mrb[0].mxu0
        %v1542 = vpop.f32.mrb[0].mxu0
        %v1543 = vadd.f32 0.0, %v1542
        %v1544 = vpop.f32.mrb[0].mxu0
        %1545 = vmatprep.mubr.bf16.mxu0 0
        %1546 = vmatmul.mubr.bf16.gmra.mrb[0].mxu0 %v1456
        %v1547 = vpop.f32.mrb[0].mxu0
        %v1548 = vadd.f32 0.0, %v1547
        %v1549 = vpop.f32.mrb[0].mxu0
        %v1550 = vpop.f32.mrb[0].mxu0
        %v1551 = vadd.f32 0.0, %v1550
        %v1552 = vpop.f32.mrb[0].mxu0
        %1553 = vmatprep.mubr.bf16.mxu0 0
        %1554 = vmatmul.mubr.bf16.gmra.mrb[0].mxu0 %v1459
        %v1555 = vpop.f32.mrb[0].mxu0
        %v1556 = vadd.f32 0.0, %v1555
        %v1557 = vpop.f32.mrb[0].mxu0
        %v1558 = vpop.f32.mrb[0].mxu0
        %v1559 = vadd.f32 0.0, %v1558
        %v1560 = vpop.f32.mrb[0].mxu0
        %1561 = vmatprep.mubr.bf16.mxu0 0
        %1562 = vmatmul.mubr.bf16.gmra.mrb[0].mxu0 %v1462
        %v1563 = vpop.f32.mrb[0].mxu0
        %v1564 = vadd.f32 0.0, %v1563
        %v1565 = vpop.f32.mrb[0].mxu0
        %v1566 = vpop.f32.mrb[0].mxu0
        %v1567 = vadd.f32 0.0, %v1566
        %v1568 = vpop.f32.mrb[0].mxu0
        %1569 = vmatprep.mubr.bf16.mxu0 0
        %1570 = vmatmul.mubr.bf16.gmra.mrb[0].mxu0 %v1465
        %v1571 = vpop.f32.mrb[0].mxu0
        %v1572 = vadd.f32 0.0, %v1571
        %v1573 = vpop.f32.mrb[0].mxu0
        %v1574 = vpop.f32.mrb[0].mxu0
        %v1575 = vadd.f32 0.0, %v1574
        %v1576 = vpop.f32.mrb[0].mxu0
        %1577 = vmatprep.mubr.bf16.mxu0 0
        %1578 = vmatmul.mubr.bf16.gmra.mrb[0].mxu0 %v1468
        %v1579 = vpop.f32.mrb[0].mxu0
        %v1580 = vadd.f32 0.0, %v1579
        %v1581 = vpop.f32.mrb[0].mxu0
        %v1582 = vpop.f32.mrb[0].mxu0
        %v1583 = vadd.f32 0.0, %v1582
        %v1584 = vpop.f32.mrb[0].mxu0
        %1585 = vmatprep.mubr.bf16.mxu0 0
        %1586 = vmatmul.mubr.bf16.gmra.mrb[0].mxu0 %v1471
        %v1587 = vpop.f32.mrb[0].mxu0
        %v1588 = vadd.f32 0.0, %v1587
        %v1589 = vpop.f32.mrb[0].mxu0
        %v1590 = vpop.f32.mrb[0].mxu0
        %v1591 = vadd.f32 0.0, %v1590
        %v1592 = vpop.f32.mrb[0].mxu0
        %1593 = vmatprep.mubr.bf16.mxu0 0
        %1594 = vmatmul.mubr.bf16.gmra.mrb[0].mxu0 %v1474
        %v1595 = vpop.f32.mrb[0].mxu0
        %v1596 = vadd.f32 0.0, %v1595
        %v1597 = vpop.f32.mrb[0].mxu0
        %v1598 = vpop.f32.mrb[0].mxu0
        %v1599 = vadd.f32 0.0, %v1598
        %v1600 = vpop.f32.mrb[0].mxu0
        %1601 = vmatprep.mubr.bf16.mxu0 0
        %1602 = vmatmul.mubr.bf16.gmra.mrb[0].mxu0 %v1477
        %v1603 = vpop.f32.mrb[0].mxu0
        %v1604 = vadd.f32 0.0, %v1603
        %v1605 = vpop.f32.mrb[0].mxu0
        %v1606 = vpop.f32.mrb[0].mxu0
        %v1607 = vadd.f32 0.0, %v1606
        %v1608 = vpop.f32.mrb[0].mxu0
        %1609 = vmatprep.mubr.bf16.mxu0 0
        %1610 = vmatmul.mubr.bf16.gmra.mrb[0].mxu0 %v1480
        %v1611 = vpop.f32.mrb[0].mxu0
        %v1612 = vadd.f32 0.0, %v1611
        %v1613 = vpop.f32.mrb[0].mxu0
        %v1614 = vpop.f32.mrb[0].mxu0
        %v1615 = vadd.f32 0.0, %v1614
        %v1616 = vpop.f32.mrb[0].mxu0
        %1617 = vmatprep.mubr.bf16.mxu0 0
        %1618 = vmatmul.mubr.bf16.gmra.mrb[0].mxu0 %v1483
        %v1619 = vpop.f32.mrb[0].mxu0
        %v1620 = vadd.f32 0.0, %v1619
        %v1621 = vpop.f32.mrb[0].mxu0
        %v1622 = vpop.f32.mrb[0].mxu0
        %v1623 = vadd.f32 0.0, %v1622
        %v1624 = vpop.f32.mrb[0].mxu0
        %1625 = vmatprep.mubr.bf16.mxu0 0
        %1626 = vmatmul.mubr.bf16.gmra.mrb[0].mxu0 %v1486
        %v1627 = vpop.f32.mrb[0].mxu0
        %v1628 = vadd.f32 0.0, %v1627
        %v1629 = vpop.f32.mrb[0].mxu0
        %v1630 = vpop.f32.mrb[0].mxu0
        %v1631 = vadd.f32 0.0, %v1630
        %v1632 = vpop.f32.mrb[0].mxu0
        %1633 = vmatprep.mubr.bf16.mxu0 0
        %1634 = vmatmul.mubr.bf16.gmra.mrb[0].mxu0 %v1489
        %v1635 = vpop.f32.mrb[0].mxu0
        %v1636 = vadd.f32 0.0, %v1635
        %v1637 = vpop.f32.mrb[0].mxu0
        %v1638 = vpop.f32.mrb[0].mxu0
        %v1639 = vadd.f32 0.0, %v1638
        %v1640 = vpop.f32.mrb[0].mxu0
        %1641 = vmatprep.mubr.bf16.mxu0 0
        %1642 = vmatmul.mubr.bf16.gmra.mrb[0].mxu0 %v1492
        %v1643 = vpop.f32.mrb[0].mxu0
        %v1644 = vadd.f32 0.0, %v1643
        %v1645 = vpop.f32.mrb[0].mxu0
        %v1646 = vpop.f32.mrb[0].mxu0
        %v1647 = vadd.f32 0.0, %v1646
        %v1648 = vpop.f32.mrb[0].mxu0
        %1649 = vmatprep.mubr.bf16.mxu0 0
        %1650 = vmatmul.mubr.bf16.gmra.mrb[0].mxu0 %v1495
        %v1651 = vpop.f32.mrb[0].mxu0
        %v1652 = vadd.f32 0.0, %v1651
        %v1653 = vpop.f32.mrb[0].mxu0
        %v1654 = vpop.f32.mrb[0].mxu0
        %v1655 = vadd.f32 0.0, %v1654
        %v1656 = vpop.f32.mrb[0].mxu0
        %1657 = vdwg.mxu0
        %v1658 = vadd.f32 %v1128, %v1532
        %v1659 = vadd.f32 %v1131, %v1535
        %v1660 = vadd.f32 %v1136, %v1540
        %v1661 = vadd.f32 %v1139, %v1543
        %v1662 = vadd.f32 %v1144, %v1548
        %v1663 = vadd.f32 %v1147, %v1551
        %v1664 = vadd.f32 %v1152, %v1556
        %v1665 = vadd.f32 %v1155, %v1559
        %v1666 = vadd.f32 %v1160, %v1564
        %v1667 = vadd.f32 %v1163, %v1567
        %v1668 = vadd.f32 %v1168, %v1572
        %v1669 = vadd.f32 %v1171, %v1575
        %v1670 = vadd.f32 %v1176, %v1580
        %v1671 = vadd.f32 %v1179, %v1583
        %v1672 = vadd.f32 %v1184, %v1588
        %v1673 = vadd.f32 %v1187, %v1591
        %v1674 = vadd.f32 %v1192, %v1596
        %v1675 = vadd.f32 %v1195, %v1599
        %v1676 = vadd.f32 %v1200, %v1604
        %v1677 = vadd.f32 %v1203, %v1607
        %v1678 = vadd.f32 %v1208, %v1612
        %v1679 = vadd.f32 %v1211, %v1615
        %v1680 = vadd.f32 %v1216, %v1620
        %v1681 = vadd.f32 %v1219, %v1623
        %v1682 = vadd.f32 %v1224, %v1628
        %v1683 = vadd.f32 %v1227, %v1631
        %v1684 = vadd.f32 %v1232, %v1636
        %v1685 = vadd.f32 %v1235, %v1639
        %v1686 = vadd.f32 %v1240, %v1644
        %v1687 = vadd.f32 %v1243, %v1647
        %v1688 = vadd.f32 %v1248, %v1652
        %v1689 = vadd.f32 %v1251, %v1655
        %v1690 = vld [vmem:[#allocation2 + $0x30] sm:$0xf]
        %v1691 = vld [vmem:[#allocation2 + $0x34] sm:$0xf]
        %v1692 = vld [vmem:[#allocation2 + $0x38] sm:$0xf]
        %v1693 = vld [vmem:[#allocation2 + $0x3c] sm:$0xf]
        %v1696 = vunpack.c.l.b16 %v282
        %v1697 = vunpack.c.l.b16 %v283
        %v1698 = vpack.c.b16 %v1697, %v1696
        %v1703 = vunpack.c.l.b16 %v1690
        %v1704 = vunpack.c.l.b16 %v1691
        %v1705 = vunpack.c.l.b16 %v1692
        %v1706 = vunpack.c.l.b16 %v1693
        %v1707 = vpack.c.b16 %v1704, %v1703
        %v1708 = vpack.c.b16 %v1706, %v1705
        %v1712 = vsel %vm743, %v1698, 0
        %1714 = vmatprep.subr.bf16.mxu0 0
        %1715 = vmatpush1.bf16.msra.mxu0 %v1707
        %1716 = vmatprep.subr.bf16.mxu0 0
        %1717 = vmatpush1.bf16.msra.mxu0 %v1708
        %1718 = vmatprep.subr.bf16.mxu0 0
        %1719 = vmatpush1.bf16.msra.mxu0 0
        %1720 = vmatprep.subr.bf16.mxu0 0
        %1721 = vmatpush1.bf16.msra.mxu0 0
        %1722 = vmatprep.subr.bf16.mxu0 0
        %1723 = vmatpush1.bf16.msra.mxu0 0
        %1724 = vmatprep.subr.bf16.mxu0 0
        %1725 = vmatpush1.bf16.msra.mxu0 0
        %1726 = vmatprep.subr.bf16.mxu0 0
        %1727 = vmatpush1.bf16.msra.mxu0 0
        %1728 = vmatprep.subr.bf16.mxu0 0
        %1729 = vmatpush1.bf16.msra.mxu0 0
        %1730 = vmatprep.subr.bf16.mxu0 0
        %1731 = vmatpush1.bf16.msra.mxu0 0
        %1732 = vmatprep.subr.bf16.mxu0 0
        %1733 = vmatpush1.bf16.msra.mxu0 0
        %1734 = vmatprep.subr.bf16.mxu0 0
        %1735 = vmatpush1.bf16.msra.mxu0 0
        %1736 = vmatprep.subr.bf16.mxu0 0
        %1737 = vmatpush1.bf16.msra.mxu0 0
        %1738 = vmatprep.subr.bf16.mxu0 0
        %1739 = vmatpush1.bf16.msra.mxu0 0
        %1740 = vmatprep.subr.bf16.mxu0 0
        %1741 = vmatpush1.bf16.msra.mxu0 0
        %1742 = vmatprep.subr.bf16.mxu0 0
        %1743 = vmatpush1.bf16.msra.mxu0 0
        %1744 = vmatprep.subr.bf16.mxu0 0
        %1745 = vmatpush1.bf16.msra.mxu0 0
        %1746 = vmatprep.mubr.bf16.mxu0 0
        %1747 = vmatmul.mubr.bf16.gmra.mrb[0].mxu0 %v1049
        %v1748 = vpop.f32.mrb[0].mxu0
        %v1749 = vadd.f32 0.0, %v1748
        %v1750 = vpop.f32.mrb[0].mxu0
        %v1751 = vpop.f32.mrb[0].mxu0
        %v1752 = vadd.f32 0.0, %v1751
        %v1753 = vpop.f32.mrb[0].mxu0
        %1754 = vmatprep.mubr.bf16.mxu0 0
        %1755 = vmatmul.mubr.bf16.gmra.mrb[0].mxu0 %v1052
        %v1756 = vpop.f32.mrb[0].mxu0
        %v1757 = vadd.f32 0.0, %v1756
        %v1758 = vpop.f32.mrb[0].mxu0
        %v1759 = vpop.f32.mrb[0].mxu0
        %v1760 = vadd.f32 0.0, %v1759
        %v1761 = vpop.f32.mrb[0].mxu0
        %1762 = vmatprep.mubr.bf16.mxu0 0
        %1763 = vmatmul.mubr.bf16.gmra.mrb[0].mxu0 %v1055
        %v1764 = vpop.f32.mrb[0].mxu0
        %v1765 = vadd.f32 0.0, %v1764
        %v1766 = vpop.f32.mrb[0].mxu0
        %v1767 = vpop.f32.mrb[0].mxu0
        %v1768 = vadd.f32 0.0, %v1767
        %v1769 = vpop.f32.mrb[0].mxu0
        %1770 = vmatprep.mubr.bf16.mxu0 0
        %1771 = vmatmul.mubr.bf16.gmra.mrb[0].mxu0 %v1058
        %v1772 = vpop.f32.mrb[0].mxu0
        %v1773 = vadd.f32 0.0, %v1772
        %v1774 = vpop.f32.mrb[0].mxu0
        %v1775 = vpop.f32.mrb[0].mxu0
        %v1776 = vadd.f32 0.0, %v1775
        %v1777 = vpop.f32.mrb[0].mxu0
        %1778 = vmatprep.mubr.bf16.mxu0 0
        %1779 = vmatmul.mubr.bf16.gmra.mrb[0].mxu0 %v1061
        %v1780 = vpop.f32.mrb[0].mxu0
        %v1781 = vadd.f32 0.0, %v1780
        %v1782 = vpop.f32.mrb[0].mxu0
        %v1783 = vpop.f32.mrb[0].mxu0
        %v1784 = vadd.f32 0.0, %v1783
        %v1785 = vpop.f32.mrb[0].mxu0
        %1786 = vmatprep.mubr.bf16.mxu0 0
        %1787 = vmatmul.mubr.bf16.gmra.mrb[0].mxu0 %v1064
        %v1788 = vpop.f32.mrb[0].mxu0
        %v1789 = vadd.f32 0.0, %v1788
        %v1790 = vpop.f32.mrb[0].mxu0
        %v1791 = vpop.f32.mrb[0].mxu0
        %v1792 = vadd.f32 0.0, %v1791
        %v1793 = vpop.f32.mrb[0].mxu0
        %1794 = vmatprep.mubr.bf16.mxu0 0
        %1795 = vmatmul.mubr.bf16.gmra.mrb[0].mxu0 %v1067
        %v1796 = vpop.f32.mrb[0].mxu0
        %v1797 = vadd.f32 0.0, %v1796
        %v1798 = vpop.f32.mrb[0].mxu0
        %v1799 = vpop.f32.mrb[0].mxu0
        %v1800 = vadd.f32 0.0, %v1799
        %v1801 = vpop.f32.mrb[0].mxu0
        %1802 = vmatprep.mubr.bf16.mxu0 0
        %1803 = vmatmul.mubr.bf16.gmra.mrb[0].mxu0 %v1070
        %v1804 = vpop.f32.mrb[0].mxu0
        %v1805 = vadd.f32 0.0, %v1804
        %v1806 = vpop.f32.mrb[0].mxu0
        %v1807 = vpop.f32.mrb[0].mxu0
        %v1808 = vadd.f32 0.0, %v1807
        %v1809 = vpop.f32.mrb[0].mxu0
        %1810 = vmatprep.mubr.bf16.mxu0 0
        %1811 = vmatmul.mubr.bf16.gmra.mrb[0].mxu0 %v1073
        %v1812 = vpop.f32.mrb[0].mxu0
        %v1813 = vadd.f32 0.0, %v1812
        %v1814 = vpop.f32.mrb[0].mxu0
        %v1815 = vpop.f32.mrb[0].mxu0
        %v1816 = vadd.f32 0.0, %v1815
        %v1817 = vpop.f32.mrb[0].mxu0
        %1818 = vmatprep.mubr.bf16.mxu0 0
        %1819 = vmatmul.mubr.bf16.gmra.mrb[0].mxu0 %v1076
        %v1820 = vpop.f32.mrb[0].mxu0
        %v1821 = vadd.f32 0.0, %v1820
        %v1822 = vpop.f32.mrb[0].mxu0
        %v1823 = vpop.f32.mrb[0].mxu0
        %v1824 = vadd.f32 0.0, %v1823
        %v1825 = vpop.f32.mrb[0].mxu0
        %1826 = vmatprep.mubr.bf16.mxu0 0
        %1827 = vmatmul.mubr.bf16.gmra.mrb[0].mxu0 %v1079
        %v1828 = vpop.f32.mrb[0].mxu0
        %v1829 = vadd.f32 0.0, %v1828
        %v1830 = vpop.f32.mrb[0].mxu0
        %v1831 = vpop.f32.mrb[0].mxu0
        %v1832 = vadd.f32 0.0, %v1831
        %v1833 = vpop.f32.mrb[0].mxu0
        %1834 = vmatprep.mubr.bf16.mxu0 0
        %1835 = vmatmul.mubr.bf16.gmra.mrb[0].mxu0 %v1082
        %v1836 = vpop.f32.mrb[0].mxu0
        %v1837 = vadd.f32 0.0, %v1836
        %v1838 = vpop.f32.mrb[0].mxu0
        %v1839 = vpop.f32.mrb[0].mxu0
        %v1840 = vadd.f32 0.0, %v1839
        %v1841 = vpop.f32.mrb[0].mxu0
        %1842 = vmatprep.mubr.bf16.mxu0 0
        %1843 = vmatmul.mubr.bf16.gmra.mrb[0].mxu0 %v1085
        %v1844 = vpop.f32.mrb[0].mxu0
        %v1845 = vadd.f32 0.0, %v1844
        %v1846 = vpop.f32.mrb[0].mxu0
        %v1847 = vpop.f32.mrb[0].mxu0
        %v1848 = vadd.f32 0.0, %v1847
        %v1849 = vpop.f32.mrb[0].mxu0
        %1850 = vmatprep.mubr.bf16.mxu0 0
        %1851 = vmatmul.mubr.bf16.gmra.mrb[0].mxu0 %v1088
        %v1852 = vpop.f32.mrb[0].mxu0
        %v1853 = vadd.f32 0.0, %v1852
        %v1854 = vpop.f32.mrb[0].mxu0
        %v1855 = vpop.f32.mrb[0].mxu0
        %v1856 = vadd.f32 0.0, %v1855
        %v1857 = vpop.f32.mrb[0].mxu0
        %1858 = vmatprep.mubr.bf16.mxu0 0
        %1859 = vmatmul.mubr.bf16.gmra.mrb[0].mxu0 %v1091
        %v1860 = vpop.f32.mrb[0].mxu0
        %v1861 = vadd.f32 0.0, %v1860
        %v1862 = vpop.f32.mrb[0].mxu0
        %v1863 = vpop.f32.mrb[0].mxu0
        %v1864 = vadd.f32 0.0, %v1863
        %v1865 = vpop.f32.mrb[0].mxu0
        %1866 = vmatprep.mubr.bf16.mxu0 0
        %1867 = vmatmul.mubr.bf16.gmra.mrb[0].mxu0 %v1712
        %v1868 = vpop.f32.mrb[0].mxu0
        %v1869 = vadd.f32 0.0, %v1868
        %v1870 = vpop.f32.mrb[0].mxu0
        %v1871 = vpop.f32.mrb[0].mxu0
        %v1872 = vadd.f32 0.0, %v1871
        %v1873 = vpop.f32.mrb[0].mxu0
        %1874 = vdwg.mxu0
        %v1875 = vadd.f32 %v1658, %v1749
        %v1876 = vadd.f32 %v1659, %v1752
        %v1877 = vadd.f32 %v1660, %v1757
        %v1878 = vadd.f32 %v1661, %v1760
        %v1879 = vadd.f32 %v1662, %v1765
        %v1880 = vadd.f32 %v1663, %v1768
        %v1881 = vadd.f32 %v1664, %v1773
        %v1882 = vadd.f32 %v1665, %v1776
        %v1883 = vadd.f32 %v1666, %v1781
        %v1884 = vadd.f32 %v1667, %v1784
        %v1885 = vadd.f32 %v1668, %v1789
        %v1886 = vadd.f32 %v1669, %v1792
        %v1887 = vadd.f32 %v1670, %v1797
        %v1888 = vadd.f32 %v1671, %v1800
        %v1889 = vadd.f32 %v1672, %v1805
        %v1890 = vadd.f32 %v1673, %v1808
        %v1891 = vadd.f32 %v1674, %v1813
        %v1892 = vadd.f32 %v1675, %v1816
        %v1893 = vadd.f32 %v1676, %v1821
        %v1894 = vadd.f32 %v1677, %v1824
        %v1895 = vadd.f32 %v1678, %v1829
        %v1896 = vadd.f32 %v1679, %v1832
        %v1897 = vadd.f32 %v1680, %v1837
        %v1898 = vadd.f32 %v1681, %v1840
        %v1899 = vadd.f32 %v1682, %v1845
        %v1900 = vadd.f32 %v1683, %v1848
        %v1901 = vadd.f32 %v1684, %v1853
        %v1902 = vadd.f32 %v1685, %v1856
        %v1903 = vadd.f32 %v1686, %v1861
        %v1904 = vadd.f32 %v1687, %v1864
        %v1905 = vadd.f32 %v1688, %v1869
        %v1906 = vadd.f32 %v1689, %v1872
        %v1908 = vshrl.u32 %v282, 16
        %v1910 = vrot.slane %v1908, 4
        %v1911 = vshll.u32 %v282, 16
        %v1913 = vrot.slane %v1911, 5
        %v1914 = vor.u32 %v1910, %v1913
        %v1915 = vrot.slane %v1914, 4
        %v1917 = vshll.u32 %v283, 16
        %v1919 = vrot.slane %v1917, 5
        %v1920 = vsel %vm294, %v1915, %v1919
        %v1921 = vshrl.u32 %v283, 16
        %v1923 = vrot.slane %v1921, 4
        %v1924 = vor.u32 %v1923, %v1919
        %v1925 = vrot.slane %v1924, 4
        %v1927 = vshll.u32 %v284, 16
        %v1929 = vrot.slane %v1927, 5
        %v1930 = vsel %vm294, %v1925, %v1929
        %v1931 = vld [vmem:[#allocation2 + $0x40] sm:$0xf]
        %v1932 = vld [vmem:[#allocation2 + $0x44] sm:$0xf]
        %v1933 = vld [vmem:[#allocation2 + $0x48] sm:$0xf]
        %v1934 = vld [vmem:[#allocation2 + $0x4c] sm:$0xf]
        %v1935 = vunpack.c.l.b16 %v1920
        %v1936 = vunpack.c.l.b16 %v1930
        %v1937 = vpack.c.b16 %v1936, %v1935
        %v1942 = vunpack.c.l.b16 %v1931
        %v1943 = vunpack.c.l.b16 %v1932
        %v1944 = vunpack.c.l.b16 %v1933
        %v1945 = vunpack.c.l.b16 %v1934
        %v1946 = vpack.c.b16 %v1943, %v1942
        %v1947 = vpack.c.b16 %v1945, %v1944
        %v1951 = vsel %vm743, %v1937, 0
        %1953 = vmatprep.subr.bf16.mxu0 0
        %1954 = vmatpush1.bf16.msra.mxu0 %v1946
        %1955 = vmatprep.subr.bf16.mxu0 0
        %1956 = vmatpush1.bf16.msra.mxu0 %v1947
        %1957 = vmatprep.subr.bf16.mxu0 0
        %1958 = vmatpush1.bf16.msra.mxu0 0
        %1959 = vmatprep.subr.bf16.mxu0 0
        %1960 = vmatpush1.bf16.msra.mxu0 0
        %1961 = vmatprep.subr.bf16.mxu0 0
        %1962 = vmatpush1.bf16.msra.mxu0 0
        %1963 = vmatprep.subr.bf16.mxu0 0
        %1964 = vmatpush1.bf16.msra.mxu0 0
        %1965 = vmatprep.subr.bf16.mxu0 0
        %1966 = vmatpush1.bf16.msra.mxu0 0
        %1967 = vmatprep.subr.bf16.mxu0 0
        %1968 = vmatpush1.bf16.msra.mxu0 0
        %1969 = vmatprep.subr.bf16.mxu0 0
        %1970 = vmatpush1.bf16.msra.mxu0 0
        %1971 = vmatprep.subr.bf16.mxu0 0
        %1972 = vmatpush1.bf16.msra.mxu0 0
        %1973 = vmatprep.subr.bf16.mxu0 0
        %1974 = vmatpush1.bf16.msra.mxu0 0
        %1975 = vmatprep.subr.bf16.mxu0 0
        %1976 = vmatpush1.bf16.msra.mxu0 0
        %1977 = vmatprep.subr.bf16.mxu0 0
        %1978 = vmatpush1.bf16.msra.mxu0 0
        %1979 = vmatprep.subr.bf16.mxu0 0
        %1980 = vmatpush1.bf16.msra.mxu0 0
        %1981 = vmatprep.subr.bf16.mxu0 0
        %1982 = vmatpush1.bf16.msra.mxu0 0
        %1983 = vmatprep.subr.bf16.mxu0 0
        %1984 = vmatpush1.bf16.msra.mxu0 0
        %1985 = vmatprep.mubr.bf16.mxu0 0
        %1986 = vmatmul.mubr.bf16.gmra.mrb[0].mxu0 %v748
        %v1987 = vpop.f32.mrb[0].mxu0
        %v1988 = vadd.f32 0.0, %v1987
        %v1989 = vpop.f32.mrb[0].mxu0
        %v1990 = vpop.f32.mrb[0].mxu0
        %v1991 = vadd.f32 0.0, %v1990
        %v1992 = vpop.f32.mrb[0].mxu0
        %1993 = vmatprep.mubr.bf16.mxu0 0
        %1994 = vmatmul.mubr.bf16.gmra.mrb[0].mxu0 %v751
        %v1995 = vpop.f32.mrb[0].mxu0
        %v1996 = vadd.f32 0.0, %v1995
        %v1997 = vpop.f32.mrb[0].mxu0
        %v1998 = vpop.f32.mrb[0].mxu0
        %v1999 = vadd.f32 0.0, %v1998
        %v2000 = vpop.f32.mrb[0].mxu0
        %2001 = vmatprep.mubr.bf16.mxu0 0
        %2002 = vmatmul.mubr.bf16.gmra.mrb[0].mxu0 %v754
        %v2003 = vpop.f32.mrb[0].mxu0
        %v2004 = vadd.f32 0.0, %v2003
        %v2005 = vpop.f32.mrb[0].mxu0
        %v2006 = vpop.f32.mrb[0].mxu0
        %v2007 = vadd.f32 0.0, %v2006
        %v2008 = vpop.f32.mrb[0].mxu0
        %2009 = vmatprep.mubr.bf16.mxu0 0
        %2010 = vmatmul.mubr.bf16.gmra.mrb[0].mxu0 %v757
        %v2011 = vpop.f32.mrb[0].mxu0
        %v2012 = vadd.f32 0.0, %v2011
        %v2013 = vpop.f32.mrb[0].mxu0
        %v2014 = vpop.f32.mrb[0].mxu0
        %v2015 = vadd.f32 0.0, %v2014
        %v2016 = vpop.f32.mrb[0].mxu0
        %2017 = vmatprep.mubr.bf16.mxu0 0
        %2018 = vmatmul.mubr.bf16.gmra.mrb[0].mxu0 %v760
        %v2019 = vpop.f32.mrb[0].mxu0
        %v2020 = vadd.f32 0.0, %v2019
        %v2021 = vpop.f32.mrb[0].mxu0
        %v2022 = vpop.f32.mrb[0].mxu0
        %v2023 = vadd.f32 0.0, %v2022
        %v2024 = vpop.f32.mrb[0].mxu0
        %2025 = vmatprep.mubr.bf16.mxu0 0
        %2026 = vmatmul.mubr.bf16.gmra.mrb[0].mxu0 %v763
        %v2027 = vpop.f32.mrb[0].mxu0
        %v2028 = vadd.f32 0.0, %v2027
        %v2029 = vpop.f32.mrb[0].mxu0
        %v2030 = vpop.f32.mrb[0].mxu0
        %v2031 = vadd.f32 0.0, %v2030
        %v2032 = vpop.f32.mrb[0].mxu0
        %2033 = vmatprep.mubr.bf16.mxu0 0
        %2034 = vmatmul.mubr.bf16.gmra.mrb[0].mxu0 %v766
        %v2035 = vpop.f32.mrb[0].mxu0
        %v2036 = vadd.f32 0.0, %v2035
        %v2037 = vpop.f32.mrb[0].mxu0
        %v2038 = vpop.f32.mrb[0].mxu0
        %v2039 = vadd.f32 0.0, %v2038
        %v2040 = vpop.f32.mrb[0].mxu0
        %2041 = vmatprep.mubr.bf16.mxu0 0
        %2042 = vmatmul.mubr.bf16.gmra.mrb[0].mxu0 %v769
        %v2043 = vpop.f32.mrb[0].mxu0
        %v2044 = vadd.f32 0.0, %v2043
        %v2045 = vpop.f32.mrb[0].mxu0
        %v2046 = vpop.f32.mrb[0].mxu0
        %v2047 = vadd.f32 0.0, %v2046
        %v2048 = vpop.f32.mrb[0].mxu0
        %2049 = vmatprep.mubr.bf16.mxu0 0
        %2050 = vmatmul.mubr.bf16.gmra.mrb[0].mxu0 %v772
        %v2051 = vpop.f32.mrb[0].mxu0
        %v2052 = vadd.f32 0.0, %v2051
        %v2053 = vpop.f32.mrb[0].mxu0
        %v2054 = vpop.f32.mrb[0].mxu0
        %v2055 = vadd.f32 0.0, %v2054
        %v2056 = vpop.f32.mrb[0].mxu0
        %2057 = vmatprep.mubr.bf16.mxu0 0
        %2058 = vmatmul.mubr.bf16.gmra.mrb[0].mxu0 %v775
        %v2059 = vpop.f32.mrb[0].mxu0
        %v2060 = vadd.f32 0.0, %v2059
        %v2061 = vpop.f32.mrb[0].mxu0
        %v2062 = vpop.f32.mrb[0].mxu0
        %v2063 = vadd.f32 0.0, %v2062
        %v2064 = vpop.f32.mrb[0].mxu0
        %2065 = vmatprep.mubr.bf16.mxu0 0
        %2066 = vmatmul.mubr.bf16.gmra.mrb[0].mxu0 %v778
        %v2067 = vpop.f32.mrb[0].mxu0
        %v2068 = vadd.f32 0.0, %v2067
        %v2069 = vpop.f32.mrb[0].mxu0
        %v2070 = vpop.f32.mrb[0].mxu0
        %v2071 = vadd.f32 0.0, %v2070
        %v2072 = vpop.f32.mrb[0].mxu0
        %2073 = vmatprep.mubr.bf16.mxu0 0
        %2074 = vmatmul.mubr.bf16.gmra.mrb[0].mxu0 %v781
        %v2075 = vpop.f32.mrb[0].mxu0
        %v2076 = vadd.f32 0.0, %v2075
        %v2077 = vpop.f32.mrb[0].mxu0
        %v2078 = vpop.f32.mrb[0].mxu0
        %v2079 = vadd.f32 0.0, %v2078
        %v2080 = vpop.f32.mrb[0].mxu0
        %2081 = vmatprep.mubr.bf16.mxu0 0
        %2082 = vmatmul.mubr.bf16.gmra.mrb[0].mxu0 %v784
        %v2083 = vpop.f32.mrb[0].mxu0
        %v2084 = vadd.f32 0.0, %v2083
        %v2085 = vpop.f32.mrb[0].mxu0
        %v2086 = vpop.f32.mrb[0].mxu0
        %v2087 = vadd.f32 0.0, %v2086
        %v2088 = vpop.f32.mrb[0].mxu0
        %2089 = vmatprep.mubr.bf16.mxu0 0
        %2090 = vmatmul.mubr.bf16.gmra.mrb[0].mxu0 %v787
        %v2091 = vpop.f32.mrb[0].mxu0
        %v2092 = vadd.f32 0.0, %v2091
        %v2093 = vpop.f32.mrb[0].mxu0
        %v2094 = vpop.f32.mrb[0].mxu0
        %v2095 = vadd.f32 0.0, %v2094
        %v2096 = vpop.f32.mrb[0].mxu0
        %2097 = vmatprep.mubr.bf16.mxu0 0
        %2098 = vmatmul.mubr.bf16.gmra.mrb[0].mxu0 %v790
        %v2099 = vpop.f32.mrb[0].mxu0
        %v2100 = vadd.f32 0.0, %v2099
        %v2101 = vpop.f32.mrb[0].mxu0
        %v2102 = vpop.f32.mrb[0].mxu0
        %v2103 = vadd.f32 0.0, %v2102
        %v2104 = vpop.f32.mrb[0].mxu0
        %2105 = vmatprep.mubr.bf16.mxu0 0
        %2106 = vmatmul.mubr.bf16.gmra.mrb[0].mxu0 %v1951
        %v2107 = vpop.f32.mrb[0].mxu0
        %v2108 = vadd.f32 0.0, %v2107
        %v2109 = vpop.f32.mrb[0].mxu0
        %v2110 = vpop.f32.mrb[0].mxu0
        %v2111 = vadd.f32 0.0, %v2110
        %v2112 = vpop.f32.mrb[0].mxu0
        %2113 = vdwg.mxu0
        %v2114 = vadd.f32 %v1875, %v1988
        %v2115 = vadd.f32 %v1876, %v1991
        %v2116 = vadd.f32 %v1877, %v1996
        %v2117 = vadd.f32 %v1878, %v1999
        %v2118 = vadd.f32 %v1879, %v2004
        %v2119 = vadd.f32 %v1880, %v2007
        %v2120 = vadd.f32 %v1881, %v2012
        %v2121 = vadd.f32 %v1882, %v2015
        %v2122 = vadd.f32 %v1883, %v2020
        %v2123 = vadd.f32 %v1884, %v2023
        %v2124 = vadd.f32 %v1885, %v2028
        %v2125 = vadd.f32 %v1886, %v2031
        %v2126 = vadd.f32 %v1887, %v2036
        %v2127 = vadd.f32 %v1888, %v2039
        %v2128 = vadd.f32 %v1889, %v2044
        %v2129 = vadd.f32 %v1890, %v2047
        %v2130 = vadd.f32 %v1891, %v2052
        %v2131 = vadd.f32 %v1892, %v2055
        %v2132 = vadd.f32 %v1893, %v2060
        %v2133 = vadd.f32 %v1894, %v2063
        %v2134 = vadd.f32 %v1895, %v2068
        %v2135 = vadd.f32 %v1896, %v2071
        %v2136 = vadd.f32 %v1897, %v2076
        %v2137 = vadd.f32 %v1898, %v2079
        %v2138 = vadd.f32 %v1899, %v2084
        %v2139 = vadd.f32 %v1900, %v2087
        %v2140 = vadd.f32 %v1901, %v2092
        %v2141 = vadd.f32 %v1902, %v2095
        %v2142 = vadd.f32 %v1903, %v2100
        %v2143 = vadd.f32 %v1904, %v2103
        %v2144 = vadd.f32 %v1905, %v2108
        %v2145 = vadd.f32 %v1906, %v2111
        %v2147 = vrot.slane %v282, 5
        %v2148 = vrot.slane %v2147, 4
        %v2149 = vrot.slane %v283, 5
        %v2150 = vsel %vm1272, %v2148, %v2149
        %v2151 = vrot.slane %v2149, 4
        %v2152 = vrot.slane %v284, 5
        %v2153 = vsel %vm1272, %v2151, %v2152
        %v2154 = vld [vmem:[#allocation2 + $0x50] sm:$0xf]
        %v2155 = vld [vmem:[#allocation2 + $0x54] sm:$0xf]
        %v2156 = vld [vmem:[#allocation2 + $0x58] sm:$0xf]
        %v2157 = vld [vmem:[#allocation2 + $0x5c] sm:$0xf]
        %v2158 = vunpack.c.l.b16 %v2150
        %v2159 = vunpack.c.l.b16 %v2153
        %v2160 = vpack.c.b16 %v2159, %v2158
        %v2165 = vunpack.c.l.b16 %v2154
        %v2166 = vunpack.c.l.b16 %v2155
        %v2167 = vunpack.c.l.b16 %v2156
        %v2168 = vunpack.c.l.b16 %v2157
        %v2169 = vpack.c.b16 %v2166, %v2165
        %v2170 = vpack.c.b16 %v2168, %v2167
        %v2174 = vsel %vm743, %v2160, 0
        %2176 = vmatprep.subr.bf16.mxu0 0
        %2177 = vmatpush1.bf16.msra.mxu0 %v2169
        %2178 = vmatprep.subr.bf16.mxu0 0
        %2179 = vmatpush1.bf16.msra.mxu0 %v2170
        %2180 = vmatprep.subr.bf16.mxu0 0
        %2181 = vmatpush1.bf16.msra.mxu0 0
        %2182 = vmatprep.subr.bf16.mxu0 0
        %2183 = vmatpush1.bf16.msra.mxu0 0
        %2184 = vmatprep.subr.bf16.mxu0 0
        %2185 = vmatpush1.bf16.msra.mxu0 0
        %2186 = vmatprep.subr.bf16.mxu0 0
        %2187 = vmatpush1.bf16.msra.mxu0 0
        %2188 = vmatprep.subr.bf16.mxu0 0
        %2189 = vmatpush1.bf16.msra.mxu0 0
        %2190 = vmatprep.subr.bf16.mxu0 0
        %2191 = vmatpush1.bf16.msra.mxu0 0
        %2192 = vmatprep.subr.bf16.mxu0 0
        %2193 = vmatpush1.bf16.msra.mxu0 0
        %2194 = vmatprep.subr.bf16.mxu0 0
        %2195 = vmatpush1.bf16.msra.mxu0 0
        %2196 = vmatprep.subr.bf16.mxu0 0
        %2197 = vmatpush1.bf16.msra.mxu0 0
        %2198 = vmatprep.subr.bf16.mxu0 0
        %2199 = vmatpush1.bf16.msra.mxu0 0
        %2200 = vmatprep.subr.bf16.mxu0 0
        %2201 = vmatpush1.bf16.msra.mxu0 0
        %2202 = vmatprep.subr.bf16.mxu0 0
        %2203 = vmatpush1.bf16.msra.mxu0 0
        %2204 = vmatprep.subr.bf16.mxu0 0
        %2205 = vmatpush1.bf16.msra.mxu0 0
        %2206 = vmatprep.subr.bf16.mxu0 0
        %2207 = vmatpush1.bf16.msra.mxu0 0
        %2208 = vmatprep.mubr.bf16.mxu0 0
        %2209 = vmatmul.mubr.bf16.gmra.mrb[0].mxu0 %v1453
        %v2210 = vpop.f32.mrb[0].mxu0
        %v2211 = vadd.f32 0.0, %v2210
        %v2212 = vpop.f32.mrb[0].mxu0
        %v2213 = vpop.f32.mrb[0].mxu0
        %v2214 = vadd.f32 0.0, %v2213
        %v2215 = vpop.f32.mrb[0].mxu0
        %2216 = vmatprep.mubr.bf16.mxu0 0
        %2217 = vmatmul.mubr.bf16.gmra.mrb[0].mxu0 %v1456
        %v2218 = vpop.f32.mrb[0].mxu0
        %v2219 = vadd.f32 0.0, %v2218
        %v2220 = vpop.f32.mrb[0].mxu0
        %v2221 = vpop.f32.mrb[0].mxu0
        %v2222 = vadd.f32 0.0, %v2221
        %v2223 = vpop.f32.mrb[0].mxu0
        %2224 = vmatprep.mubr.bf16.mxu0 0
        %2225 = vmatmul.mubr.bf16.gmra.mrb[0].mxu0 %v1459
        %v2226 = vpop.f32.mrb[0].mxu0
        %v2227 = vadd.f32 0.0, %v2226
        %v2228 = vpop.f32.mrb[0].mxu0
        %v2229 = vpop.f32.mrb[0].mxu0
        %v2230 = vadd.f32 0.0, %v2229
        %v2231 = vpop.f32.mrb[0].mxu0
        %2232 = vmatprep.mubr.bf16.mxu0 0
        %2233 = vmatmul.mubr.bf16.gmra.mrb[0].mxu0 %v1462
        %v2234 = vpop.f32.mrb[0].mxu0
        %v2235 = vadd.f32 0.0, %v2234
        %v2236 = vpop.f32.mrb[0].mxu0
        %v2237 = vpop.f32.mrb[0].mxu0
        %v2238 = vadd.f32 0.0, %v2237
        %v2239 = vpop.f32.mrb[0].mxu0
        %2240 = vmatprep.mubr.bf16.mxu0 0
        %2241 = vmatmul.mubr.bf16.gmra.mrb[0].mxu0 %v1465
        %v2242 = vpop.f32.mrb[0].mxu0
        %v2243 = vadd.f32 0.0, %v2242
        %v2244 = vpop.f32.mrb[0].mxu0
        %v2245 = vpop.f32.mrb[0].mxu0
        %v2246 = vadd.f32 0.0, %v2245
        %v2247 = vpop.f32.mrb[0].mxu0
        %2248 = vmatprep.mubr.bf16.mxu0 0
        %2249 = vmatmul.mubr.bf16.gmra.mrb[0].mxu0 %v1468
        %v2250 = vpop.f32.mrb[0].mxu0
        %v2251 = vadd.f32 0.0, %v2250
        %v2252 = vpop.f32.mrb[0].mxu0
        %v2253 = vpop.f32.mrb[0].mxu0
        %v2254 = vadd.f32 0.0, %v2253
        %v2255 = vpop.f32.mrb[0].mxu0
        %2256 = vmatprep.mubr.bf16.mxu0 0
        %2257 = vmatmul.mubr.bf16.gmra.mrb[0].mxu0 %v1471
        %v2258 = vpop.f32.mrb[0].mxu0
        %v2259 = vadd.f32 0.0, %v2258
        %v2260 = vpop.f32.mrb[0].mxu0
        %v2261 = vpop.f32.mrb[0].mxu0
        %v2262 = vadd.f32 0.0, %v2261
        %v2263 = vpop.f32.mrb[0].mxu0
        %2264 = vmatprep.mubr.bf16.mxu0 0
        %2265 = vmatmul.mubr.bf16.gmra.mrb[0].mxu0 %v1474
        %v2266 = vpop.f32.mrb[0].mxu0
        %v2267 = vadd.f32 0.0, %v2266
        %v2268 = vpop.f32.mrb[0].mxu0
        %v2269 = vpop.f32.mrb[0].mxu0
        %v2270 = vadd.f32 0.0, %v2269
        %v2271 = vpop.f32.mrb[0].mxu0
        %2272 = vmatprep.mubr.bf16.mxu0 0
        %2273 = vmatmul.mubr.bf16.gmra.mrb[0].mxu0 %v1477
        %v2274 = vpop.f32.mrb[0].mxu0
        %v2275 = vadd.f32 0.0, %v2274
        %v2276 = vpop.f32.mrb[0].mxu0
        %v2277 = vpop.f32.mrb[0].mxu0
        %v2278 = vadd.f32 0.0, %v2277
        %v2279 = vpop.f32.mrb[0].mxu0
        %2280 = vmatprep.mubr.bf16.mxu0 0
        %2281 = vmatmul.mubr.bf16.gmra.mrb[0].mxu0 %v1480
        %v2282 = vpop.f32.mrb[0].mxu0
        %v2283 = vadd.f32 0.0, %v2282
        %v2284 = vpop.f32.mrb[0].mxu0
        %v2285 = vpop.f32.mrb[0].mxu0
        %v2286 = vadd.f32 0.0, %v2285
        %v2287 = vpop.f32.mrb[0].mxu0
        %2288 = vmatprep.mubr.bf16.mxu0 0
        %2289 = vmatmul.mubr.bf16.gmra.mrb[0].mxu0 %v1483
        %v2290 = vpop.f32.mrb[0].mxu0
        %v2291 = vadd.f32 0.0, %v2290
        %v2292 = vpop.f32.mrb[0].mxu0
        %v2293 = vpop.f32.mrb[0].mxu0
        %v2294 = vadd.f32 0.0, %v2293
        %v2295 = vpop.f32.mrb[0].mxu0
        %2296 = vmatprep.mubr.bf16.mxu0 0
        %2297 = vmatmul.mubr.bf16.gmra.mrb[0].mxu0 %v1486
        %v2298 = vpop.f32.mrb[0].mxu0
        %v2299 = vadd.f32 0.0, %v2298
        %v2300 = vpop.f32.mrb[0].mxu0
        %v2301 = vpop.f32.mrb[0].mxu0
        %v2302 = vadd.f32 0.0, %v2301
        %v2303 = vpop.f32.mrb[0].mxu0
        %2304 = vmatprep.mubr.bf16.mxu0 0
        %2305 = vmatmul.mubr.bf16.gmra.mrb[0].mxu0 %v1489
        %v2306 = vpop.f32.mrb[0].mxu0
        %v2307 = vadd.f32 0.0, %v2306
        %v2308 = vpop.f32.mrb[0].mxu0
        %v2309 = vpop.f32.mrb[0].mxu0
        %v2310 = vadd.f32 0.0, %v2309
        %v2311 = vpop.f32.mrb[0].mxu0
        %2312 = vmatprep.mubr.bf16.mxu0 0
        %2313 = vmatmul.mubr.bf16.gmra.mrb[0].mxu0 %v1492
        %v2314 = vpop.f32.mrb[0].mxu0
        %v2315 = vadd.f32 0.0, %v2314
        %v2316 = vpop.f32.mrb[0].mxu0
        %v2317 = vpop.f32.mrb[0].mxu0
        %v2318 = vadd.f32 0.0, %v2317
        %v2319 = vpop.f32.mrb[0].mxu0
        %2320 = vmatprep.mubr.bf16.mxu0 0
        %2321 = vmatmul.mubr.bf16.gmra.mrb[0].mxu0 %v1495
        %v2322 = vpop.f32.mrb[0].mxu0
        %v2323 = vadd.f32 0.0, %v2322
        %v2324 = vpop.f32.mrb[0].mxu0
        %v2325 = vpop.f32.mrb[0].mxu0
        %v2326 = vadd.f32 0.0, %v2325
        %v2327 = vpop.f32.mrb[0].mxu0
        %2328 = vmatprep.mubr.bf16.mxu0 0
        %2329 = vmatmul.mubr.bf16.gmra.mrb[0].mxu0 %v2174
        %v2330 = vpop.f32.mrb[0].mxu0
        %v2331 = vadd.f32 0.0, %v2330
        %v2332 = vpop.f32.mrb[0].mxu0
        %v2333 = vpop.f32.mrb[0].mxu0
        %v2334 = vadd.f32 0.0, %v2333
        %v2335 = vpop.f32.mrb[0].mxu0
        %2336 = vdwg.mxu0
        %v2337 = vadd.f32 %v2114, %v2211
        %v2338 = vadd.f32 %v2115, %v2214
        %v2339 = vadd.f32 %v2116, %v2219
        %v2340 = vadd.f32 %v2117, %v2222
        %v2341 = vadd.f32 %v2118, %v2227
        %v2342 = vadd.f32 %v2119, %v2230
        %v2343 = vadd.f32 %v2120, %v2235
        %v2344 = vadd.f32 %v2121, %v2238
        %v2345 = vadd.f32 %v2122, %v2243
        %v2346 = vadd.f32 %v2123, %v2246
        %v2347 = vadd.f32 %v2124, %v2251
        %v2348 = vadd.f32 %v2125, %v2254
        %v2349 = vadd.f32 %v2126, %v2259
        %v2350 = vadd.f32 %v2127, %v2262
        %v2351 = vadd.f32 %v2128, %v2267
        %v2352 = vadd.f32 %v2129, %v2270
        %v2353 = vadd.f32 %v2130, %v2275
        %v2354 = vadd.f32 %v2131, %v2278
        %v2355 = vadd.f32 %v2132, %v2283
        %v2356 = vadd.f32 %v2133, %v2286
        %v2357 = vadd.f32 %v2134, %v2291
        %v2358 = vadd.f32 %v2135, %v2294
        %v2359 = vadd.f32 %v2136, %v2299
        %v2360 = vadd.f32 %v2137, %v2302
        %v2361 = vadd.f32 %v2138, %v2307
        %v2362 = vadd.f32 %v2139, %v2310
        %v2363 = vadd.f32 %v2140, %v2315
        %v2364 = vadd.f32 %v2141, %v2318
        %v2365 = vadd.f32 %v2142, %v2323
        %v2366 = vadd.f32 %v2143, %v2326
        %v2367 = vadd.f32 %v2144, %v2331
        %v2368 = vadd.f32 %v2145, %v2334
        %v2369 = vld [vmem:[#allocation2 + $0x60] sm:$0xf]
        %v2370 = vld [vmem:[#allocation2 + $0x64] sm:$0xf]
        %v2371 = vld [vmem:[#allocation2 + $0x68] sm:$0xf]
        %v2372 = vld [vmem:[#allocation2 + $0x6c] sm:$0xf]
        %v2375 = vunpack.c.l.b16 %v285
        %v2376 = vunpack.c.l.b16 %v286
        %v2377 = vpack.c.b16 %v2376, %v2375
        %v2382 = vunpack.c.l.b16 %v2369
        %v2383 = vunpack.c.l.b16 %v2370
        %v2384 = vunpack.c.l.b16 %v2371
        %v2385 = vunpack.c.l.b16 %v2372
        %v2386 = vpack.c.b16 %v2383, %v2382
        %v2387 = vpack.c.b16 %v2385, %v2384
        %v2391 = vsel %vm743, %v2377, 0
        %2393 = vmatprep.subr.bf16.mxu0 0
        %2394 = vmatpush1.bf16.msra.mxu0 %v2386
        %2395 = vmatprep.subr.bf16.mxu0 0
        %2396 = vmatpush1.bf16.msra.mxu0 %v2387
        %2397 = vmatprep.subr.bf16.mxu0 0
        %2398 = vmatpush1.bf16.msra.mxu0 0
        %2399 = vmatprep.subr.bf16.mxu0 0
        %2400 = vmatpush1.bf16.msra.mxu0 0
        %2401 = vmatprep.subr.bf16.mxu0 0
        %2402 = vmatpush1.bf16.msra.mxu0 0
        %2403 = vmatprep.subr.bf16.mxu0 0
        %2404 = vmatpush1.bf16.msra.mxu0 0
        %2405 = vmatprep.subr.bf16.mxu0 0
        %2406 = vmatpush1.bf16.msra.mxu0 0
        %2407 = vmatprep.subr.bf16.mxu0 0
        %2408 = vmatpush1.bf16.msra.mxu0 0
        %2409 = vmatprep.subr.bf16.mxu0 0
        %2410 = vmatpush1.bf16.msra.mxu0 0
        %2411 = vmatprep.subr.bf16.mxu0 0
        %2412 = vmatpush1.bf16.msra.mxu0 0
        %2413 = vmatprep.subr.bf16.mxu0 0
        %2414 = vmatpush1.bf16.msra.mxu0 0
        %2415 = vmatprep.subr.bf16.mxu0 0
        %2416 = vmatpush1.bf16.msra.mxu0 0
        %2417 = vmatprep.subr.bf16.mxu0 0
        %2418 = vmatpush1.bf16.msra.mxu0 0
        %2419 = vmatprep.subr.bf16.mxu0 0
        %2420 = vmatpush1.bf16.msra.mxu0 0
        %2421 = vmatprep.subr.bf16.mxu0 0
        %2422 = vmatpush1.bf16.msra.mxu0 0
        %2423 = vmatprep.subr.bf16.mxu0 0
        %2424 = vmatpush1.bf16.msra.mxu0 0
        %2425 = vmatprep.mubr.bf16.mxu0 0
        %2426 = vmatmul.mubr.bf16.gmra.mrb[0].mxu0 %v1052
        %v2427 = vpop.f32.mrb[0].mxu0
        %v2428 = vadd.f32 0.0, %v2427
        %v2429 = vpop.f32.mrb[0].mxu0
        %v2430 = vpop.f32.mrb[0].mxu0
        %v2431 = vadd.f32 0.0, %v2430
        %v2432 = vpop.f32.mrb[0].mxu0
        %2433 = vmatprep.mubr.bf16.mxu0 0
        %2434 = vmatmul.mubr.bf16.gmra.mrb[0].mxu0 %v1055
        %v2435 = vpop.f32.mrb[0].mxu0
        %v2436 = vadd.f32 0.0, %v2435
        %v2437 = vpop.f32.mrb[0].mxu0
        %v2438 = vpop.f32.mrb[0].mxu0
        %v2439 = vadd.f32 0.0, %v2438
        %v2440 = vpop.f32.mrb[0].mxu0
        %2441 = vmatprep.mubr.bf16.mxu0 0
        %2442 = vmatmul.mubr.bf16.gmra.mrb[0].mxu0 %v1058
        %v2443 = vpop.f32.mrb[0].mxu0
        %v2444 = vadd.f32 0.0, %v2443
        %v2445 = vpop.f32.mrb[0].mxu0
        %v2446 = vpop.f32.mrb[0].mxu0
        %v2447 = vadd.f32 0.0, %v2446
        %v2448 = vpop.f32.mrb[0].mxu0
        %2449 = vmatprep.mubr.bf16.mxu0 0
        %2450 = vmatmul.mubr.bf16.gmra.mrb[0].mxu0 %v1061
        %v2451 = vpop.f32.mrb[0].mxu0
        %v2452 = vadd.f32 0.0, %v2451
        %v2453 = vpop.f32.mrb[0].mxu0
        %v2454 = vpop.f32.mrb[0].mxu0
        %v2455 = vadd.f32 0.0, %v2454
        %v2456 = vpop.f32.mrb[0].mxu0
        %2457 = vmatprep.mubr.bf16.mxu0 0
        %2458 = vmatmul.mubr.bf16.gmra.mrb[0].mxu0 %v1064
        %v2459 = vpop.f32.mrb[0].mxu0
        %v2460 = vadd.f32 0.0, %v2459
        %v2461 = vpop.f32.mrb[0].mxu0
        %v2462 = vpop.f32.mrb[0].mxu0
        %v2463 = vadd.f32 0.0, %v2462
        %v2464 = vpop.f32.mrb[0].mxu0
        %2465 = vmatprep.mubr.bf16.mxu0 0
        %2466 = vmatmul.mubr.bf16.gmra.mrb[0].mxu0 %v1067
        %v2467 = vpop.f32.mrb[0].mxu0
        %v2468 = vadd.f32 0.0, %v2467
        %v2469 = vpop.f32.mrb[0].mxu0
        %v2470 = vpop.f32.mrb[0].mxu0
        %v2471 = vadd.f32 0.0, %v2470
        %v2472 = vpop.f32.mrb[0].mxu0
        %2473 = vmatprep.mubr.bf16.mxu0 0
        %2474 = vmatmul.mubr.bf16.gmra.mrb[0].mxu0 %v1070
        %v2475 = vpop.f32.mrb[0].mxu0
        %v2476 = vadd.f32 0.0, %v2475
        %v2477 = vpop.f32.mrb[0].mxu0
        %v2478 = vpop.f32.mrb[0].mxu0
        %v2479 = vadd.f32 0.0, %v2478
        %v2480 = vpop.f32.mrb[0].mxu0
        %2481 = vmatprep.mubr.bf16.mxu0 0
        %2482 = vmatmul.mubr.bf16.gmra.mrb[0].mxu0 %v1073
        %v2483 = vpop.f32.mrb[0].mxu0
        %v2484 = vadd.f32 0.0, %v2483
        %v2485 = vpop.f32.mrb[0].mxu0
        %v2486 = vpop.f32.mrb[0].mxu0
        %v2487 = vadd.f32 0.0, %v2486
        %v2488 = vpop.f32.mrb[0].mxu0
        %2489 = vmatprep.mubr.bf16.mxu0 0
        %2490 = vmatmul.mubr.bf16.gmra.mrb[0].mxu0 %v1076
        %v2491 = vpop.f32.mrb[0].mxu0
        %v2492 = vadd.f32 0.0, %v2491
        %v2493 = vpop.f32.mrb[0].mxu0
        %v2494 = vpop.f32.mrb[0].mxu0
        %v2495 = vadd.f32 0.0, %v2494
        %v2496 = vpop.f32.mrb[0].mxu0
        %2497 = vmatprep.mubr.bf16.mxu0 0
        %2498 = vmatmul.mubr.bf16.gmra.mrb[0].mxu0 %v1079
        %v2499 = vpop.f32.mrb[0].mxu0
        %v2500 = vadd.f32 0.0, %v2499
        %v2501 = vpop.f32.mrb[0].mxu0
        %v2502 = vpop.f32.mrb[0].mxu0
        %v2503 = vadd.f32 0.0, %v2502
        %v2504 = vpop.f32.mrb[0].mxu0
        %2505 = vmatprep.mubr.bf16.mxu0 0
        %2506 = vmatmul.mubr.bf16.gmra.mrb[0].mxu0 %v1082
        %v2507 = vpop.f32.mrb[0].mxu0
        %v2508 = vadd.f32 0.0, %v2507
        %v2509 = vpop.f32.mrb[0].mxu0
        %v2510 = vpop.f32.mrb[0].mxu0
        %v2511 = vadd.f32 0.0, %v2510
        %v2512 = vpop.f32.mrb[0].mxu0
        %2513 = vmatprep.mubr.bf16.mxu0 0
        %2514 = vmatmul.mubr.bf16.gmra.mrb[0].mxu0 %v1085
        %v2515 = vpop.f32.mrb[0].mxu0
        %v2516 = vadd.f32 0.0, %v2515
        %v2517 = vpop.f32.mrb[0].mxu0
        %v2518 = vpop.f32.mrb[0].mxu0
        %v2519 = vadd.f32 0.0, %v2518
        %v2520 = vpop.f32.mrb[0].mxu0
        %2521 = vmatprep.mubr.bf16.mxu0 0
        %2522 = vmatmul.mubr.bf16.gmra.mrb[0].mxu0 %v1088
        %v2523 = vpop.f32.mrb[0].mxu0
        %v2524 = vadd.f32 0.0, %v2523
        %v2525 = vpop.f32.mrb[0].mxu0
        %v2526 = vpop.f32.mrb[0].mxu0
        %v2527 = vadd.f32 0.0, %v2526
        %v2528 = vpop.f32.mrb[0].mxu0
        %2529 = vmatprep.mubr.bf16.mxu0 0
        %2530 = vmatmul.mubr.bf16.gmra.mrb[0].mxu0 %v1091
        %v2531 = vpop.f32.mrb[0].mxu0
        %v2532 = vadd.f32 0.0, %v2531
        %v2533 = vpop.f32.mrb[0].mxu0
        %v2534 = vpop.f32.mrb[0].mxu0
        %v2535 = vadd.f32 0.0, %v2534
        %v2536 = vpop.f32.mrb[0].mxu0
        %2537 = vmatprep.mubr.bf16.mxu0 0
        %2538 = vmatmul.mubr.bf16.gmra.mrb[0].mxu0 %v1712
        %v2539 = vpop.f32.mrb[0].mxu0
        %v2540 = vadd.f32 0.0, %v2539
        %v2541 = vpop.f32.mrb[0].mxu0
        %v2542 = vpop.f32.mrb[0].mxu0
        %v2543 = vadd.f32 0.0, %v2542
        %v2544 = vpop.f32.mrb[0].mxu0
        %2545 = vmatprep.mubr.bf16.mxu0 0
        %2546 = vmatmul.mubr.bf16.gmra.mrb[0].mxu0 %v2391
        %v2547 = vpop.f32.mrb[0].mxu0
        %v2548 = vadd.f32 0.0, %v2547
        %v2549 = vpop.f32.mrb[0].mxu0
        %v2550 = vpop.f32.mrb[0].mxu0
        %v2551 = vadd.f32 0.0, %v2550
        %v2552 = vpop.f32.mrb[0].mxu0
        %2553 = vdwg.mxu0
        %v2554 = vadd.f32 %v2337, %v2428
        %v2555 = vadd.f32 %v2338, %v2431
        %v2556 = vadd.f32 %v2339, %v2436
        %v2557 = vadd.f32 %v2340, %v2439
        %v2558 = vadd.f32 %v2341, %v2444
        %v2559 = vadd.f32 %v2342, %v2447
        %v2560 = vadd.f32 %v2343, %v2452
        %v2561 = vadd.f32 %v2344, %v2455
        %v2562 = vadd.f32 %v2345, %v2460
        %v2563 = vadd.f32 %v2346, %v2463
        %v2564 = vadd.f32 %v2347, %v2468
        %v2565 = vadd.f32 %v2348, %v2471
        %v2566 = vadd.f32 %v2349, %v2476
        %v2567 = vadd.f32 %v2350, %v2479
        %v2568 = vadd.f32 %v2351, %v2484
        %v2569 = vadd.f32 %v2352, %v2487
        %v2570 = vadd.f32 %v2353, %v2492
        %v2571 = vadd.f32 %v2354, %v2495
        %v2572 = vadd.f32 %v2355, %v2500
        %v2573 = vadd.f32 %v2356, %v2503
        %v2574 = vadd.f32 %v2357, %v2508
        %v2575 = vadd.f32 %v2358, %v2511
        %v2576 = vadd.f32 %v2359, %v2516
        %v2577 = vadd.f32 %v2360, %v2519
        %v2578 = vadd.f32 %v2361, %v2524
        %v2579 = vadd.f32 %v2362, %v2527
        %v2580 = vadd.f32 %v2363, %v2532
        %v2581 = vadd.f32 %v2364, %v2535
        %v2582 = vadd.f32 %v2365, %v2540
        %v2583 = vadd.f32 %v2366, %v2543
        %v2584 = vadd.f32 %v2367, %v2548
        %v2585 = vadd.f32 %v2368, %v2551
        %v2587 = vshrl.u32 %v285, 16
        %v2589 = vrot.slane %v2587, 4
        %v2590 = vshll.u32 %v285, 16
        %v2592 = vrot.slane %v2590, 5
        %v2593 = vor.u32 %v2589, %v2592
        %v2594 = vrot.slane %v2593, 4
        %v2596 = vshll.u32 %v286, 16
        %v2598 = vrot.slane %v2596, 5
        %v2599 = vsel %vm294, %v2594, %v2598
        %v2600 = vshrl.u32 %v286, 16
        %v2602 = vrot.slane %v2600, 4
        %v2603 = vor.u32 %v2602, %v2598
        %v2604 = vrot.slane %v2603, 4
        %v2606 = vshll.u32 %v287, 16
        %v2608 = vrot.slane %v2606, 5
        %v2609 = vsel %vm294, %v2604, %v2608
        %v2610 = vld [vmem:[#allocation2 + $0x70] sm:$0xf]
        %v2611 = vld [vmem:[#allocation2 + $0x74] sm:$0xf]
        %v2612 = vld [vmem:[#allocation2 + $0x78] sm:$0xf]
        %v2613 = vld [vmem:[#allocation2 + $0x7c] sm:$0xf]
        %v2614 = vunpack.c.l.b16 %v2599
        %v2615 = vunpack.c.l.b16 %v2609
        %v2616 = vpack.c.b16 %v2615, %v2614
        %v2621 = vunpack.c.l.b16 %v2610
        %v2622 = vunpack.c.l.b16 %v2611
        %v2623 = vunpack.c.l.b16 %v2612
        %v2624 = vunpack.c.l.b16 %v2613
        %v2625 = vpack.c.b16 %v2622, %v2621
        %v2626 = vpack.c.b16 %v2624, %v2623
        %v2630 = vsel %vm743, %v2616, 0
        %2632 = vmatprep.subr.bf16.mxu0 0
        %2633 = vmatpush1.bf16.msra.mxu0 %v2625
        %2634 = vmatprep.subr.bf16.mxu0 0
        %2635 = vmatpush1.bf16.msra.mxu0 %v2626
        %2636 = vmatprep.subr.bf16.mxu0 0
        %2637 = vmatpush1.bf16.msra.mxu0 0
        %2638 = vmatprep.subr.bf16.mxu0 0
        %2639 = vmatpush1.bf16.msra.mxu0 0
        %2640 = vmatprep.subr.bf16.mxu0 0
        %2641 = vmatpush1.bf16.msra.mxu0 0
        %2642 = vmatprep.subr.bf16.mxu0 0
        %2643 = vmatpush1.bf16.msra.mxu0 0
        %2644 = vmatprep.subr.bf16.mxu0 0
        %2645 = vmatpush1.bf16.msra.mxu0 0
        %2646 = vmatprep.subr.bf16.mxu0 0
        %2647 = vmatpush1.bf16.msra.mxu0 0
        %2648 = vmatprep.subr.bf16.mxu0 0
        %2649 = vmatpush1.bf16.msra.mxu0 0
        %2650 = vmatprep.subr.bf16.mxu0 0
        %2651 = vmatpush1.bf16.msra.mxu0 0
        %2652 = vmatprep.subr.bf16.mxu0 0
        %2653 = vmatpush1.bf16.msra.mxu0 0
        %2654 = vmatprep.subr.bf16.mxu0 0
        %2655 = vmatpush1.bf16.msra.mxu0 0
        %2656 = vmatprep.subr.bf16.mxu0 0
        %2657 = vmatpush1.bf16.msra.mxu0 0
        %2658 = vmatprep.subr.bf16.mxu0 0
        %2659 = vmatpush1.bf16.msra.mxu0 0
        %2660 = vmatprep.subr.bf16.mxu0 0
        %2661 = vmatpush1.bf16.msra.mxu0 0
        %2662 = vmatprep.subr.bf16.mxu0 0
        %2663 = vmatpush1.bf16.msra.mxu0 0
        %2664 = vmatprep.mubr.bf16.mxu0 0
        %2665 = vmatmul.mubr.bf16.gmra.mrb[0].mxu0 %v751
        %v2666 = vpop.f32.mrb[0].mxu0
        %v2667 = vadd.f32 0.0, %v2666
        %v2668 = vpop.f32.mrb[0].mxu0
        %v2669 = vpop.f32.mrb[0].mxu0
        %v2670 = vadd.f32 0.0, %v2669
        %v2671 = vpop.f32.mrb[0].mxu0
        %2672 = vmatprep.mubr.bf16.mxu0 0
        %2673 = vmatmul.mubr.bf16.gmra.mrb[0].mxu0 %v754
        %v2674 = vpop.f32.mrb[0].mxu0
        %v2675 = vadd.f32 0.0, %v2674
        %v2676 = vpop.f32.mrb[0].mxu0
        %v2677 = vpop.f32.mrb[0].mxu0
        %v2678 = vadd.f32 0.0, %v2677
        %v2679 = vpop.f32.mrb[0].mxu0
        %2680 = vmatprep.mubr.bf16.mxu0 0
        %2681 = vmatmul.mubr.bf16.gmra.mrb[0].mxu0 %v757
        %v2682 = vpop.f32.mrb[0].mxu0
        %v2683 = vadd.f32 0.0, %v2682
        %v2684 = vpop.f32.mrb[0].mxu0
        %v2685 = vpop.f32.mrb[0].mxu0
        %v2686 = vadd.f32 0.0, %v2685
        %v2687 = vpop.f32.mrb[0].mxu0
        %2688 = vmatprep.mubr.bf16.mxu0 0
        %2689 = vmatmul.mubr.bf16.gmra.mrb[0].mxu0 %v760
        %v2690 = vpop.f32.mrb[0].mxu0
        %v2691 = vadd.f32 0.0, %v2690
        %v2692 = vpop.f32.mrb[0].mxu0
        %v2693 = vpop.f32.mrb[0].mxu0
        %v2694 = vadd.f32 0.0, %v2693
        %v2695 = vpop.f32.mrb[0].mxu0
        %2696 = vmatprep.mubr.bf16.mxu0 0
        %2697 = vmatmul.mubr.bf16.gmra.mrb[0].mxu0 %v763
        %v2698 = vpop.f32.mrb[0].mxu0
        %v2699 = vadd.f32 0.0, %v2698
        %v2700 = vpop.f32.mrb[0].mxu0
        %v2701 = vpop.f32.mrb[0].mxu0
        %v2702 = vadd.f32 0.0, %v2701
        %v2703 = vpop.f32.mrb[0].mxu0
        %2704 = vmatprep.mubr.bf16.mxu0 0
        %2705 = vmatmul.mubr.bf16.gmra.mrb[0].mxu0 %v766
        %v2706 = vpop.f32.mrb[0].mxu0
        %v2707 = vadd.f32 0.0, %v2706
        %v2708 = vpop.f32.mrb[0].mxu0
        %v2709 = vpop.f32.mrb[0].mxu0
        %v2710 = vadd.f32 0.0, %v2709
        %v2711 = vpop.f32.mrb[0].mxu0
        %2712 = vmatprep.mubr.bf16.mxu0 0
        %2713 = vmatmul.mubr.bf16.gmra.mrb[0].mxu0 %v769
        %v2714 = vpop.f32.mrb[0].mxu0
        %v2715 = vadd.f32 0.0, %v2714
        %v2716 = vpop.f32.mrb[0].mxu0
        %v2717 = vpop.f32.mrb[0].mxu0
        %v2718 = vadd.f32 0.0, %v2717
        %v2719 = vpop.f32.mrb[0].mxu0
        %2720 = vmatprep.mubr.bf16.mxu0 0
        %2721 = vmatmul.mubr.bf16.gmra.mrb[0].mxu0 %v772
        %v2722 = vpop.f32.mrb[0].mxu0
        %v2723 = vadd.f32 0.0, %v2722
        %v2724 = vpop.f32.mrb[0].mxu0
        %v2725 = vpop.f32.mrb[0].mxu0
        %v2726 = vadd.f32 0.0, %v2725
        %v2727 = vpop.f32.mrb[0].mxu0
        %2728 = vmatprep.mubr.bf16.mxu0 0
        %2729 = vmatmul.mubr.bf16.gmra.mrb[0].mxu0 %v775
        %v2730 = vpop.f32.mrb[0].mxu0
        %v2731 = vadd.f32 0.0, %v2730
        %v2732 = vpop.f32.mrb[0].mxu0
        %v2733 = vpop.f32.mrb[0].mxu0
        %v2734 = vadd.f32 0.0, %v2733
        %v2735 = vpop.f32.mrb[0].mxu0
        %2736 = vmatprep.mubr.bf16.mxu0 0
        %2737 = vmatmul.mubr.bf16.gmra.mrb[0].mxu0 %v778
        %v2738 = vpop.f32.mrb[0].mxu0
        %v2739 = vadd.f32 0.0, %v2738
        %v2740 = vpop.f32.mrb[0].mxu0
        %v2741 = vpop.f32.mrb[0].mxu0
        %v2742 = vadd.f32 0.0, %v2741
        %v2743 = vpop.f32.mrb[0].mxu0
        %2744 = vmatprep.mubr.bf16.mxu0 0
        %2745 = vmatmul.mubr.bf16.gmra.mrb[0].mxu0 %v781
        %v2746 = vpop.f32.mrb[0].mxu0
        %v2747 = vadd.f32 0.0, %v2746
        %v2748 = vpop.f32.mrb[0].mxu0
        %v2749 = vpop.f32.mrb[0].mxu0
        %v2750 = vadd.f32 0.0, %v2749
        %v2751 = vpop.f32.mrb[0].mxu0
        %2752 = vmatprep.mubr.bf16.mxu0 0
        %2753 = vmatmul.mubr.bf16.gmra.mrb[0].mxu0 %v784
        %v2754 = vpop.f32.mrb[0].mxu0
        %v2755 = vadd.f32 0.0, %v2754
        %v2756 = vpop.f32.mrb[0].mxu0
        %v2757 = vpop.f32.mrb[0].mxu0
        %v2758 = vadd.f32 0.0, %v2757
        %v2759 = vpop.f32.mrb[0].mxu0
        %2760 = vmatprep.mubr.bf16.mxu0 0
        %2761 = vmatmul.mubr.bf16.gmra.mrb[0].mxu0 %v787
        %v2762 = vpop.f32.mrb[0].mxu0
        %v2763 = vadd.f32 0.0, %v2762
        %v2764 = vpop.f32.mrb[0].mxu0
        %v2765 = vpop.f32.mrb[0].mxu0
        %v2766 = vadd.f32 0.0, %v2765
        %v2767 = vpop.f32.mrb[0].mxu0
        %2768 = vmatprep.mubr.bf16.mxu0 0
        %2769 = vmatmul.mubr.bf16.gmra.mrb[0].mxu0 %v790
        %v2770 = vpop.f32.mrb[0].mxu0
        %v2771 = vadd.f32 0.0, %v2770
        %v2772 = vpop.f32.mrb[0].mxu0
        %v2773 = vpop.f32.mrb[0].mxu0
        %v2774 = vadd.f32 0.0, %v2773
        %v2775 = vpop.f32.mrb[0].mxu0
        %2776 = vmatprep.mubr.bf16.mxu0 0
        %2777 = vmatmul.mubr.bf16.gmra.mrb[0].mxu0 %v1951
        %v2778 = vpop.f32.mrb[0].mxu0
        %v2779 = vadd.f32 0.0, %v2778
        %v2780 = vpop.f32.mrb[0].mxu0
        %v2781 = vpop.f32.mrb[0].mxu0
        %v2782 = vadd.f32 0.0, %v2781
        %v2783 = vpop.f32.mrb[0].mxu0
        %2784 = vmatprep.mubr.bf16.mxu0 0
        %2785 = vmatmul.mubr.bf16.gmra.mrb[0].mxu0 %v2630
        %v2786 = vpop.f32.mrb[0].mxu0
        %v2787 = vadd.f32 0.0, %v2786
        %v2788 = vpop.f32.mrb[0].mxu0
        %v2789 = vpop.f32.mrb[0].mxu0
        %v2790 = vadd.f32 0.0, %v2789
        %v2791 = vpop.f32.mrb[0].mxu0
        %2792 = vdwg.mxu0
        %v2793 = vadd.f32 %v2554, %v2667
        %v2794 = vadd.f32 %v2555, %v2670
        %v2795 = vadd.f32 %v2556, %v2675
        %v2796 = vadd.f32 %v2557, %v2678
        %v2797 = vadd.f32 %v2558, %v2683
        %v2798 = vadd.f32 %v2559, %v2686
        %v2799 = vadd.f32 %v2560, %v2691
        %v2800 = vadd.f32 %v2561, %v2694
        %v2801 = vadd.f32 %v2562, %v2699
        %v2802 = vadd.f32 %v2563, %v2702
        %v2803 = vadd.f32 %v2564, %v2707
        %v2804 = vadd.f32 %v2565, %v2710
        %v2805 = vadd.f32 %v2566, %v2715
        %v2806 = vadd.f32 %v2567, %v2718
        %v2807 = vadd.f32 %v2568, %v2723
        %v2808 = vadd.f32 %v2569, %v2726
        %v2809 = vadd.f32 %v2570, %v2731
        %v2810 = vadd.f32 %v2571, %v2734
        %v2811 = vadd.f32 %v2572, %v2739
        %v2812 = vadd.f32 %v2573, %v2742
        %v2813 = vadd.f32 %v2574, %v2747
        %v2814 = vadd.f32 %v2575, %v2750
        %v2815 = vadd.f32 %v2576, %v2755
        %v2816 = vadd.f32 %v2577, %v2758
        %v2817 = vadd.f32 %v2578, %v2763
        %v2818 = vadd.f32 %v2579, %v2766
        %v2819 = vadd.f32 %v2580, %v2771
        %v2820 = vadd.f32 %v2581, %v2774
        %v2821 = vadd.f32 %v2582, %v2779
        %v2822 = vadd.f32 %v2583, %v2782
        %v2823 = vadd.f32 %v2584, %v2787
        %v2824 = vadd.f32 %v2585, %v2790
        %v2826 = vrot.slane %v285, 5
        %v2827 = vrot.slane %v2826, 4
        %v2828 = vrot.slane %v286, 5
        %v2829 = vsel %vm1272, %v2827, %v2828
        %v2830 = vrot.slane %v2828, 4
        %v2831 = vrot.slane %v287, 5
        %v2832 = vsel %vm1272, %v2830, %v2831
        %v2833 = vld [vmem:[#allocation2 + $0x80] sm:$0xf]
        %v2834 = vld [vmem:[#allocation2 + $0x84] sm:$0xf]
        %v2835 = vld [vmem:[#allocation2 + $0x88] sm:$0xf]
        %v2836 = vld [vmem:[#allocation2 + $0x8c] sm:$0xf]
        %v2837 = vunpack.c.l.b16 %v2829
        %v2838 = vunpack.c.l.b16 %v2832
        %v2839 = vpack.c.b16 %v2838, %v2837
        %v2844 = vunpack.c.l.b16 %v2833
        %v2845 = vunpack.c.l.b16 %v2834
        %v2846 = vunpack.c.l.b16 %v2835
        %v2847 = vunpack.c.l.b16 %v2836
        %v2848 = vpack.c.b16 %v2845, %v2844
        %v2849 = vpack.c.b16 %v2847, %v2846
        %v2853 = vsel %vm743, %v2839, 0
        %2855 = vmatprep.subr.bf16.mxu0 0
        %2856 = vmatpush1.bf16.msra.mxu0 %v2848
        %2857 = vmatprep.subr.bf16.mxu0 0
        %2858 = vmatpush1.bf16.msra.mxu0 %v2849
        %2859 = vmatprep.subr.bf16.mxu0 0
        %2860 = vmatpush1.bf16.msra.mxu0 0
        %2861 = vmatprep.subr.bf16.mxu0 0
        %2862 = vmatpush1.bf16.msra.mxu0 0
        %2863 = vmatprep.subr.bf16.mxu0 0
        %2864 = vmatpush1.bf16.msra.mxu0 0
        %2865 = vmatprep.subr.bf16.mxu0 0
        %2866 = vmatpush1.bf16.msra.mxu0 0
        %2867 = vmatprep.subr.bf16.mxu0 0
        %2868 = vmatpush1.bf16.msra.mxu0 0
        %2869 = vmatprep.subr.bf16.mxu0 0
        %2870 = vmatpush1.bf16.msra.mxu0 0
        %2871 = vmatprep.subr.bf16.mxu0 0
        %2872 = vmatpush1.bf16.msra.mxu0 0
        %2873 = vmatprep.subr.bf16.mxu0 0
        %2874 = vmatpush1.bf16.msra.mxu0 0
        %2875 = vmatprep.subr.bf16.mxu0 0
        %2876 = vmatpush1.bf16.msra.mxu0 0
        %2877 = vmatprep.subr.bf16.mxu0 0
        %2878 = vmatpush1.bf16.msra.mxu0 0
        %2879 = vmatprep.subr.bf16.mxu0 0
        %2880 = vmatpush1.bf16.msra.mxu0 0
        %2881 = vmatprep.subr.bf16.mxu0 0
        %2882 = vmatpush1.bf16.msra.mxu0 0
        %2883 = vmatprep.subr.bf16.mxu0 0
        %2884 = vmatpush1.bf16.msra.mxu0 0
        %2885 = vmatprep.subr.bf16.mxu0 0
        %2886 = vmatpush1.bf16.msra.mxu0 0
        %2887 = vmatprep.mubr.bf16.mxu0 0
        %2888 = vmatmul.mubr.bf16.gmra.mrb[0].mxu0 %v1456
        %v2889 = vpop.f32.mrb[0].mxu0
        %v2890 = vadd.f32 0.0, %v2889
        %v2891 = vpop.f32.mrb[0].mxu0
        %v2892 = vpop.f32.mrb[0].mxu0
        %v2893 = vadd.f32 0.0, %v2892
        %v2894 = vpop.f32.mrb[0].mxu0
        %2895 = vmatprep.mubr.bf16.mxu0 0
        %2896 = vmatmul.mubr.bf16.gmra.mrb[0].mxu0 %v1459
        %v2897 = vpop.f32.mrb[0].mxu0
        %v2898 = vadd.f32 0.0, %v2897
        %v2899 = vpop.f32.mrb[0].mxu0
        %v2900 = vpop.f32.mrb[0].mxu0
        %v2901 = vadd.f32 0.0, %v2900
        %v2902 = vpop.f32.mrb[0].mxu0
        %2903 = vmatprep.mubr.bf16.mxu0 0
        %2904 = vmatmul.mubr.bf16.gmra.mrb[0].mxu0 %v1462
        %v2905 = vpop.f32.mrb[0].mxu0
        %v2906 = vadd.f32 0.0, %v2905
        %v2907 = vpop.f32.mrb[0].mxu0
        %v2908 = vpop.f32.mrb[0].mxu0
        %v2909 = vadd.f32 0.0, %v2908
        %v2910 = vpop.f32.mrb[0].mxu0
        %2911 = vmatprep.mubr.bf16.mxu0 0
        %2912 = vmatmul.mubr.bf16.gmra.mrb[0].mxu0 %v1465
        %v2913 = vpop.f32.mrb[0].mxu0
        %v2914 = vadd.f32 0.0, %v2913
        %v2915 = vpop.f32.mrb[0].mxu0
        %v2916 = vpop.f32.mrb[0].mxu0
        %v2917 = vadd.f32 0.0, %v2916
        %v2918 = vpop.f32.mrb[0].mxu0
        %2919 = vmatprep.mubr.bf16.mxu0 0
        %2920 = vmatmul.mubr.bf16.gmra.mrb[0].mxu0 %v1468
        %v2921 = vpop.f32.mrb[0].mxu0
        %v2922 = vadd.f32 0.0, %v2921
        %v2923 = vpop.f32.mrb[0].mxu0
        %v2924 = vpop.f32.mrb[0].mxu0
        %v2925 = vadd.f32 0.0, %v2924
        %v2926 = vpop.f32.mrb[0].mxu0
        %2927 = vmatprep.mubr.bf16.mxu0 0
        %2928 = vmatmul.mubr.bf16.gmra.mrb[0].mxu0 %v1471
        %v2929 = vpop.f32.mrb[0].mxu0
        %v2930 = vadd.f32 0.0, %v2929
        %v2931 = vpop.f32.mrb[0].mxu0
        %v2932 = vpop.f32.mrb[0].mxu0
        %v2933 = vadd.f32 0.0, %v2932
        %v2934 = vpop.f32.mrb[0].mxu0
        %2935 = vmatprep.mubr.bf16.mxu0 0
        %2936 = vmatmul.mubr.bf16.gmra.mrb[0].mxu0 %v1474
        %v2937 = vpop.f32.mrb[0].mxu0
        %v2938 = vadd.f32 0.0, %v2937
        %v2939 = vpop.f32.mrb[0].mxu0
        %v2940 = vpop.f32.mrb[0].mxu0
        %v2941 = vadd.f32 0.0, %v2940
        %v2942 = vpop.f32.mrb[0].mxu0
        %2943 = vmatprep.mubr.bf16.mxu0 0
        %2944 = vmatmul.mubr.bf16.gmra.mrb[0].mxu0 %v1477
        %v2945 = vpop.f32.mrb[0].mxu0
        %v2946 = vadd.f32 0.0, %v2945
        %v2947 = vpop.f32.mrb[0].mxu0
        %v2948 = vpop.f32.mrb[0].mxu0
        %v2949 = vadd.f32 0.0, %v2948
        %v2950 = vpop.f32.mrb[0].mxu0
        %2951 = vmatprep.mubr.bf16.mxu0 0
        %2952 = vmatmul.mubr.bf16.gmra.mrb[0].mxu0 %v1480
        %v2953 = vpop.f32.mrb[0].mxu0
        %v2954 = vadd.f32 0.0, %v2953
        %v2955 = vpop.f32.mrb[0].mxu0
        %v2956 = vpop.f32.mrb[0].mxu0
        %v2957 = vadd.f32 0.0, %v2956
        %v2958 = vpop.f32.mrb[0].mxu0
        %2959 = vmatprep.mubr.bf16.mxu0 0
        %2960 = vmatmul.mubr.bf16.gmra.mrb[0].mxu0 %v1483
        %v2961 = vpop.f32.mrb[0].mxu0
        %v2962 = vadd.f32 0.0, %v2961
        %v2963 = vpop.f32.mrb[0].mxu0
        %v2964 = vpop.f32.mrb[0].mxu0
        %v2965 = vadd.f32 0.0, %v2964
        %v2966 = vpop.f32.mrb[0].mxu0
        %2967 = vmatprep.mubr.bf16.mxu0 0
        %2968 = vmatmul.mubr.bf16.gmra.mrb[0].mxu0 %v1486
        %v2969 = vpop.f32.mrb[0].mxu0
        %v2970 = vadd.f32 0.0, %v2969
        %v2971 = vpop.f32.mrb[0].mxu0
        %v2972 = vpop.f32.mrb[0].mxu0
        %v2973 = vadd.f32 0.0, %v2972
        %v2974 = vpop.f32.mrb[0].mxu0
        %2975 = vmatprep.mubr.bf16.mxu0 0
        %2976 = vmatmul.mubr.bf16.gmra.mrb[0].mxu0 %v1489
        %v2977 = vpop.f32.mrb[0].mxu0
        %v2978 = vadd.f32 0.0, %v2977
        %v2979 = vpop.f32.mrb[0].mxu0
        %v2980 = vpop.f32.mrb[0].mxu0
        %v2981 = vadd.f32 0.0, %v2980
        %v2982 = vpop.f32.mrb[0].mxu0
        %2983 = vmatprep.mubr.bf16.mxu0 0
        %2984 = vmatmul.mubr.bf16.gmra.mrb[0].mxu0 %v1492
        %v2985 = vpop.f32.mrb[0].mxu0
        %v2986 = vadd.f32 0.0, %v2985
        %v2987 = vpop.f32.mrb[0].mxu0
        %v2988 = vpop.f32.mrb[0].mxu0
        %v2989 = vadd.f32 0.0, %v2988
        %v2990 = vpop.f32.mrb[0].mxu0
        %2991 = vmatprep.mubr.bf16.mxu0 0
        %2992 = vmatmul.mubr.bf16.gmra.mrb[0].mxu0 %v1495
        %v2993 = vpop.f32.mrb[0].mxu0
        %v2994 = vadd.f32 0.0, %v2993
        %v2995 = vpop.f32.mrb[0].mxu0
        %v2996 = vpop.f32.mrb[0].mxu0
        %v2997 = vadd.f32 0.0, %v2996
        %v2998 = vpop.f32.mrb[0].mxu0
        %2999 = vmatprep.mubr.bf16.mxu0 0
        %3000 = vmatmul.mubr.bf16.gmra.mrb[0].mxu0 %v2174
        %v3001 = vpop.f32.mrb[0].mxu0
        %v3002 = vadd.f32 0.0, %v3001
        %v3003 = vpop.f32.mrb[0].mxu0
        %v3004 = vpop.f32.mrb[0].mxu0
        %v3005 = vadd.f32 0.0, %v3004
        %v3006 = vpop.f32.mrb[0].mxu0
        %3007 = vmatprep.mubr.bf16.mxu0 0
        %3008 = vmatmul.mubr.bf16.gmra.mrb[0].mxu0 %v2853
        %v3009 = vpop.f32.mrb[0].mxu0
        %v3010 = vadd.f32 0.0, %v3009
        %v3011 = vpop.f32.mrb[0].mxu0
        %v3012 = vpop.f32.mrb[0].mxu0
        %v3013 = vadd.f32 0.0, %v3012
        %v3014 = vpop.f32.mrb[0].mxu0
        %3015 = vdwg.mxu0
        %v3016 = vadd.f32 %v2793, %v2890
        %v3017 = vadd.f32 %v2794, %v2893
        %v3018 = vadd.f32 %v2795, %v2898
        %v3019 = vadd.f32 %v2796, %v2901
        %v3020 = vadd.f32 %v2797, %v2906
        %v3021 = vadd.f32 %v2798, %v2909
        %v3022 = vadd.f32 %v2799, %v2914
        %v3023 = vadd.f32 %v2800, %v2917
        %v3024 = vadd.f32 %v2801, %v2922
        %v3025 = vadd.f32 %v2802, %v2925
        %v3026 = vadd.f32 %v2803, %v2930
        %v3027 = vadd.f32 %v2804, %v2933
        %v3028 = vadd.f32 %v2805, %v2938
        %v3029 = vadd.f32 %v2806, %v2941
        %v3030 = vadd.f32 %v2807, %v2946
        %v3031 = vadd.f32 %v2808, %v2949
        %v3032 = vadd.f32 %v2809, %v2954
        %v3033 = vadd.f32 %v2810, %v2957
        %v3034 = vadd.f32 %v2811, %v2962
        %v3035 = vadd.f32 %v2812, %v2965
        %v3036 = vadd.f32 %v2813, %v2970
        %v3037 = vadd.f32 %v2814, %v2973
        %v3038 = vadd.f32 %v2815, %v2978
        %v3039 = vadd.f32 %v2816, %v2981
        %v3040 = vadd.f32 %v2817, %v2986
        %v3041 = vadd.f32 %v2818, %v2989
        %v3042 = vadd.f32 %v2819, %v2994
        %v3043 = vadd.f32 %v2820, %v2997
        %v3044 = vadd.f32 %v2821, %v3002
        %v3045 = vadd.f32 %v2822, %v3005
        %v3046 = vadd.f32 %v2823, %v3010
        %v3047 = vadd.f32 %v2824, %v3013
        %v3048 = vld [vmem:[#allocation4] sm:$0x1]
        %v3050 = vlaneseq
        %v3051 = vshrl.u32 %v3050, 7
        %v3052 = vsub.s32 0, %v3051
        %v3053 = vrot.slane %v3048, %v3052
        %v3055 = vadd.f32 %v3016, %v3053
        %v3056 = vadd.f32 %v3017, %v3053
        %v3057 = vadd.f32 %v3018, %v3053
        %v3058 = vadd.f32 %v3019, %v3053
        %v3059 = vadd.f32 %v3020, %v3053
        %v3060 = vadd.f32 %v3021, %v3053
        %v3061 = vadd.f32 %v3022, %v3053
        %v3062 = vadd.f32 %v3023, %v3053
        %v3063 = vadd.f32 %v3024, %v3053
        %v3064 = vadd.f32 %v3025, %v3053
        %v3065 = vadd.f32 %v3026, %v3053
        %v3066 = vadd.f32 %v3027, %v3053
        %v3067 = vadd.f32 %v3028, %v3053
        %v3068 = vadd.f32 %v3029, %v3053
        %v3069 = vadd.f32 %v3030, %v3053
        %v3070 = vadd.f32 %v3031, %v3053
        %v3071 = vadd.f32 %v3032, %v3053
        %v3072 = vadd.f32 %v3033, %v3053
        %v3073 = vadd.f32 %v3034, %v3053
        %v3074 = vadd.f32 %v3035, %v3053
        %v3075 = vadd.f32 %v3036, %v3053
        %v3076 = vadd.f32 %v3037, %v3053
        %v3077 = vadd.f32 %v3038, %v3053
        %v3078 = vadd.f32 %v3039, %v3053
        %v3079 = vadd.f32 %v3040, %v3053
        %v3080 = vadd.f32 %v3041, %v3053
        %v3081 = vadd.f32 %v3042, %v3053
        %v3082 = vadd.f32 %v3043, %v3053
        %v3083 = vadd.f32 %v3044, %v3053
        %v3084 = vadd.f32 %v3045, %v3053
        %v3085 = vadd.f32 %v3046, %v3053
        %v3086 = vadd.f32 %v3047, %v3053
        %vm3087 = vcmp.ge.f32.partialorder %v3055, 0.0
        %vm3088 = vcmp.ge.f32.partialorder %v3056, 0.0
        %vm3089 = vcmp.ge.f32.partialorder %v3057, 0.0
        %vm3090 = vcmp.ge.f32.partialorder %v3058, 0.0
        %vm3091 = vcmp.ge.f32.partialorder %v3059, 0.0
        %vm3092 = vcmp.ge.f32.partialorder %v3060, 0.0
        %vm3093 = vcmp.ge.f32.partialorder %v3061, 0.0
        %vm3094 = vcmp.ge.f32.partialorder %v3062, 0.0
        %vm3095 = vcmp.ge.f32.partialorder %v3063, 0.0
        %vm3096 = vcmp.ge.f32.partialorder %v3064, 0.0
        %vm3097 = vcmp.ge.f32.partialorder %v3065, 0.0
        %vm3098 = vcmp.ge.f32.partialorder %v3066, 0.0
        %vm3099 = vcmp.ge.f32.partialorder %v3067, 0.0
        %vm3100 = vcmp.ge.f32.partialorder %v3068, 0.0
        %vm3101 = vcmp.ge.f32.partialorder %v3069, 0.0
        %vm3102 = vcmp.ge.f32.partialorder %v3070, 0.0
        %vm3103 = vcmp.ge.f32.partialorder %v3071, 0.0
        %vm3104 = vcmp.ge.f32.partialorder %v3072, 0.0
        %vm3105 = vcmp.ge.f32.partialorder %v3073, 0.0
        %vm3106 = vcmp.ge.f32.partialorder %v3074, 0.0
        %vm3107 = vcmp.ge.f32.partialorder %v3075, 0.0
        %vm3108 = vcmp.ge.f32.partialorder %v3076, 0.0
        %vm3109 = vcmp.ge.f32.partialorder %v3077, 0.0
        %vm3110 = vcmp.ge.f32.partialorder %v3078, 0.0
        %vm3111 = vcmp.ge.f32.partialorder %v3079, 0.0
        %vm3112 = vcmp.ge.f32.partialorder %v3080, 0.0
        %vm3113 = vcmp.ge.f32.partialorder %v3081, 0.0
        %vm3114 = vcmp.ge.f32.partialorder %v3082, 0.0
        %vm3115 = vcmp.ge.f32.partialorder %v3083, 0.0
        %vm3116 = vcmp.ge.f32.partialorder %v3084, 0.0
        %vm3117 = vcmp.ge.f32.partialorder %v3085, 0.0
        %vm3118 = vcmp.ge.f32.partialorder %v3086, 0.0
        %v3119 = vmul.f32 %v3055, 0.1
        %v3120 = vmul.f32 %v3056, 0.1
        %v3121 = vmul.f32 %v3057, 0.1
        %v3122 = vmul.f32 %v3058, 0.1
        %v3123 = vmul.f32 %v3059, 0.1
        %v3124 = vmul.f32 %v3060, 0.1
        %v3125 = vmul.f32 %v3061, 0.1
        %v3126 = vmul.f32 %v3062, 0.1
        %v3127 = vmul.f32 %v3063, 0.1
        %v3128 = vmul.f32 %v3064, 0.1
        %v3129 = vmul.f32 %v3065, 0.1
        %v3130 = vmul.f32 %v3066, 0.1
        %v3131 = vmul.f32 %v3067, 0.1
        %v3132 = vmul.f32 %v3068, 0.1
        %v3133 = vmul.f32 %v3069, 0.1
        %v3134 = vmul.f32 %v3070, 0.1
        %v3135 = vmul.f32 %v3071, 0.1
        %v3136 = vmul.f32 %v3072, 0.1
        %v3137 = vmul.f32 %v3073, 0.1
        %v3138 = vmul.f32 %v3074, 0.1
        %v3139 = vmul.f32 %v3075, 0.1
        %v3140 = vmul.f32 %v3076, 0.1
        %v3141 = vmul.f32 %v3077, 0.1
        %v3142 = vmul.f32 %v3078, 0.1
        %v3143 = vmul.f32 %v3079, 0.1
        %v3144 = vmul.f32 %v3080, 0.1
        %v3145 = vmul.f32 %v3081, 0.1
        %v3146 = vmul.f32 %v3082, 0.1
        %v3147 = vmul.f32 %v3083, 0.1
        %v3148 = vmul.f32 %v3084, 0.1
        %v3149 = vmul.f32 %v3085, 0.1
        %v3150 = vmul.f32 %v3086, 0.1
        %v3151 = vsel %vm3087, %v3055, %v3119
        %v3152 = vsel %vm3088, %v3056, %v3120
        %v3153 = vsel %vm3089, %v3057, %v3121
        %v3154 = vsel %vm3090, %v3058, %v3122
        %v3155 = vsel %vm3091, %v3059, %v3123
        %v3156 = vsel %vm3092, %v3060, %v3124
        %v3157 = vsel %vm3093, %v3061, %v3125
        %v3158 = vsel %vm3094, %v3062, %v3126
        %v3159 = vsel %vm3095, %v3063, %v3127
        %v3160 = vsel %vm3096, %v3064, %v3128
        %v3161 = vsel %vm3097, %v3065, %v3129
        %v3162 = vsel %vm3098, %v3066, %v3130
        %v3163 = vsel %vm3099, %v3067, %v3131
        %v3164 = vsel %vm3100, %v3068, %v3132
        %v3165 = vsel %vm3101, %v3069, %v3133
        %v3166 = vsel %vm3102, %v3070, %v3134
        %v3167 = vsel %vm3103, %v3071, %v3135
        %v3168 = vsel %vm3104, %v3072, %v3136
        %v3169 = vsel %vm3105, %v3073, %v3137
        %v3170 = vsel %vm3106, %v3074, %v3138
        %v3171 = vsel %vm3107, %v3075, %v3139
        %v3172 = vsel %vm3108, %v3076, %v3140
        %v3173 = vsel %vm3109, %v3077, %v3141
        %v3174 = vsel %vm3110, %v3078, %v3142
        %v3175 = vsel %vm3111, %v3079, %v3143
        %v3176 = vsel %vm3112, %v3080, %v3144
        %v3177 = vsel %vm3113, %v3081, %v3145
        %v3178 = vsel %vm3114, %v3082, %v3146
        %v3179 = vsel %vm3115, %v3083, %v3147
        %v3180 = vsel %vm3116, %v3084, %v3148
        %v3181 = vsel %vm3117, %v3085, %v3149
        %v3182 = vsel %vm3118, %v3086, %v3150
        %3183 = vst [vmem:[%s232] sm:$0xff] %v3151
        %3184 = vst [vmem:[%s232 + $0x8] sm:$0xff] %v3152
        %3185 = vst [vmem:[%s232 + $0x10] sm:$0xff] %v3153
        %3186 = vst [vmem:[%s232 + $0x18] sm:$0xff] %v3154
        %3187 = vst [vmem:[%s232 + $0x20] sm:$0xff] %v3155
        %3188 = vst [vmem:[%s232 + $0x28] sm:$0xff] %v3156
        %3189 = vst [vmem:[%s232 + $0x30] sm:$0xff] %v3157
        %3190 = vst [vmem:[%s232 + $0x38] sm:$0xff] %v3158
        %3191 = vst [vmem:[%s232 + $0x40] sm:$0xff] %v3159
        %3192 = vst [vmem:[%s232 + $0x48] sm:$0xff] %v3160
        %3193 = vst [vmem:[%s232 + $0x50] sm:$0xff] %v3161
        %3194 = vst [vmem:[%s232 + $0x58] sm:$0xff] %v3162
        %3195 = vst [vmem:[%s232 + $0x60] sm:$0xff] %v3163
        %3196 = vst [vmem:[%s232 + $0x68] sm:$0xff] %v3164
        %3197 = vst [vmem:[%s232 + $0x70] sm:$0xff] %v3165
        %3198 = vst [vmem:[%s232 + $0x78] sm:$0xff] %v3166
        %3199 = vst [vmem:[%s232 + $0x80] sm:$0xff] %v3167
        %3200 = vst [vmem:[%s232 + $0x88] sm:$0xff] %v3168
        %3201 = vst [vmem:[%s232 + $0x90] sm:$0xff] %v3169
        %3202 = vst [vmem:[%s232 + $0x98] sm:$0xff] %v3170
        %3203 = vst [vmem:[%s232 + $0xa0] sm:$0xff] %v3171
        %3204 = vst [vmem:[%s232 + $0xa8] sm:$0xff] %v3172
        %3205 = vst [vmem:[%s232 + $0xb0] sm:$0xff] %v3173
        %3206 = vst [vmem:[%s232 + $0xb8] sm:$0xff] %v3174
        %3207 = vst [vmem:[%s232 + $0xc0] sm:$0xff] %v3175
        %3208 = vst [vmem:[%s232 + $0xc8] sm:$0xff] %v3176
        %3209 = vst [vmem:[%s232 + $0xd0] sm:$0xff] %v3177
        %3210 = vst [vmem:[%s232 + $0xd8] sm:$0xff] %v3178
        %3211 = vst [vmem:[%s232 + $0xe0] sm:$0xff] %v3179
        %3212 = vst [vmem:[%s232 + $0xe8] sm:$0xff] %v3180
        %3213 = vst [vmem:[%s232 + $0xf0] sm:$0xff] %v3181
        %3214 = vst [vmem:[%s232 + $0xf8] sm:$0xff] %v3182
        %p3215 = scmp.lt.s32.totalorder %s20, 1
        %s3216 = scalar_select %p3215, %s20, 1
        %p3217 = scmp.lt.s32.totalorder %s21, 0
        %s3218 = scalar_select %p3217, %s21, 0
        %s3219 = smul.addr %s3216, 32
        %s3220 = sadd.s32 %s3218, %s3219
        %s3221 = smul.addr %s3220, 8
        %s3222 = scalar_lea.vmem %s3, %s3221
        // Predicated region
        $region41: #{inter_forward.3} parent=31 // pred_check
          %p3223 = pneg %p126
        $region42: #{inter_forward.3} parent=31 // pred_check_branch
          %3225 = sbr.rel (%p3223) target = $region44
        $region43: #{inter_forward.3} parent=31 // pred_region
          _
        $region44: #{inter_forward.3} parent=31 // pred_fallthru
          _
      $region32: #{inter_forward.3} parent=5 // pred_fallthru
        _
      %p3226 = scmp.le.s32.totalorder 2, %s11
      // Predicated region
      $region45: #{inter_forward.3} parent=5 // pred_check
        %p3227 = pneg %p3226
      $region46: #{inter_forward.3} parent=5 // pred_check_branch
        %3229 = sbr.rel (%p3227) target = $region48
      $region47: #{inter_forward.3} parent=5 // pred_region
        %s3230 = ssub.s32 %s11, 2
        // Predicated region
        $region49: #{inter_forward.3} parent=47 // pred_check
          %p3231 = pneg %p132
        $region50: #{inter_forward.3} parent=47 // pred_check_branch
          %3233 = sbr.rel (%p3231) target = $region52
        $region51: #{inter_forward.3} parent=47 // pred_region
          %p3234 = scmp.lt.s32.totalorder %s22, 1
          %s3235 = scalar_select %p3234, %s22, 1
          %p3236 = scmp.lt.s32.totalorder %s23, 0
          %s3237 = scalar_select %p3236, %s23, 0
          %s3238 = smul.addr %s3235, 32
          %s3239 = sadd.s32 %s3237, %s3238
          %s3240 = smul.addr %s3239, 8
          %s3241 = scalar_lea.vmem %s3, %s3240
        $region52: #{inter_forward.3} parent=47 // pred_fallthru
          _
      $region48: #{inter_forward.3} parent=5 // pred_fallthru
        _
    $region6: #{inter_forward.3} parent=1 // loop_footer
      %s15 = sadd.s32 1, %s11
    $region7: #{inter_forward.3} parent=1 // loop_footer_branch
      %10 = sbr.rel target = $region3
    $region8: #{inter_forward.3} parent=1 // loop_exit
      _
    %3242 = vsyncpa [#allocation3], 1
    %s3243 = scalar_lea.sflag [#allocation3], 1
    %3244 = vsyncpa %s3243, 1
    %3245 = vsyncpa [#allocation5], 1

</llo_original>
